<compile_context>
chip_gen: v7x
topology: tpu7x:2x2x1
jax: 0.10.0
libtpu: 0.0.40
codegen_flags: <defaults>
</compile_context>

<pallas_src>
import functools

import jax
import jax.numpy as jnp
from jax.experimental import pallas as pl
from jax.experimental.pallas import tpu as pltpu


def _round_up(x, m):
    return (x + m - 1) // m * m


# ------------------------------- fused kernel ------------------------------- #

def _down_kernel(x_ref, w0_ref, b0_ref, w1_ref, b1_ref, w2_ref, b2_ref,
                 o_ref, ypad, hpad, *, Wp, Wo, L, Lp, A, Cout):
    """Fused ConvNormAct(k=2,p=2,ReLU) + DoubleConv(3x3 ReLU, 3x3, +residual, ReLU)
    for one batch element.

    Activations live as (C, flat padded spatial) with row stride Wp; the lane axis is
    128-multiple (Lp) and each conv is K*K per-tap MXU dots accumulated in f32.
    """
    D = A - (Wp + 1)  # fold the aligned-interior shift into the tap read offsets

    def conv_taps(read_tap, w_ref, b_ref, K):
        acc = None
        for kh in range(K):
            for kw in range(K):
                t = kh * K + kw
                d = jnp.dot(w_ref[t], read_tap(kh * Wp + kw),
                            preferred_element_type=jnp.float32)
                acc = d if acc is None else acc + d
        return acc + b_ref[...]

    # ---- per-step border zeroing only: interiors [A, A+Lp) are fully overwritten below.
    for buf in (ypad, hpad):
        tail = buf.shape[1] - (A + Lp)
        buf[:, 0:A] = jnp.zeros((Cout, A), jnp.bfloat16)
        buf[:, A + Lp:A + Lp + tail] = jnp.zeros((Cout, tail), jnp.bfloat16)

    # keep-mask of valid (non wrap-around) flat columns, generated in-kernel.
    lane = jax.lax.broadcasted_iota(jnp.int32, (1, Lp), 1)
    keep = (lane % Wp < Wo) & (lane < L)

    # ---- stage 0: ConvNormAct k=2, p=2 (+ReLU); input arrives pre-padded, flat, bf16.
    y = jnp.maximum(
        conv_taps(lambda o: x_ref[0, :, o:o + Lp], w0_ref, b0_ref, 2), 0.0)

    # ---- stage 1: 3x3 conv p=1 (+ReLU); y stays in VMEM (bf16 for MXU + footprint).
    ypad[:, A:A + Lp] = jnp.where(keep, y, 0.0).astype(jnp.bfloat16)
    h1 = jnp.maximum(
        conv_taps(lambda o: ypad[:, D + o:D + o + Lp], w1_ref, b1_ref, 3), 0.0)

    # ---- stage 2: 3x3 conv p=1 (no act) + residual with y, then ReLU.
    hpad[:, A:A + Lp] = jnp.where(keep, h1, 0.0).astype(jnp.bfloat16)
    out = conv_taps(lambda o: hpad[:, D + o:D + o + Lp], w2_ref, b2_ref, 3)
    o_ref[0] = jnp.maximum(out + y, 0.0).astype(o_ref.dtype)


# -------------------------------- JAX wrapper -------------------------------- #

def down_forward(x_nchw, params):
    """Pallas forward of Down. Input/Output in PyTorch NCHW convention."""
    N, Cin, H, W = x_nchw.shape
    Cout = params["w0"].shape[-1]

    Ho, Wo = H + 3, W + 3                 # ConvNormAct k=2, p=2, stride=1
    Wp = Wo + 2                           # shared flat row stride
    L = Ho * Wp                           # flat conv-output length (valid + wrap junk cols)
    Lp = _round_up(L, 128)                # lane-aligned flat length
    A = _round_up(Wp + 1, 128)            # 128-aligned interior offset inside ypad/hpad
    TAIL = _round_up(Wp + 1, 128)         # slack so tap slices stay in-bounds
    LPT = A + Lp + TAIL                   # total flat length of the padded intermediates
    LX = _round_up(Lp + Wp + 1, 128)      # flat length of the p=2-padded input

    # --- wrapper-side p=2 padding of the input, flattened with row stride Wp, bf16.
    xp = jnp.pad(x_nchw, ((0, 0), (0, 0), (2, 2), (2, Wp - W - 2)))   # (N, Cin, Ho+1, Wp)
    xflat = xp.reshape(N, Cin, (H + 4) * Wp)
    xflat = jnp.pad(xflat, ((0, 0), (0, 0), (0, LX - (H + 4) * Wp))).astype(jnp.bfloat16)

    def tap_major(w):                      # (K,K,Cin,Cout) HWIO -> (K*K, Cout, Cin), bf16
        K, _, ci, co = w.shape
        return jnp.transpose(w, (0, 1, 3, 2)).reshape(K * K, co, ci).astype(jnp.bfloat16)

    w0 = tap_major(params["w0"]); b0 = params["b0"].reshape(Cout, 1).astype(jnp.float32)
    w1 = tap_major(params["w1"]); b1 = params["b1"].reshape(Cout, 1).astype(jnp.float32)
    w2 = tap_major(params["w2"]); b2 = params["b2"].reshape(Cout, 1).astype(jnp.float32)

    kernel = functools.partial(_down_kernel, Wp=Wp, Wo=Wo, L=L, Lp=Lp, A=A, Cout=Cout)
    c3 = lambda n: (0, 0, 0)              # grid-invariant 3-D operands (weights)
    c2 = lambda n: (0, 0)                 # grid-invariant 2-D operands (biases)

    out_flat = pl.pallas_call(
        kernel,
        out_shape=jax.ShapeDtypeStruct((N, Cout, Lp), x_nchw.dtype),
        grid=(N,),
        in_specs=[
            pl.BlockSpec((1, Cin, LX), lambda n: (n, 0, 0)),
            pl.BlockSpec(w0.shape, c3), pl.BlockSpec(b0.shape, c2),
            pl.BlockSpec(w1.shape, c3), pl.BlockSpec(b1.shape, c2),
            pl.BlockSpec(w2.shape, c3), pl.BlockSpec(b2.shape, c2),
        ],
        out_specs=pl.BlockSpec((1, Cout, Lp), lambda n: (n, 0, 0)),
        scratch_shapes=[
            pltpu.VMEM((Cout, LPT), jnp.bfloat16),   # padded y, flat
            pltpu.VMEM((Cout, LPT), jnp.bfloat16),   # padded h1, flat
        ],
        compiler_params=pltpu.CompilerParams(
            dimension_semantics=("parallel",),
            vmem_limit_bytes=48 * 1024 * 1024,       # explicit; safe on v5e/v6e/v7x
        ),
    )(xflat, w0, b0, w1, b1, w2, b2)

    # Strip junk columns. TODO(synk): downstream consumers that can read the
    # (Ho, Wp)-strided layout may skip this final slice (one extra HBM pass).
    return out_flat[:, :, :L].reshape(N, Cout, Ho, Wp)[:, :, :, :Wo]


# -------------------- deterministic parameter construction ------------------- #

def make_folded_conv_params(key, K, Cin, Cout):
    """Conv weight/bias + BatchNorm (eval) folded into (w, b)."""
    kw, kb, kg, kbt, km, kv = jax.random.split(key, 6)
    w = 0.1 * jax.random.normal(kw, (K, K, Cin, Cout), jnp.float32)
    b = 0.1 * jax.random.normal(kb, (Cout,), jnp.float32)
    gamma = 1.0 + 0.1 * jax.random.normal(kg, (Cout,), jnp.float32)
    beta = 0.1 * jax.random.normal(kbt, (Cout,), jnp.float32)
    mean = 0.1 * jax.random.normal(km, (Cout,), jnp.float32)
    var = 1.0 + 0.1 * jnp.abs(jax.random.normal(kv, (Cout,), jnp.float32))
    eps = 1e-5
    scale = gamma / jnp.sqrt(var + eps)
    w_f = w * scale[None, None, None, :]
    b_f = (b - mean) * scale + beta
    return w_f, b_f


# ------------------------------ pure-JAX reference --------------------------- #

def _ref_conv(x, w, b, padding, relu=True, residual=None):
    y = jax.lax.conv_general_dilated(
        x, w, window_strides=(1, 1), padding=[(padding, padding)] * 2,
        dimension_numbers=("NCHW", "HWIO", "NCHW"),
    ) + b[None, :, None, None]
    if residual is not None:
        y = y + residual
    return jnp.maximum(y, 0.0) if relu else y


def down_reference(x_nchw, params):
    y = _ref_conv(x_nchw, params["w0"], params["b0"], 2, relu=True)
    h = _ref_conv(y, params["w1"], params["b1"], 1, relu=True)
    return _ref_conv(h, params["w2"], params["b2"], 1, relu=True, residual=y)


# ----------------------------------- main ------------------------------------ #

if __name__ == "__main__":
    key = jax.random.PRNGKey(0)
    k_x, k0, k1, k2 = jax.random.split(key, 4)

    N, Cin, H, W = 2, 4, 16, 16
    Cout = 8

    x = jax.random.normal(k_x, (N, Cin, H, W), jnp.float32)

    w0, b0 = make_folded_conv_params(k0, 2, Cin, Cout)   # ConvNormAct k=2 p=2
    w1, b1 = make_folded_conv_params(k1, 3, Cout, Cout)  # DoubleConv conv1
    w2, b2 = make_folded_conv_params(k2, 3, Cout, Cout)  # DoubleConv conv2
    params = {"w0": w0, "b0": b0, "w1": w1, "b1": b1, "w2": w2, "b2": b2}

    out = jax.block_until_ready(jax.jit(down_forward)(x, params))
    ref = jax.block_until_ready(down_reference(x, params))

    assert out.shape == ref.shape, (out.shape, ref.shape)
    # bf16 MXU operands vs. f32 reference -> loosened tolerance.
    assert jnp.allclose(out, ref, rtol=3e-2, atol=3e-2), float(
        jnp.max(jnp.abs(out - ref))
    )
    print("KERNEL_OK")
</pallas_src>

<mosaic_0001>
module attributes {stable_mosaic.version = 11 : i64} {
  func.func @_down_kernel(%arg0: i32, %arg1: memref<1x4x640xbf16, #tpu.memory_space<vmem>>, %arg2: memref<4x8x4xbf16, #tpu.memory_space<vmem>>, %arg3: memref<8x1xf32, #tpu.memory_space<vmem>>, %arg4: memref<9x8x8xbf16, #tpu.memory_space<vmem>>, %arg5: memref<8x1xf32, #tpu.memory_space<vmem>>, %arg6: memref<9x8x8xbf16, #tpu.memory_space<vmem>>, %arg7: memref<8x1xf32, #tpu.memory_space<vmem>>, %arg8: memref<1x8x512xf32, #tpu.memory_space<vmem>>, %arg9: memref<8x768xbf16, #tpu.memory_space<vmem>>, %arg10: memref<8x768xbf16, #tpu.memory_space<vmem>>) attributes {dimension_semantics = [#tpu.dimension_semantics<parallel>], iteration_bounds = array<i64: 2>, scalar_prefetch = 0 : i64, scratch_operands = 2 : i64, tpu.core_type = #tpu.core_type<tc>, window_params = [{transform_indices = @transform_0, window_bounds = array<i64: 1, 4, 640>}, {pipeline_mode = #tpu.pipeline_mode<synchronous>, transform_indices = @transform_1, window_bounds = array<i64: 4, 8, 4>}, {pipeline_mode = #tpu.pipeline_mode<synchronous>, transform_indices = @transform_2, window_bounds = array<i64: 8, 1>}, {pipeline_mode = #tpu.pipeline_mode<synchronous>, transform_indices = @transform_3, window_bounds = array<i64: 9, 8, 8>}, {pipeline_mode = #tpu.pipeline_mode<synchronous>, transform_indices = @transform_4, window_bounds = array<i64: 8, 1>}, {pipeline_mode = #tpu.pipeline_mode<synchronous>, transform_indices = @transform_5, window_bounds = array<i64: 9, 8, 8>}, {pipeline_mode = #tpu.pipeline_mode<synchronous>, transform_indices = @transform_6, window_bounds = array<i64: 8, 1>}, {transform_indices = @transform_7, window_bounds = array<i64: 1, 8, 512>}]} {
    %cst = arith.constant 0.000000e+00 : bf16
    %0 = vector.broadcast %cst : bf16 to vector<8x128xbf16>
    %c0 = arith.constant 0 : index
    %c0_0 = arith.constant 0 : index
    %1 = vector.load %arg9[%c0, %c0_0] : memref<8x768xbf16, #tpu.memory_space<vmem>>, vector<8x128xbf16>
    tpu.vector_store %arg9[%c0, %c0_0], %0 {strides = array<i32>} : memref<8x768xbf16, #tpu.memory_space<vmem>>, vector<8x128xbf16>,
    %cst_1 = arith.constant 0.000000e+00 : bf16
    %2 = vector.broadcast %cst_1 : bf16 to vector<8x128xbf16>
    %c0_2 = arith.constant 0 : index
    %c640 = arith.constant 640 : index
    %3 = vector.load %arg9[%c0_2, %c640] : memref<8x768xbf16, #tpu.memory_space<vmem>>, vector<8x128xbf16>
    tpu.vector_store %arg9[%c0_2, %c640], %2 {strides = array<i32>} : memref<8x768xbf16, #tpu.memory_space<vmem>>, vector<8x128xbf16>,
    %cst_3 = arith.constant 0.000000e+00 : bf16
    %4 = vector.broadcast %cst_3 : bf16 to vector<8x128xbf16>
    %c0_4 = arith.constant 0 : index
    %c0_5 = arith.constant 0 : index
    %5 = vector.load %arg10[%c0_4, %c0_5] : memref<8x768xbf16, #tpu.memory_space<vmem>>, vector<8x128xbf16>
    tpu.vector_store %arg10[%c0_4, %c0_5], %4 {strides = array<i32>} : memref<8x768xbf16, #tpu.memory_space<vmem>>, vector<8x128xbf16>,
    %cst_6 = arith.constant 0.000000e+00 : bf16
    %6 = vector.broadcast %cst_6 : bf16 to vector<8x128xbf16>
    %c0_7 = arith.constant 0 : index
    %c640_8 = arith.constant 640 : index
    %7 = vector.load %arg10[%c0_7, %c640_8] : memref<8x768xbf16, #tpu.memory_space<vmem>>, vector<8x128xbf16>
    tpu.vector_store %arg10[%c0_7, %c640_8], %6 {strides = array<i32>} : memref<8x768xbf16, #tpu.memory_space<vmem>>, vector<8x128xbf16>,
    %8 = tpu.iota {dimensions = array<i32: 1>} : vector<1x512xi32>
    %c21_i32 = arith.constant 21 : i32
    %c0_i32 = arith.constant 0 : i32
    %9 = arith.cmpi eq, %c21_i32, %c0_i32 : i32
    %c1_i32 = arith.constant 1 : i32
    %10 = arith.select %9, %c1_i32, %c21_i32 : i32
    %11 = vector.broadcast %10 : i32 to vector<1x512xi32>
    %12 = arith.remsi %8, %11 : vector<1x512xi32>
    %c0_i32_9 = arith.constant 0 : i32
    %13 = vector.broadcast %c0_i32_9 : i32 to vector<1x512xi32>
    %14 = arith.cmpi ne, %12, %13 : vector<1x512xi32>
    %c0_i32_10 = arith.constant 0 : i32
    %15 = vector.broadcast %c0_i32_10 : i32 to vector<1x512xi32>
    %16 = arith.cmpi slt, %12, %15 : vector<1x512xi32>
    %c0_i32_11 = arith.constant 0 : i32
    %17 = arith.cmpi slt, %10, %c0_i32_11 : i32
    %18 = vector.broadcast %17 : i1 to vector<1x512xi1>
    %19 = vector.broadcast %18 : vector<1x512xi1> to vector<1x512xi1>
    %20 = arith.xori %16, %19 : vector<1x512xi1>
    %21 = arith.andi %20, %14 : vector<1x512xi1>
    %22 = vector.broadcast %10 : i32 to vector<1x512xi32>
    %23 = arith.addi %12, %22 : vector<1x512xi32>
    %24 = arith.select %21, %23, %12 : vector<1x512xi1>, vector<1x512xi32>
    %c19_i32 = arith.constant 19 : i32
    %25 = vector.broadcast %c19_i32 : i32 to vector<1x512xi32>
    %26 = arith.cmpi slt, %24, %25 : vector<1x512xi32>
    %c399_i32 = arith.constant 399 : i32
    %27 = vector.broadcast %c399_i32 : i32 to vector<1x512xi32>
    %28 = arith.cmpi slt, %8, %27 : vector<1x512xi32>
    %29 = arith.andi %26, %28 : vector<1x512xi1>
    %c0_12 = arith.constant 0 : index
    %c0_13 = arith.constant 0 : index
    %c0_14 = arith.constant 0 : index
    %30 = vector.load %arg2[%c0_12, %c0_13, %c0_14] : memref<4x8x4xbf16, #tpu.memory_space<vmem>>, vector<1x8x4xbf16>
    %31 = vector.shape_cast %30 : vector<1x8x4xbf16> to vector<8x4xbf16>
    %c0_15 = arith.constant 0 : index
    %c0_16 = arith.constant 0 : index
    %c0_17 = arith.constant 0 : index
    %32 = vector.load %arg1[%c0_15, %c0_16, %c0_17] : memref<1x4x640xbf16, #tpu.memory_space<vmem>>, vector<1x4x512xbf16>
    %33 = vector.shape_cast %32 : vector<1x4x512xbf16> to vector<4x512xbf16>
    %cst_18 = arith.constant dense<0.000000e+00> : vector<8x512xf32>
    %34 = tpu.matmul %31, %33, %cst_18 {dimension_numbers = #tpu.dot_dimension_numbers<[1], [0], [0], [1], [0, 0, 1, 1], [], []>} : vector<8x4xbf16>, vector<4x512xbf16>, vector<8x512xf32> -> vector<8x512xf32>
    %c1 = arith.constant 1 : index
    %c0_19 = arith.constant 0 : index
    %c0_20 = arith.constant 0 : index
    %35 = vector.load %arg2[%c1, %c0_19, %c0_20] : memref<4x8x4xbf16, #tpu.memory_space<vmem>>, vector<1x8x4xbf16>
    %36 = vector.shape_cast %35 : vector<1x8x4xbf16> to vector<8x4xbf16>
    %c0_21 = arith.constant 0 : index
    %c0_22 = arith.constant 0 : index
    %c1_23 = arith.constant 1 : index
    %37 = vector.load %arg1[%c0_21, %c0_22, %c1_23] : memref<1x4x640xbf16, #tpu.memory_space<vmem>>, vector<1x4x512xbf16>
    %38 = vector.shape_cast %37 : vector<1x4x512xbf16> to vector<4x512xbf16>
    %cst_24 = arith.constant dense<0.000000e+00> : vector<8x512xf32>
    %39 = tpu.matmul %36, %38, %cst_24 {dimension_numbers = #tpu.dot_dimension_numbers<[1], [0], [0], [1], [0, 0, 1, 1], [], []>} : vector<8x4xbf16>, vector<4x512xbf16>, vector<8x512xf32> -> vector<8x512xf32>
    %40 = arith.addf %34, %39 : vector<8x512xf32>
    %c2 = arith.constant 2 : index
    %c0_25 = arith.constant 0 : index
    %c0_26 = arith.constant 0 : index
    %41 = vector.load %arg2[%c2, %c0_25, %c0_26] : memref<4x8x4xbf16, #tpu.memory_space<vmem>>, vector<1x8x4xbf16>
    %42 = vector.shape_cast %41 : vector<1x8x4xbf16> to vector<8x4xbf16>
    %c0_27 = arith.constant 0 : index
    %c0_28 = arith.constant 0 : index
    %c21 = arith.constant 21 : index
    %43 = vector.load %arg1[%c0_27, %c0_28, %c21] : memref<1x4x640xbf16, #tpu.memory_space<vmem>>, vector<1x4x512xbf16>
    %44 = vector.shape_cast %43 : vector<1x4x512xbf16> to vector<4x512xbf16>
    %cst_29 = arith.constant dense<0.000000e+00> : vector<8x512xf32>
    %45 = tpu.matmul %42, %44, %cst_29 {dimension_numbers = #tpu.dot_dimension_numbers<[1], [0], [0], [1], [0, 0, 1, 1], [], []>} : vector<8x4xbf16>, vector<4x512xbf16>, vector<8x512xf32> -> vector<8x512xf32>
    %46 = arith.addf %40, %45 : vector<8x512xf32>
    %c3 = arith.constant 3 : index
    %c0_30 = arith.constant 0 : index
    %c0_31 = arith.constant 0 : index
    %47 = vector.load %arg2[%c3, %c0_30, %c0_31] : memref<4x8x4xbf16, #tpu.memory_space<vmem>>, vector<1x8x4xbf16>
    %48 = vector.shape_cast %47 : vector<1x8x4xbf16> to vector<8x4xbf16>
    %c0_32 = arith.constant 0 : index
    %c0_33 = arith.constant 0 : index
    %c22 = arith.constant 22 : index
    %49 = vector.load %arg1[%c0_32, %c0_33, %c22] : memref<1x4x640xbf16, #tpu.memory_space<vmem>>, vector<1x4x512xbf16>
    %50 = vector.shape_cast %49 : vector<1x4x512xbf16> to vector<4x512xbf16>
    %cst_34 = arith.constant dense<0.000000e+00> : vector<8x512xf32>
    %51 = tpu.matmul %48, %50, %cst_34 {dimension_numbers = #tpu.dot_dimension_numbers<[1], [0], [0], [1], [0, 0, 1, 1], [], []>} : vector<8x4xbf16>, vector<4x512xbf16>, vector<8x512xf32> -> vector<8x512xf32>
    %52 = arith.addf %46, %51 : vector<8x512xf32>
    %c0_35 = arith.constant 0 : index
    %c0_36 = arith.constant 0 : index
    %53 = vector.load %arg3[%c0_35, %c0_36] : memref<8x1xf32, #tpu.memory_space<vmem>>, vector<8x1xf32>
    %54 = vector.broadcast %53 : vector<8x1xf32> to vector<8x512xf32>
    %55 = arith.addf %52, %54 : vector<8x512xf32>
    %cst_37 = arith.constant 0.000000e+00 : f32
    %56 = vector.broadcast %cst_37 : f32 to vector<8x512xf32>
    %57 = arith.maximumf %55, %56 : vector<8x512xf32>
    %cst_38 = arith.constant 0.000000e+00 : f32
    %58 = vector.shape_cast %29 : vector<1x512xi1> to vector<1x512xi1>
    %59 = vector.broadcast %58 : vector<1x512xi1> to vector<8x512xi1>
    %60 = vector.broadcast %cst_38 : f32 to vector<8x512xf32>
    %61 = arith.select %59, %57, %60 : vector<8x512xi1>, vector<8x512xf32>
    %62 = arith.truncf %61 : vector<8x512xf32> to vector<8x512xbf16>
    %c0_39 = arith.constant 0 : index
    %c128 = arith.constant 128 : index
    %63 = vector.load %arg9[%c0_39, %c128] : memref<8x768xbf16, #tpu.memory_space<vmem>>, vector<8x512xbf16>
    tpu.vector_store %arg9[%c0_39, %c128], %62 {strides = array<i32>} : memref<8x768xbf16, #tpu.memory_space<vmem>>, vector<8x512xbf16>,
    %c0_40 = arith.constant 0 : index
    %c0_41 = arith.constant 0 : index
    %c0_42 = arith.constant 0 : index
    %64 = vector.load %arg4[%c0_40, %c0_41, %c0_42] : memref<9x8x8xbf16, #tpu.memory_space<vmem>>, vector<1x8x8xbf16>
    %65 = vector.shape_cast %64 : vector<1x8x8xbf16> to vector<8x8xbf16>
    %c0_43 = arith.constant 0 : index
    %c106 = arith.constant 106 : index
    %66 = vector.load %arg9[%c0_43, %c106] : memref<8x768xbf16, #tpu.memory_space<vmem>>, vector<8x512xbf16>
    %cst_44 = arith.constant dense<0.000000e+00> : vector<8x512xf32>
    %67 = tpu.matmul %65, %66, %cst_44 {dimension_numbers = #tpu.dot_dimension_numbers<[1], [0], [0], [1], [0, 0, 1, 1], [], []>} : vector<8x8xbf16>, vector<8x512xbf16>, vector<8x512xf32> -> vector<8x512xf32>
    %c1_45 = arith.constant 1 : index
    %c0_46 = arith.constant 0 : index
    %c0_47 = arith.constant 0 : index
    %68 = vector.load %arg4[%c1_45, %c0_46, %c0_47] : memref<9x8x8xbf16, #tpu.memory_space<vmem>>, vector<1x8x8xbf16>
    %69 = vector.shape_cast %68 : vector<1x8x8xbf16> to vector<8x8xbf16>
    %c0_48 = arith.constant 0 : index
    %c107 = arith.constant 107 : index
    %70 = vector.load %arg9[%c0_48, %c107] : memref<8x768xbf16, #tpu.memory_space<vmem>>, vector<8x512xbf16>
    %cst_49 = arith.constant dense<0.000000e+00> : vector<8x512xf32>
    %71 = tpu.matmul %69, %70, %cst_49 {dimension_numbers = #tpu.dot_dimension_numbers<[1], [0], [0], [1], [0, 0, 1, 1], [], []>} : vector<8x8xbf16>, vector<8x512xbf16>, vector<8x512xf32> -> vector<8x512xf32>
    %72 = arith.addf %67, %71 : vector<8x512xf32>
    %c2_50 = arith.constant 2 : index
    %c0_51 = arith.constant 0 : index
    %c0_52 = arith.constant 0 : index
    %73 = vector.load %arg4[%c2_50, %c0_51, %c0_52] : memref<9x8x8xbf16, #tpu.memory_space<vmem>>, vector<1x8x8xbf16>
    %74 = vector.shape_cast %73 : vector<1x8x8xbf16> to vector<8x8xbf16>
    %c0_53 = arith.constant 0 : index
    %c108 = arith.constant 108 : index
    %75 = vector.load %arg9[%c0_53, %c108] : memref<8x768xbf16, #tpu.memory_space<vmem>>, vector<8x512xbf16>
    %cst_54 = arith.constant dense<0.000000e+00> : vector<8x512xf32>
    %76 = tpu.matmul %74, %75, %cst_54 {dimension_numbers = #tpu.dot_dimension_numbers<[1], [0], [0], [1], [0, 0, 1, 1], [], []>} : vector<8x8xbf16>, vector<8x512xbf16>, vector<8x512xf32> -> vector<8x512xf32>
    %77 = arith.addf %72, %76 : vector<8x512xf32>
    %c3_55 = arith.constant 3 : index
    %c0_56 = arith.constant 0 : index
    %c0_57 = arith.constant 0 : index
    %78 = vector.load %arg4[%c3_55, %c0_56, %c0_57] : memref<9x8x8xbf16, #tpu.memory_space<vmem>>, vector<1x8x8xbf16>
    %79 = vector.shape_cast %78 : vector<1x8x8xbf16> to vector<8x8xbf16>
    %c0_58 = arith.constant 0 : index
    %c127 = arith.constant 127 : index
    %80 = vector.load %arg9[%c0_58, %c127] : memref<8x768xbf16, #tpu.memory_space<vmem>>, vector<8x512xbf16>
    %cst_59 = arith.constant dense<0.000000e+00> : vector<8x512xf32>
    %81 = tpu.matmul %79, %80, %cst_59 {dimension_numbers = #tpu.dot_dimension_numbers<[1], [0], [0], [1], [0, 0, 1, 1], [], []>} : vector<8x8xbf16>, vector<8x512xbf16>, vector<8x512xf32> -> vector<8x512xf32>
    %82 = arith.addf %77, %81 : vector<8x512xf32>
    %c4 = arith.constant 4 : index
    %c0_60 = arith.constant 0 : index
    %c0_61 = arith.constant 0 : index
    %83 = vector.load %arg4[%c4, %c0_60, %c0_61] : memref<9x8x8xbf16, #tpu.memory_space<vmem>>, vector<1x8x8xbf16>
    %84 = vector.shape_cast %83 : vector<1x8x8xbf16> to vector<8x8xbf16>
    %c0_62 = arith.constant 0 : index
    %c128_63 = arith.constant 128 : index
    %85 = vector.load %arg9[%c0_62, %c128_63] : memref<8x768xbf16, #tpu.memory_space<vmem>>, vector<8x512xbf16>
    %cst_64 = arith.constant dense<0.000000e+00> : vector<8x512xf32>
    %86 = tpu.matmul %84, %85, %cst_64 {dimension_numbers = #tpu.dot_dimension_numbers<[1], [0], [0], [1], [0, 0, 1, 1], [], []>} : vector<8x8xbf16>, vector<8x512xbf16>, vector<8x512xf32> -> vector<8x512xf32>
    %87 = arith.addf %82, %86 : vector<8x512xf32>
    %c5 = arith.constant 5 : index
    %c0_65 = arith.constant 0 : index
    %c0_66 = arith.constant 0 : index
    %88 = vector.load %arg4[%c5, %c0_65, %c0_66] : memref<9x8x8xbf16, #tpu.memory_space<vmem>>, vector<1x8x8xbf16>
    %89 = vector.shape_cast %88 : vector<1x8x8xbf16> to vector<8x8xbf16>
    %c0_67 = arith.constant 0 : index
    %c129 = arith.constant 129 : index
    %90 = vector.load %arg9[%c0_67, %c129] : memref<8x768xbf16, #tpu.memory_space<vmem>>, vector<8x512xbf16>
    %cst_68 = arith.constant dense<0.000000e+00> : vector<8x512xf32>
    %91 = tpu.matmul %89, %90, %cst_68 {dimension_numbers = #tpu.dot_dimension_numbers<[1], [0], [0], [1], [0, 0, 1, 1], [], []>} : vector<8x8xbf16>, vector<8x512xbf16>, vector<8x512xf32> -> vector<8x512xf32>
    %92 = arith.addf %87, %91 : vector<8x512xf32>
    %c6 = arith.constant 6 : index
    %c0_69 = arith.constant 0 : index
    %c0_70 = arith.constant 0 : index
    %93 = vector.load %arg4[%c6, %c0_69, %c0_70] : memref<9x8x8xbf16, #tpu.memory_space<vmem>>, vector<1x8x8xbf16>
    %94 = vector.shape_cast %93 : vector<1x8x8xbf16> to vector<8x8xbf16>
    %c0_71 = arith.constant 0 : index
    %c148 = arith.constant 148 : index
    %95 = vector.load %arg9[%c0_71, %c148] : memref<8x768xbf16, #tpu.memory_space<vmem>>, vector<8x512xbf16>
    %cst_72 = arith.constant dense<0.000000e+00> : vector<8x512xf32>
    %96 = tpu.matmul %94, %95, %cst_72 {dimension_numbers = #tpu.dot_dimension_numbers<[1], [0], [0], [1], [0, 0, 1, 1], [], []>} : vector<8x8xbf16>, vector<8x512xbf16>, vector<8x512xf32> -> vector<8x512xf32>
    %97 = arith.addf %92, %96 : vector<8x512xf32>
    %c7 = arith.constant 7 : index
    %c0_73 = arith.constant 0 : index
    %c0_74 = arith.constant 0 : index
    %98 = vector.load %arg4[%c7, %c0_73, %c0_74] : memref<9x8x8xbf16, #tpu.memory_space<vmem>>, vector<1x8x8xbf16>
    %99 = vector.shape_cast %98 : vector<1x8x8xbf16> to vector<8x8xbf16>
    %c0_75 = arith.constant 0 : index
    %c149 = arith.constant 149 : index
    %100 = vector.load %arg9[%c0_75, %c149] : memref<8x768xbf16, #tpu.memory_space<vmem>>, vector<8x512xbf16>
    %cst_76 = arith.constant dense<0.000000e+00> : vector<8x512xf32>
    %101 = tpu.matmul %99, %100, %cst_76 {dimension_numbers = #tpu.dot_dimension_numbers<[1], [0], [0], [1], [0, 0, 1, 1], [], []>} : vector<8x8xbf16>, vector<8x512xbf16>, vector<8x512xf32> -> vector<8x512xf32>
    %102 = arith.addf %97, %101 : vector<8x512xf32>
    %c8 = arith.constant 8 : index
    %c0_77 = arith.constant 0 : index
    %c0_78 = arith.constant 0 : index
    %103 = vector.load %arg4[%c8, %c0_77, %c0_78] : memref<9x8x8xbf16, #tpu.memory_space<vmem>>, vector<1x8x8xbf16>
    %104 = vector.shape_cast %103 : vector<1x8x8xbf16> to vector<8x8xbf16>
    %c0_79 = arith.constant 0 : index
    %c150 = arith.constant 150 : index
    %105 = vector.load %arg9[%c0_79, %c150] : memref<8x768xbf16, #tpu.memory_space<vmem>>, vector<8x512xbf16>
    %cst_80 = arith.constant dense<0.000000e+00> : vector<8x512xf32>
    %106 = tpu.matmul %104, %105, %cst_80 {dimension_numbers = #tpu.dot_dimension_numbers<[1], [0], [0], [1], [0, 0, 1, 1], [], []>} : vector<8x8xbf16>, vector<8x512xbf16>, vector<8x512xf32> -> vector<8x512xf32>
    %107 = arith.addf %102, %106 : vector<8x512xf32>
    %c0_81 = arith.constant 0 : index
    %c0_82 = arith.constant 0 : index
    %108 = vector.load %arg5[%c0_81, %c0_82] : memref<8x1xf32, #tpu.memory_space<vmem>>, vector<8x1xf32>
    %109 = vector.broadcast %108 : vector<8x1xf32> to vector<8x512xf32>
    %110 = arith.addf %107, %109 : vector<8x512xf32>
    %cst_83 = arith.constant 0.000000e+00 : f32
    %111 = vector.broadcast %cst_83 : f32 to vector<8x512xf32>
    %112 = arith.maximumf %110, %111 : vector<8x512xf32>
    %cst_84 = arith.constant 0.000000e+00 : f32
    %113 = vector.shape_cast %29 : vector<1x512xi1> to vector<1x512xi1>
    %114 = vector.broadcast %113 : vector<1x512xi1> to vector<8x512xi1>
    %115 = vector.broadcast %cst_84 : f32 to vector<8x512xf32>
    %116 = arith.select %114, %112, %115 : vector<8x512xi1>, vector<8x512xf32>
    %117 = arith.truncf %116 : vector<8x512xf32> to vector<8x512xbf16>
    %c0_85 = arith.constant 0 : index
    %c128_86 = arith.constant 128 : index
    %118 = vector.load %arg10[%c0_85, %c128_86] : memref<8x768xbf16, #tpu.memory_space<vmem>>, vector<8x512xbf16>
    tpu.vector_store %arg10[%c0_85, %c128_86], %117 {strides = array<i32>} : memref<8x768xbf16, #tpu.memory_space<vmem>>, vector<8x512xbf16>,
    %c0_87 = arith.constant 0 : index
    %c0_88 = arith.constant 0 : index
    %c0_89 = arith.constant 0 : index
    %119 = vector.load %arg6[%c0_87, %c0_88, %c0_89] : memref<9x8x8xbf16, #tpu.memory_space<vmem>>, vector<1x8x8xbf16>
    %120 = vector.shape_cast %119 : vector<1x8x8xbf16> to vector<8x8xbf16>
    %c0_90 = arith.constant 0 : index
    %c106_91 = arith.constant 106 : index
    %121 = vector.load %arg10[%c0_90, %c106_91] : memref<8x768xbf16, #tpu.memory_space<vmem>>, vector<8x512xbf16>
    %cst_92 = arith.constant dense<0.000000e+00> : vector<8x512xf32>
    %122 = tpu.matmul %120, %121, %cst_92 {dimension_numbers = #tpu.dot_dimension_numbers<[1], [0], [0], [1], [0, 0, 1, 1], [], []>} : vector<8x8xbf16>, vector<8x512xbf16>, vector<8x512xf32> -> vector<8x512xf32>
    %c1_93 = arith.constant 1 : index
    %c0_94 = arith.constant 0 : index
    %c0_95 = arith.constant 0 : index
    %123 = vector.load %arg6[%c1_93, %c0_94, %c0_95] : memref<9x8x8xbf16, #tpu.memory_space<vmem>>, vector<1x8x8xbf16>
    %124 = vector.shape_cast %123 : vector<1x8x8xbf16> to vector<8x8xbf16>
    %c0_96 = arith.constant 0 : index
    %c107_97 = arith.constant 107 : index
    %125 = vector.load %arg10[%c0_96, %c107_97] : memref<8x768xbf16, #tpu.memory_space<vmem>>, vector<8x512xbf16>
    %cst_98 = arith.constant dense<0.000000e+00> : vector<8x512xf32>
    %126 = tpu.matmul %124, %125, %cst_98 {dimension_numbers = #tpu.dot_dimension_numbers<[1], [0], [0], [1], [0, 0, 1, 1], [], []>} : vector<8x8xbf16>, vector<8x512xbf16>, vector<8x512xf32> -> vector<8x512xf32>
    %127 = arith.addf %122, %126 : vector<8x512xf32>
    %c2_99 = arith.constant 2 : index
    %c0_100 = arith.constant 0 : index
    %c0_101 = arith.constant 0 : index
    %128 = vector.load %arg6[%c2_99, %c0_100, %c0_101] : memref<9x8x8xbf16, #tpu.memory_space<vmem>>, vector<1x8x8xbf16>
    %129 = vector.shape_cast %128 : vector<1x8x8xbf16> to vector<8x8xbf16>
    %c0_102 = arith.constant 0 : index
    %c108_103 = arith.constant 108 : index
    %130 = vector.load %arg10[%c0_102, %c108_103] : memref<8x768xbf16, #tpu.memory_space<vmem>>, vector<8x512xbf16>
    %cst_104 = arith.constant dense<0.000000e+00> : vector<8x512xf32>
    %131 = tpu.matmul %129, %130, %cst_104 {dimension_numbers = #tpu.dot_dimension_numbers<[1], [0], [0], [1], [0, 0, 1, 1], [], []>} : vector<8x8xbf16>, vector<8x512xbf16>, vector<8x512xf32> -> vector<8x512xf32>
    %132 = arith.addf %127, %131 : vector<8x512xf32>
    %c3_105 = arith.constant 3 : index
    %c0_106 = arith.constant 0 : index
    %c0_107 = arith.constant 0 : index
    %133 = vector.load %arg6[%c3_105, %c0_106, %c0_107] : memref<9x8x8xbf16, #tpu.memory_space<vmem>>, vector<1x8x8xbf16>
    %134 = vector.shape_cast %133 : vector<1x8x8xbf16> to vector<8x8xbf16>
    %c0_108 = arith.constant 0 : index
    %c127_109 = arith.constant 127 : index
    %135 = vector.load %arg10[%c0_108, %c127_109] : memref<8x768xbf16, #tpu.memory_space<vmem>>, vector<8x512xbf16>
    %cst_110 = arith.constant dense<0.000000e+00> : vector<8x512xf32>
    %136 = tpu.matmul %134, %135, %cst_110 {dimension_numbers = #tpu.dot_dimension_numbers<[1], [0], [0], [1], [0, 0, 1, 1], [], []>} : vector<8x8xbf16>, vector<8x512xbf16>, vector<8x512xf32> -> vector<8x512xf32>
    %137 = arith.addf %132, %136 : vector<8x512xf32>
    %c4_111 = arith.constant 4 : index
    %c0_112 = arith.constant 0 : index
    %c0_113 = arith.constant 0 : index
    %138 = vector.load %arg6[%c4_111, %c0_112, %c0_113] : memref<9x8x8xbf16, #tpu.memory_space<vmem>>, vector<1x8x8xbf16>
    %139 = vector.shape_cast %138 : vector<1x8x8xbf16> to vector<8x8xbf16>
    %c0_114 = arith.constant 0 : index
    %c128_115 = arith.constant 128 : index
    %140 = vector.load %arg10[%c0_114, %c128_115] : memref<8x768xbf16, #tpu.memory_space<vmem>>, vector<8x512xbf16>
    %cst_116 = arith.constant dense<0.000000e+00> : vector<8x512xf32>
    %141 = tpu.matmul %139, %140, %cst_116 {dimension_numbers = #tpu.dot_dimension_numbers<[1], [0], [0], [1], [0, 0, 1, 1], [], []>} : vector<8x8xbf16>, vector<8x512xbf16>, vector<8x512xf32> -> vector<8x512xf32>
    %142 = arith.addf %137, %141 : vector<8x512xf32>
    %c5_117 = arith.constant 5 : index
    %c0_118 = arith.constant 0 : index
    %c0_119 = arith.constant 0 : index
    %143 = vector.load %arg6[%c5_117, %c0_118, %c0_119] : memref<9x8x8xbf16, #tpu.memory_space<vmem>>, vector<1x8x8xbf16>
    %144 = vector.shape_cast %143 : vector<1x8x8xbf16> to vector<8x8xbf16>
    %c0_120 = arith.constant 0 : index
    %c129_121 = arith.constant 129 : index
    %145 = vector.load %arg10[%c0_120, %c129_121] : memref<8x768xbf16, #tpu.memory_space<vmem>>, vector<8x512xbf16>
    %cst_122 = arith.constant dense<0.000000e+00> : vector<8x512xf32>
    %146 = tpu.matmul %144, %145, %cst_122 {dimension_numbers = #tpu.dot_dimension_numbers<[1], [0], [0], [1], [0, 0, 1, 1], [], []>} : vector<8x8xbf16>, vector<8x512xbf16>, vector<8x512xf32> -> vector<8x512xf32>
    %147 = arith.addf %142, %146 : vector<8x512xf32>
    %c6_123 = arith.constant 6 : index
    %c0_124 = arith.constant 0 : index
    %c0_125 = arith.constant 0 : index
    %148 = vector.load %arg6[%c6_123, %c0_124, %c0_125] : memref<9x8x8xbf16, #tpu.memory_space<vmem>>, vector<1x8x8xbf16>
    %149 = vector.shape_cast %148 : vector<1x8x8xbf16> to vector<8x8xbf16>
    %c0_126 = arith.constant 0 : index
    %c148_127 = arith.constant 148 : index
    %150 = vector.load %arg10[%c0_126, %c148_127] : memref<8x768xbf16, #tpu.memory_space<vmem>>, vector<8x512xbf16>
    %cst_128 = arith.constant dense<0.000000e+00> : vector<8x512xf32>
    %151 = tpu.matmul %149, %150, %cst_128 {dimension_numbers = #tpu.dot_dimension_numbers<[1], [0], [0], [1], [0, 0, 1, 1], [], []>} : vector<8x8xbf16>, vector<8x512xbf16>, vector<8x512xf32> -> vector<8x512xf32>
    %152 = arith.addf %147, %151 : vector<8x512xf32>
    %c7_129 = arith.constant 7 : index
    %c0_130 = arith.constant 0 : index
    %c0_131 = arith.constant 0 : index
    %153 = vector.load %arg6[%c7_129, %c0_130, %c0_131] : memref<9x8x8xbf16, #tpu.memory_space<vmem>>, vector<1x8x8xbf16>
    %154 = vector.shape_cast %153 : vector<1x8x8xbf16> to vector<8x8xbf16>
    %c0_132 = arith.constant 0 : index
    %c149_133 = arith.constant 149 : index
    %155 = vector.load %arg10[%c0_132, %c149_133] : memref<8x768xbf16, #tpu.memory_space<vmem>>, vector<8x512xbf16>
    %cst_134 = arith.constant dense<0.000000e+00> : vector<8x512xf32>
    %156 = tpu.matmul %154, %155, %cst_134 {dimension_numbers = #tpu.dot_dimension_numbers<[1], [0], [0], [1], [0, 0, 1, 1], [], []>} : vector<8x8xbf16>, vector<8x512xbf16>, vector<8x512xf32> -> vector<8x512xf32>
    %157 = arith.addf %152, %156 : vector<8x512xf32>
    %c8_135 = arith.constant 8 : index
    %c0_136 = arith.constant 0 : index
    %c0_137 = arith.constant 0 : index
    %158 = vector.load %arg6[%c8_135, %c0_136, %c0_137] : memref<9x8x8xbf16, #tpu.memory_space<vmem>>, vector<1x8x8xbf16>
    %159 = vector.shape_cast %158 : vector<1x8x8xbf16> to vector<8x8xbf16>
    %c0_138 = arith.constant 0 : index
    %c150_139 = arith.constant 150 : index
    %160 = vector.load %arg10[%c0_138, %c150_139] : memref<8x768xbf16, #tpu.memory_space<vmem>>, vector<8x512xbf16>
    %cst_140 = arith.constant dense<0.000000e+00> : vector<8x512xf32>
    %161 = tpu.matmul %159, %160, %cst_140 {dimension_numbers = #tpu.dot_dimension_numbers<[1], [0], [0], [1], [0, 0, 1, 1], [], []>} : vector<8x8xbf16>, vector<8x512xbf16>, vector<8x512xf32> -> vector<8x512xf32>
    %162 = arith.addf %157, %161 : vector<8x512xf32>
    %c0_141 = arith.constant 0 : index
    %c0_142 = arith.constant 0 : index
    %163 = vector.load %arg7[%c0_141, %c0_142] : memref<8x1xf32, #tpu.memory_space<vmem>>, vector<8x1xf32>
    %164 = vector.broadcast %163 : vector<8x1xf32> to vector<8x512xf32>
    %165 = arith.addf %162, %164 : vector<8x512xf32>
    %166 = arith.addf %165, %57 : vector<8x512xf32>
    %cst_143 = arith.constant 0.000000e+00 : f32
    %167 = vector.broadcast %cst_143 : f32 to vector<8x512xf32>
    %168 = arith.maximumf %166, %167 : vector<8x512xf32>
    %c0_144 = arith.constant 0 : index
    %c0_145 = arith.constant 0 : index
    %c0_146 = arith.constant 0 : index
    %169 = vector.load %arg8[%c0_144, %c0_145, %c0_146] : memref<1x8x512xf32, #tpu.memory_space<vmem>>, vector<1x8x512xf32>
    %170 = vector.shape_cast %169 : vector<1x8x512xf32> to vector<8x512xf32>
    %171 = vector.shape_cast %168 : vector<8x512xf32> to vector<1x8x512xf32>
    tpu.vector_store %arg8[%c0_144, %c0_145, %c0_146], %171 {strides = array<i32>} : memref<1x8x512xf32, #tpu.memory_space<vmem>>, vector<1x8x512xf32>,
    return
  }
  func.func @transform_0(%arg0: i32) -> (i32, i32, i32) {
    %c0_i32 = arith.constant 0 : i32
    %c0_i32_0 = arith.constant 0 : i32
    %c0_i32_1 = arith.constant 0 : i32
    return %arg0, %c0_i32, %c0_i32_0 : i32, i32, i32
  }
  func.func @transform_1(%arg0: i32) -> (i32, i32, i32) {
    %c0_i32 = arith.constant 0 : i32
    %c0_i32_0 = arith.constant 0 : i32
    %c0_i32_1 = arith.constant 0 : i32
    %c0_i32_2 = arith.constant 0 : i32
    return %c0_i32, %c0_i32_0, %c0_i32_1 : i32, i32, i32
  }
  func.func @transform_2(%arg0: i32) -> (i32, i32) {
    %c0_i32 = arith.constant 0 : i32
    %c0_i32_0 = arith.constant 0 : i32
    %c0_i32_1 = arith.constant 0 : i32
    return %c0_i32, %c0_i32_0 : i32, i32
  }
  func.func @transform_3(%arg0: i32) -> (i32, i32, i32) {
    %c0_i32 = arith.constant 0 : i32
    %c0_i32_0 = arith.constant 0 : i32
    %c0_i32_1 = arith.constant 0 : i32
    %c0_i32_2 = arith.constant 0 : i32
    return %c0_i32, %c0_i32_0, %c0_i32_1 : i32, i32, i32
  }
  func.func @transform_4(%arg0: i32) -> (i32, i32) {
    %c0_i32 = arith.constant 0 : i32
    %c0_i32_0 = arith.constant 0 : i32
    %c0_i32_1 = arith.constant 0 : i32
    return %c0_i32, %c0_i32_0 : i32, i32
  }
  func.func @transform_5(%arg0: i32) -> (i32, i32, i32) {
    %c0_i32 = arith.constant 0 : i32
    %c0_i32_0 = arith.constant 0 : i32
    %c0_i32_1 = arith.constant 0 : i32
    %c0_i32_2 = arith.constant 0 : i32
    return %c0_i32, %c0_i32_0, %c0_i32_1 : i32, i32, i32
  }
  func.func @transform_6(%arg0: i32) -> (i32, i32) {
    %c0_i32 = arith.constant 0 : i32
    %c0_i32_0 = arith.constant 0 : i32
    %c0_i32_1 = arith.constant 0 : i32
    return %c0_i32, %c0_i32_0 : i32, i32
  }
  func.func @transform_7(%arg0: i32) -> (i32, i32, i32) {
    %c0_i32 = arith.constant 0 : i32
    %c0_i32_0 = arith.constant 0 : i32
    %c0_i32_1 = arith.constant 0 : i32
    return %arg0, %c0_i32, %c0_i32_0 : i32, i32, i32
  }
}

</mosaic_0001>

<llo_original>
// kernel: down_forward.1
$region0: #{down_forward.1}
  #allocation0 [shape = 'u32[]', space=smem, size = 0x4, offset = 0x4, fixed_abs, tag = 'smem constant byte address 0x4 - core index']
  #allocation1 [shape = 'u32[144,128]{1,0:T(1,128)}', space=vmem, size = 0x12000, scoped, tag = 'internal scratch']
  #allocation2 [shape = 'bf16[8,768]{1,0:T(8,128)(2,1)}', space=vmem, size = 0x3000, scoped, tag = 'scratch operand']
  #allocation3 [shape = 'bf16[8,768]{1,0:T(8,128)(2,1)}', space=vmem, size = 0x3000, scoped, tag = 'scratch operand']
  %s0 = inlined_call_operand.vmem [shape: bf16[2,4,640], index: 0, kind: input, shape index: {}]
  %s1 = inlined_call_operand.vmem [shape: bf16[4,8,4], index: 1, kind: input, shape index: {}]
  %s2 = inlined_call_operand.vmem [shape: f32[8,1], index: 2, kind: input, shape index: {}]
  %s3 = inlined_call_operand.vmem [shape: bf16[9,8,8], index: 3, kind: input, shape index: {}]
  %s4 = inlined_call_operand.vmem [shape: f32[8,1], index: 4, kind: input, shape index: {}]
  %s5 = inlined_call_operand.vmem [shape: bf16[9,8,8], index: 5, kind: input, shape index: {}]
  %s6 = inlined_call_operand.vmem [shape: f32[8,1], index: 6, kind: input, shape index: {}]
  %s7 = inlined_call_operand.vmem [shape: f32[2,8,512], index: 7, kind: output, shape index: {}]
  %s8 = sld [smem:[#allocation0]]
  $region61: #{down_forward.1} parent=0
    _
  %s10 = ssub.s32 1, %s8
  %s11 = scalar_select 0, %s10, %s8
  loop: start=0, step=1, limit=4
  $region2: #{down_forward.1} parent=0 // loop_pre_header
    _
  $region3: #{down_forward.1} parent=0 // loop_header
    %s13 = sphi 0, %s17
    %p14 = scmp.ge.s32.totalorder %s13, 4
    %s23 = sphi 0, %s25
    %s26 = sphi 0, %s23
    %s27 = sphi 0, %s26
    %s43 = sphi 0, %s27
    %s47 = sphi 0, %s47
    %s49 = sphi 0, %s47
    %s50 = sphi 0, %s49
    %s64 = sphi 0, %s50
    %s68 = sphi 0, %s68
    %s70 = sphi 0, %s68
    %s71 = sphi 0, %s70
    %s85 = sphi 0, %s71
    %s89 = sphi 0, %s89
    %s91 = sphi 0, %s89
    %s92 = sphi 0, %s91
    %s106 = sphi 0, %s92
    %s110 = sphi 0, %s110
    %s112 = sphi 0, %s110
    %s113 = sphi 0, %s112
    %s127 = sphi 0, %s113
    %s131 = sphi 0, %s131
    %s133 = sphi 0, %s131
    %s134 = sphi 0, %s133
    %s148 = sphi 0, %s134
    %s152 = sphi 0, %s152
    %s154 = sphi 0, %s152
    %s155 = sphi 0, %s154
    %s169 = sphi 0, %s155
    %s175 = sphi 0, %s177
    %s178 = sphi 0, %s175
    %s179 = sphi 0, %s178
    %s195 = sphi 0, %s179
  $region4: #{down_forward.1} parent=0 // loop_header_branch
    %16 = sbr.rel (%p14) target = $region8
  $region5: #{down_forward.1} parent=0 // loop_body
    %s18 = ssub.s32 %s13, 1
    %s19 = ssub.s32 %s13, 2
    %s20 = sadd.s32 %s13, 1
    %s21 = ssub.s32 %s13, %s20
    %p22 = scmp.eq.s32.totalorder %s21, 0
    %s24 = sadd.s32 %s23, 1
    %s25 = scalar_select %p22, %s23, %s24
    %p28 = pneg %p22
    %p29 = scmp.eq.s32.totalorder %s13, 1
    %p30 = por %p28, %p29
    %p31 = scmp.ne.s32.totalorder %s23, %s26
    %p32 = scmp.eq.s32.totalorder %s13, 0
    %p33 = por %p31, %p32
    %p34 = scmp.ne.s32.totalorder %s23, %s26
    %p35 = scmp.eq.s32.totalorder %s18, 1
    %p36 = por %p34, %p35
    %p37 = scmp.ne.s32.totalorder %s26, %s27
    %p38 = scmp.eq.s32.totalorder %s18, 0
    %p39 = por %p37, %p38
    %p40 = scmp.ne.s32.totalorder %s26, %s27
    %p41 = scmp.eq.s32.totalorder %s19, 1
    %p42 = por %p40, %p41
    %p44 = scmp.ne.s32.totalorder %s27, %s43
    %p45 = scmp.eq.s32.totalorder %s19, 0
    %p46 = por %p44, %p45
    %s48 = sadd.s32 %s47, 1
    %p51 = scmp.eq.s32.totalorder %s13, 1
    %p52 = scmp.ne.s32.totalorder %s47, %s49
    %p53 = scmp.eq.s32.totalorder %s13, 0
    %p54 = por %p52, %p53
    %p55 = scmp.ne.s32.totalorder %s47, %s49
    %p56 = scmp.eq.s32.totalorder %s18, 1
    %p57 = por %p55, %p56
    %p58 = scmp.ne.s32.totalorder %s49, %s50
    %p59 = scmp.eq.s32.totalorder %s18, 0
    %p60 = por %p58, %p59
    %p61 = scmp.ne.s32.totalorder %s49, %s50
    %p62 = scmp.eq.s32.totalorder %s19, 1
    %p63 = por %p61, %p62
    %p65 = scmp.ne.s32.totalorder %s50, %s64
    %p66 = scmp.eq.s32.totalorder %s19, 0
    %p67 = por %p65, %p66
    %s69 = sadd.s32 %s68, 1
    %p72 = scmp.eq.s32.totalorder %s13, 1
    %p73 = scmp.ne.s32.totalorder %s68, %s70
    %p74 = scmp.eq.s32.totalorder %s13, 0
    %p75 = por %p73, %p74
    %p76 = scmp.ne.s32.totalorder %s68, %s70
    %p77 = scmp.eq.s32.totalorder %s18, 1
    %p78 = por %p76, %p77
    %p79 = scmp.ne.s32.totalorder %s70, %s71
    %p80 = scmp.eq.s32.totalorder %s18, 0
    %p81 = por %p79, %p80
    %p82 = scmp.ne.s32.totalorder %s70, %s71
    %p83 = scmp.eq.s32.totalorder %s19, 1
    %p84 = por %p82, %p83
    %p86 = scmp.ne.s32.totalorder %s71, %s85
    %p87 = scmp.eq.s32.totalorder %s19, 0
    %p88 = por %p86, %p87
    %s90 = sadd.s32 %s89, 1
    %p93 = scmp.eq.s32.totalorder %s13, 1
    %p94 = scmp.ne.s32.totalorder %s89, %s91
    %p95 = scmp.eq.s32.totalorder %s13, 0
    %p96 = por %p94, %p95
    %p97 = scmp.ne.s32.totalorder %s89, %s91
    %p98 = scmp.eq.s32.totalorder %s18, 1
    %p99 = por %p97, %p98
    %p100 = scmp.ne.s32.totalorder %s91, %s92
    %p101 = scmp.eq.s32.totalorder %s18, 0
    %p102 = por %p100, %p101
    %p103 = scmp.ne.s32.totalorder %s91, %s92
    %p104 = scmp.eq.s32.totalorder %s19, 1
    %p105 = por %p103, %p104
    %p107 = scmp.ne.s32.totalorder %s92, %s106
    %p108 = scmp.eq.s32.totalorder %s19, 0
    %p109 = por %p107, %p108
    %s111 = sadd.s32 %s110, 1
    %p114 = scmp.eq.s32.totalorder %s13, 1
    %p115 = scmp.ne.s32.totalorder %s110, %s112
    %p116 = scmp.eq.s32.totalorder %s13, 0
    %p117 = por %p115, %p116
    %p118 = scmp.ne.s32.totalorder %s110, %s112
    %p119 = scmp.eq.s32.totalorder %s18, 1
    %p120 = por %p118, %p119
    %p121 = scmp.ne.s32.totalorder %s112, %s113
    %p122 = scmp.eq.s32.totalorder %s18, 0
    %p123 = por %p121, %p122
    %p124 = scmp.ne.s32.totalorder %s112, %s113
    %p125 = scmp.eq.s32.totalorder %s19, 1
    %p126 = por %p124, %p125
    %p128 = scmp.ne.s32.totalorder %s113, %s127
    %p129 = scmp.eq.s32.totalorder %s19, 0
    %p130 = por %p128, %p129
    %s132 = sadd.s32 %s131, 1
    %p135 = scmp.eq.s32.totalorder %s13, 1
    %p136 = scmp.ne.s32.totalorder %s131, %s133
    %p137 = scmp.eq.s32.totalorder %s13, 0
    %p138 = por %p136, %p137
    %p139 = scmp.ne.s32.totalorder %s131, %s133
    %p140 = scmp.eq.s32.totalorder %s18, 1
    %p141 = por %p139, %p140
    %p142 = scmp.ne.s32.totalorder %s133, %s134
    %p143 = scmp.eq.s32.totalorder %s18, 0
    %p144 = por %p142, %p143
    %p145 = scmp.ne.s32.totalorder %s133, %s134
    %p146 = scmp.eq.s32.totalorder %s19, 1
    %p147 = por %p145, %p146
    %p149 = scmp.ne.s32.totalorder %s134, %s148
    %p150 = scmp.eq.s32.totalorder %s19, 0
    %p151 = por %p149, %p150
    %s153 = sadd.s32 %s152, 1
    %p156 = scmp.eq.s32.totalorder %s13, 1
    %p157 = scmp.ne.s32.totalorder %s152, %s154
    %p158 = scmp.eq.s32.totalorder %s13, 0
    %p159 = por %p157, %p158
    %p160 = scmp.ne.s32.totalorder %s152, %s154
    %p161 = scmp.eq.s32.totalorder %s18, 1
    %p162 = por %p160, %p161
    %p163 = scmp.ne.s32.totalorder %s154, %s155
    %p164 = scmp.eq.s32.totalorder %s18, 0
    %p165 = por %p163, %p164
    %p166 = scmp.ne.s32.totalorder %s154, %s155
    %p167 = scmp.eq.s32.totalorder %s19, 1
    %p168 = por %p166, %p167
    %p170 = scmp.ne.s32.totalorder %s155, %s169
    %p171 = scmp.eq.s32.totalorder %s19, 0
    %p172 = por %p170, %p171
    %s173 = ssub.s32 %s13, %s20
    %p174 = scmp.eq.s32.totalorder %s173, 0
    %s176 = sadd.s32 %s175, 1
    %s177 = scalar_select %p174, %s175, %s176
    %p180 = pneg %p174
    %p181 = scmp.eq.s32.totalorder %s13, 1
    %p182 = por %p180, %p181
    %p183 = scmp.ne.s32.totalorder %s175, %s178
    %p184 = scmp.eq.s32.totalorder %s13, 0
    %p185 = por %p183, %p184
    %p186 = scmp.ne.s32.totalorder %s175, %s178
    %p187 = scmp.eq.s32.totalorder %s18, 1
    %p188 = por %p186, %p187
    %p189 = scmp.ne.s32.totalorder %s178, %s179
    %p190 = scmp.eq.s32.totalorder %s18, 0
    %p191 = por %p189, %p190
    %p192 = scmp.ne.s32.totalorder %s178, %s179
    %p193 = scmp.eq.s32.totalorder %s19, 1
    %p194 = por %p192, %p193
    %p196 = scmp.ne.s32.totalorder %s179, %s195
    %p197 = scmp.eq.s32.totalorder %s19, 0
    %p198 = por %p196, %p197
    %p199 = scmp.le.s32.totalorder 1, %s13
    %p200 = scmp.lt.s32.totalorder %s13, 3
    %p201 = pnand %p199, %p200
    %p202 = pneg %p201
    // Predicated region
    $region9: #{down_forward.1} parent=5 // pred_check
      _
    $region10: #{down_forward.1} parent=5 // pred_check_branch
      %204 = sbr.rel (%p201) target = $region12
    $region11: #{down_forward.1} parent=5 // pred_region
      %s205 = ssub.s32 %s13, 1
      // Predicated region
      $region13: #{down_forward.1} parent=11 // pred_check
        %p206 = pneg %p60
      $region14: #{down_forward.1} parent=11 // pred_check_branch
        %208 = sbr.rel (%p206) target = $region16
      $region15: #{down_forward.1} parent=11 // pred_region
        _
      $region16: #{down_forward.1} parent=11 // pred_fallthru
        _
      // Predicated region
      $region17: #{down_forward.1} parent=11 // pred_check
        %p209 = pneg %p81
      $region18: #{down_forward.1} parent=11 // pred_check_branch
        %211 = sbr.rel (%p209) target = $region20
      $region19: #{down_forward.1} parent=11 // pred_region
        _
      $region20: #{down_forward.1} parent=11 // pred_fallthru
        _
      // Predicated region
      $region21: #{down_forward.1} parent=11 // pred_check
        %p212 = pneg %p102
      $region22: #{down_forward.1} parent=11 // pred_check_branch
        %214 = sbr.rel (%p212) target = $region24
      $region23: #{down_forward.1} parent=11 // pred_region
        _
      $region24: #{down_forward.1} parent=11 // pred_fallthru
        _
      // Predicated region
      $region25: #{down_forward.1} parent=11 // pred_check
        %p215 = pneg %p123
      $region26: #{down_forward.1} parent=11 // pred_check_branch
        %217 = sbr.rel (%p215) target = $region28
      $region27: #{down_forward.1} parent=11 // pred_region
        _
      $region28: #{down_forward.1} parent=11 // pred_fallthru
        _
      // Predicated region
      $region29: #{down_forward.1} parent=11 // pred_check
        %p218 = pneg %p144
      $region30: #{down_forward.1} parent=11 // pred_check_branch
        %220 = sbr.rel (%p218) target = $region32
      $region31: #{down_forward.1} parent=11 // pred_region
        _
      $region32: #{down_forward.1} parent=11 // pred_fallthru
        _
      // Predicated region
      $region33: #{down_forward.1} parent=11 // pred_check
        %p221 = pneg %p165
      $region34: #{down_forward.1} parent=11 // pred_check_branch
        %223 = sbr.rel (%p221) target = $region36
      $region35: #{down_forward.1} parent=11 // pred_region
        _
      $region36: #{down_forward.1} parent=11 // pred_fallthru
        _
    $region12: #{down_forward.1} parent=5 // pred_fallthru
      _
    %p224 = scmp.lt.s32.totalorder %s13, 2
    // Predicated region
    $region37: #{down_forward.1} parent=5 // pred_check
      %p225 = pneg %p224
    $region38: #{down_forward.1} parent=5 // pred_check_branch
      %227 = sbr.rel (%p225) target = $region40
    $region39: #{down_forward.1} parent=5 // pred_region
      // Predicated region
      $region41: #{down_forward.1} parent=39 // pred_check
        %p228 = pneg %p33
      $region42: #{down_forward.1} parent=39 // pred_check_branch
        %230 = sbr.rel (%p228) target = $region44
      $region43: #{down_forward.1} parent=39 // pred_region
        %p231 = scmp.lt.s32.totalorder %s13, 1
        %s232 = scalar_select %p231, %s13, 1
        %s233 = smul.addr %s232, 5
        %s234 = smul.addr %s233, 2
        %s235 = scalar_lea.vmem %s0, %s234
      $region44: #{down_forward.1} parent=39 // pred_fallthru
        _
    $region40: #{down_forward.1} parent=5 // pred_fallthru
      _
    %p236 = scmp.le.s32.totalorder 1, %s13
    %p237 = scmp.lt.s32.totalorder %s13, 3
    %p238 = pnand %p236, %p237
    %p239 = pneg %p238
    // Predicated region
    $region45: #{down_forward.1} parent=5 // pred_check
      _
    $region46: #{down_forward.1} parent=5 // pred_check_branch
      %241 = sbr.rel (%p238) target = $region48
    $region47: #{down_forward.1} parent=5 // pred_region
      %s242 = ssub.s32 %s13, 1
      %p243 = scmp.lt.s32.totalorder %s18, 1
      %s244 = scalar_select %p243, %s18, 1
      %s245 = smul.addr %s244, 5
      %s246 = smul.addr %s245, 2
      %s247 = scalar_lea.vmem %s0, %s246
      %p248 = pneg %p39
      %p249 = pneg %p36
      %p250 = pneg %p60
      %p251 = pneg %p57
      %p252 = pneg %p81
      %p253 = pneg %p78
      %p254 = pneg %p102
      %p255 = pneg %p99
      %p256 = pneg %p123
      %p257 = pneg %p120
      %p258 = pneg %p144
      %p259 = pneg %p141
      %p260 = pneg %p165
      %p261 = pneg %p162
      %p262 = pneg %p191
      %p263 = pneg %p188
      %p264 = scmp.lt.s32.totalorder %s18, 1
      %s265 = scalar_select %p264, %s18, 1
      %s266 = smul.addr %s265, 4
      %s267 = smul.addr %s266, 8
      %s268 = scalar_lea.vmem %s7, %s267
      %p269 = scmp.lt.s32.totalorder %s18, 1
      %s270 = scalar_select %p269, %s18, 1
      %s271 = smul.addr %s270, 5
      %s272 = smul.addr %s271, 2
      %s273 = scalar_lea.vmem %s0, %s272
      %p274 = scmp.lt.s32.totalorder %s18, 1
      %s275 = scalar_select %p274, %s18, 1
      %s276 = smul.addr %s275, 4
      %s277 = smul.addr %s276, 8
      %s278 = scalar_lea.vmem %s7, %s277
      %280 = vst [vmem:[#allocation2] sm:$0xf] 0
      %281 = vst [vmem:[#allocation2 + $0x14] sm:$0xf] 0
      %282 = vst [vmem:[#allocation3] sm:$0xf] 0
      %283 = vst [vmem:[#allocation3 + $0x14] sm:$0xf] 0
      %v284 = vlaneseq
      %v285 = vand.u32 %v284, 127
      %v286 = vadd.s32 %v285, 128
      %v287 = vadd.s32 %v285, 256
      %v288 = vadd.s32 %v285, 384
      %vm289 = vcmp.lt.s32.totalorder %v285, 0
      %v290 = vsub.s32 0, %v285
      %v291 = vsel %vm289, %v290, %v285
      %v292 = vmul.u32.u64.compose %v291, 3272356035
      %v293 = vextract.low.u32 %v292
      %v294 = vextract.high.u32 %v292
      %vm295 = vc.u32 %v293, 3272356035
      %v296 = vsel %vm295, 1, 0
      %v297 = vadd.s32 %v294, %v296
      %v298 = vshrl.u32 %v297, 4
      %v299 = vmul.u32 %v298, 21
      %v300 = vsub.s32 %v291, %v299
      %v301 = vsub.s32 0, %v300
      %v302 = vsel %vm289, %v301, %v300
      %vm303 = vcmp.lt.s32.totalorder %v286, 0
      %v304 = vsub.s32 0, %v286
      %v305 = vsel %vm303, %v304, %v286
      %v306 = vmul.u32.u64.compose %v305, 3272356035
      %v307 = vextract.low.u32 %v306
      %v308 = vextract.high.u32 %v306
      %vm309 = vc.u32 %v307, 3272356035
      %v310 = vsel %vm309, 1, 0
      %v311 = vadd.s32 %v308, %v310
      %v312 = vshrl.u32 %v311, 4
      %v313 = vmul.u32 %v312, 21
      %v314 = vsub.s32 %v305, %v313
      %v315 = vsub.s32 0, %v314
      %v316 = vsel %vm303, %v315, %v314
      %vm317 = vcmp.lt.s32.totalorder %v287, 0
      %v318 = vsub.s32 0, %v287
      %v319 = vsel %vm317, %v318, %v287
      %v320 = vmul.u32.u64.compose %v319, 3272356035
      %v321 = vextract.low.u32 %v320
      %v322 = vextract.high.u32 %v320
      %vm323 = vc.u32 %v321, 3272356035
      %v324 = vsel %vm323, 1, 0
      %v325 = vadd.s32 %v322, %v324
      %v326 = vshrl.u32 %v325, 4
      %v327 = vmul.u32 %v326, 21
      %v328 = vsub.s32 %v319, %v327
      %v329 = vsub.s32 0, %v328
      %v330 = vsel %vm317, %v329, %v328
      %vm331 = vcmp.lt.s32.totalorder %v288, 0
      %v332 = vsub.s32 0, %v288
      %v333 = vsel %vm331, %v332, %v288
      %v334 = vmul.u32.u64.compose %v333, 3272356035
      %v335 = vextract.low.u32 %v334
      %v336 = vextract.high.u32 %v334
      %vm337 = vc.u32 %v335, 3272356035
      %v338 = vsel %vm337, 1, 0
      %v339 = vadd.s32 %v336, %v338
      %v340 = vshrl.u32 %v339, 4
      %v341 = vmul.u32 %v340, 21
      %v342 = vsub.s32 %v333, %v341
      %v343 = vsub.s32 0, %v342
      %v344 = vsel %vm331, %v343, %v342
      %vm345 = vcmp.ne.s32.totalorder %v302, 0
      %vm346 = vcmp.ne.s32.totalorder %v316, 0
      %vm347 = vcmp.ne.s32.totalorder %v330, 0
      %vm348 = vcmp.ne.s32.totalorder %v344, 0
      %vm349 = vcmp.lt.s32.totalorder %v302, 0
      %vm350 = vcmp.lt.s32.totalorder %v316, 0
      %vm351 = vcmp.lt.s32.totalorder %v330, 0
      %vm352 = vcmp.lt.s32.totalorder %v344, 0
      %vm353 = vmand %vm349, %vm345
      %vm354 = vmand %vm350, %vm346
      %vm355 = vmand %vm351, %vm347
      %vm356 = vmand %vm352, %vm348
      %v357 = vadd.s32 %v302, 21
      %v358 = vadd.s32 %v316, 21
      %v359 = vadd.s32 %v330, 21
      %v360 = vadd.s32 %v344, 21
      %v361 = vsel %vm353, %v357, %v302
      %v362 = vsel %vm354, %v358, %v316
      %v363 = vsel %vm355, %v359, %v330
      %v364 = vsel %vm356, %v360, %v344
      %vm365 = vcmp.lt.s32.totalorder %v361, 19
      %vm366 = vcmp.lt.s32.totalorder %v362, 19
      %vm367 = vcmp.lt.s32.totalorder %v363, 19
      %vm368 = vcmp.lt.s32.totalorder %v364, 19
      %vm369 = vcmp.lt.s32.totalorder %v285, 399
      %vm370 = vcmp.lt.s32.totalorder %v286, 399
      %vm371 = vcmp.lt.s32.totalorder %v287, 399
      %vm372 = vcmp.lt.s32.totalorder %v288, 399
      %vm373 = vmand %vm365, %vm369
      %vm374 = vmand %vm366, %vm370
      %vm375 = vmand %vm367, %vm371
      %vm376 = vmand %vm368, %vm372
      %v377 = vld [vmem:[%s1] sm:$0xf]
      %v378 = vld [vmem:[%s273] sm:$0xff]
      %s379 = scalar_lea.vmem %s1, 4
      %v380 = vld [vmem:[%s379] sm:$0xf]
      %v381 = vld [vmem:[%s273] sm:$0xff]
      %v382 = vld [vmem:[%s273 + $0x8] sm:$0x3]
      %v385 = vcombine.high %v381, %v381
      %v387 = vunpack.c.l.s4 1983009808
      %v388 = vunpack.c.0.s8 %v387
      %v389 = vlaneseq
      %v390 = vshrl.u32 %v389, 7
      %v391 = vsub.s32 %v388, %v390
      %v392 = vrot.slane %v381, %v391
      %v394 = vunpack.c.l.s4 1983009808
      %v395 = vunpack.c.0.s8 %v394
      %v396 = vlaneseq
      %v397 = vshrl.u32 %v396, 7
      %v398 = vsub.s32 %v395, %v397
      %v399 = vrot.slane %v385, %v398
      %v400 = vcombine.high %v392, %v392
      %v401 = vcombine.high %v399, %v399
      %v403 = vunpack.c.l.s4 1983009808
      %v404 = vunpack.c.0.s8 %v403
      %v405 = vlaneseq
      %v406 = vshrl.u32 %v405, 7
      %v407 = vsub.s32 %v404, %v406
      %v408 = vrot.slane %v382, %v407
      %409 = vrot.lane.b32.xlu0 %v392, 127
      %v410 = vpop.permute.xlu0 %409
      %411 = vrot.lane.b32.xlu0 %v400, 127
      %v412 = vpop.permute.xlu0 %411
      %413 = vrot.lane.b32.xlu0 %v399, 127
      %v414 = vpop.permute.xlu0 %413
      %415 = vrot.lane.b32.xlu0 %v401, 127
      %v416 = vpop.permute.xlu0 %415
      %417 = vrot.lane.b32.xlu0 %v408, 127
      %v418 = vpop.permute.xlu0 %417
      %vm419 = vcmask 1039360
      %v420 = vsel %vm419, %v410, %v412
      %v421 = vsel %vm419, %v412, %v414
      %v422 = vsel %vm419, %v414, %v416
      %v423 = vsel %vm419, %v416, %v418
      %vm424 = vcmask 31744
      %v426 = vsel %vm424, %v380, 0
      %vm428 = vcmask 1041408
      %v430 = vsel %vm428, %v420, 0
      %v433 = vsel %vm428, %v421, 0
      %v436 = vsel %vm428, %v422, 0
      %v439 = vsel %vm428, %v423, 0
      %441 = vmatprep.subr.bf16.mxu0 %v433
      %442 = vmatpush1.bf16.msra.mxu0 %v430
      %443 = vmatprep.subr.bf16.mxu0 0
      %444 = vmatpush1.bf16.msra.mxu0 0
      %445 = vmatprep.subr.bf16.mxu0 0
      %446 = vmatpush1.bf16.msra.mxu0 0
      %447 = vmatprep.subr.bf16.mxu0 0
      %448 = vmatpush1.bf16.msra.mxu0 0
      %449 = vmatprep.subr.bf16.mxu0 0
      %450 = vmatpush1.bf16.msra.mxu0 0
      %451 = vmatprep.subr.bf16.mxu0 0
      %452 = vmatpush1.bf16.msra.mxu0 0
      %453 = vmatprep.subr.bf16.mxu0 0
      %454 = vmatpush1.bf16.msra.mxu0 0
      %455 = vmatprep.subr.bf16.mxu0 0
      %456 = vmatpush1.bf16.msra.mxu0 0
      %457 = vmatprep.subr.bf16.mxu0 0
      %458 = vmatpush1.bf16.msra.mxu0 0
      %459 = vmatprep.subr.bf16.mxu0 0
      %460 = vmatpush1.bf16.msra.mxu0 0
      %461 = vmatprep.subr.bf16.mxu0 0
      %462 = vmatpush1.bf16.msra.mxu0 0
      %463 = vmatprep.subr.bf16.mxu0 0
      %464 = vmatpush1.bf16.msra.mxu0 0
      %465 = vmatprep.subr.bf16.mxu0 0
      %466 = vmatpush1.bf16.msra.mxu0 0
      %467 = vmatprep.subr.bf16.mxu0 0
      %468 = vmatpush1.bf16.msra.mxu0 0
      %469 = vmatprep.subr.bf16.mxu0 0
      %470 = vmatpush1.bf16.msra.mxu0 0
      %471 = vmatprep.subr.bf16.mxu0 0
      %472 = vmatpush1.bf16.msra.mxu0 0
      %473 = vmatprep.mubr.bf16.mxu0 0
      %474 = vmatmul.mubr.bf16.gmra.mrb[0].mxu0 %v426
      %v475 = vpop.f32.mrb[0].mxu0
      %v476 = vadd.f32 0.0, %v475
      %v477 = vpop.f32.mrb[0].mxu0
      %v478 = vadd.f32 0.0, %v477
      %v479 = vpop.f32.mrb[0].mxu0
      %v480 = vpop.f32.mrb[0].mxu0
      %481 = vdwg.mxu0
      %482 = vmatprep.subr.bf16.mxu0 %v439
      %483 = vmatpush1.bf16.msra.mxu0 %v436
      %484 = vmatprep.subr.bf16.mxu0 0
      %485 = vmatpush1.bf16.msra.mxu0 0
      %486 = vmatprep.subr.bf16.mxu0 0
      %487 = vmatpush1.bf16.msra.mxu0 0
      %488 = vmatprep.subr.bf16.mxu0 0
      %489 = vmatpush1.bf16.msra.mxu0 0
      %490 = vmatprep.subr.bf16.mxu0 0
      %491 = vmatpush1.bf16.msra.mxu0 0
      %492 = vmatprep.subr.bf16.mxu0 0
      %493 = vmatpush1.bf16.msra.mxu0 0
      %494 = vmatprep.subr.bf16.mxu0 0
      %495 = vmatpush1.bf16.msra.mxu0 0
      %496 = vmatprep.subr.bf16.mxu0 0
      %497 = vmatpush1.bf16.msra.mxu0 0
      %498 = vmatprep.subr.bf16.mxu0 0
      %499 = vmatpush1.bf16.msra.mxu0 0
      %500 = vmatprep.subr.bf16.mxu0 0
      %501 = vmatpush1.bf16.msra.mxu0 0
      %502 = vmatprep.subr.bf16.mxu0 0
      %503 = vmatpush1.bf16.msra.mxu0 0
      %504 = vmatprep.subr.bf16.mxu0 0
      %505 = vmatpush1.bf16.msra.mxu0 0
      %506 = vmatprep.subr.bf16.mxu0 0
      %507 = vmatpush1.bf16.msra.mxu0 0
      %508 = vmatprep.subr.bf16.mxu0 0
      %509 = vmatpush1.bf16.msra.mxu0 0
      %510 = vmatprep.subr.bf16.mxu0 0
      %511 = vmatpush1.bf16.msra.mxu0 0
      %512 = vmatprep.subr.bf16.mxu0 0
      %513 = vmatpush1.bf16.msra.mxu0 0
      %514 = vmatprep.mubr.bf16.mxu0 0
      %515 = vmatmul.mubr.bf16.gmra.mrb[0].mxu0 %v426
      %v516 = vpop.f32.mrb[0].mxu0
      %v517 = vadd.f32 0.0, %v516
      %v518 = vpop.f32.mrb[0].mxu0
      %v519 = vadd.f32 0.0, %v518
      %v520 = vpop.f32.mrb[0].mxu0
      %v521 = vpop.f32.mrb[0].mxu0
      %522 = vdwg.mxu0
      %v524 = vcombine.high %v378, %v378
      %v526 = vunpack.c.l.s4 1983009808
      %v527 = vunpack.c.0.s8 %v526
      %v528 = vlaneseq
      %v529 = vshrl.u32 %v528, 7
      %v530 = vsub.s32 %v527, %v529
      %v531 = vrot.slane %v378, %v530
      %v533 = vunpack.c.l.s4 1983009808
      %v534 = vunpack.c.0.s8 %v533
      %v535 = vlaneseq
      %v536 = vshrl.u32 %v535, 7
      %v537 = vsub.s32 %v534, %v536
      %v538 = vrot.slane %v524, %v537
      %v539 = vcombine.high %v531, %v531
      %v540 = vcombine.high %v538, %v538
      %v542 = vsel %vm424, %v377, 0
      %v545 = vsel %vm428, %v531, 0
      %v548 = vsel %vm428, %v539, 0
      %v551 = vsel %vm428, %v538, 0
      %v554 = vsel %vm428, %v540, 0
      %556 = vmatprep.subr.bf16.mxu0 %v548
      %557 = vmatpush1.bf16.msra.mxu0 %v545
      %558 = vmatprep.subr.bf16.mxu0 0
      %559 = vmatpush1.bf16.msra.mxu0 0
      %560 = vmatprep.subr.bf16.mxu0 0
      %561 = vmatpush1.bf16.msra.mxu0 0
      %562 = vmatprep.subr.bf16.mxu0 0
      %563 = vmatpush1.bf16.msra.mxu0 0
      %564 = vmatprep.subr.bf16.mxu0 0
      %565 = vmatpush1.bf16.msra.mxu0 0
      %566 = vmatprep.subr.bf16.mxu0 0
      %567 = vmatpush1.bf16.msra.mxu0 0
      %568 = vmatprep.subr.bf16.mxu0 0
      %569 = vmatpush1.bf16.msra.mxu0 0
      %570 = vmatprep.subr.bf16.mxu0 0
      %571 = vmatpush1.bf16.msra.mxu0 0
      %572 = vmatprep.subr.bf16.mxu0 0
      %573 = vmatpush1.bf16.msra.mxu0 0
      %574 = vmatprep.subr.bf16.mxu0 0
      %575 = vmatpush1.bf16.msra.mxu0 0
      %576 = vmatprep.subr.bf16.mxu0 0
      %577 = vmatpush1.bf16.msra.mxu0 0
      %578 = vmatprep.subr.bf16.mxu0 0
      %579 = vmatpush1.bf16.msra.mxu0 0
      %580 = vmatprep.subr.bf16.mxu0 0
      %581 = vmatpush1.bf16.msra.mxu0 0
      %582 = vmatprep.subr.bf16.mxu0 0
      %583 = vmatpush1.bf16.msra.mxu0 0
      %584 = vmatprep.subr.bf16.mxu0 0
      %585 = vmatpush1.bf16.msra.mxu0 0
      %586 = vmatprep.subr.bf16.mxu0 0
      %587 = vmatpush1.bf16.msra.mxu0 0
      %588 = vmatprep.mubr.bf16.mxu0 0
      %589 = vmatmul.mubr.bf16.gmra.mrb[0].mxu0 %v542
      %v590 = vpop.f32.mrb[0].mxu0
      %v591 = vadd.f32 %v476, %v590
      %v592 = vpop.f32.mrb[0].mxu0
      %v593 = vadd.f32 %v478, %v592
      %v594 = vpop.f32.mrb[0].mxu0
      %v595 = vpop.f32.mrb[0].mxu0
      %596 = vdwg.mxu0
      %597 = vmatprep.subr.bf16.mxu0 %v554
      %598 = vmatpush1.bf16.msra.mxu0 %v551
      %599 = vmatprep.subr.bf16.mxu0 0
      %600 = vmatpush1.bf16.msra.mxu0 0
      %601 = vmatprep.subr.bf16.mxu0 0
      %602 = vmatpush1.bf16.msra.mxu0 0
      %603 = vmatprep.subr.bf16.mxu0 0
      %604 = vmatpush1.bf16.msra.mxu0 0
      %605 = vmatprep.subr.bf16.mxu0 0
      %606 = vmatpush1.bf16.msra.mxu0 0
      %607 = vmatprep.subr.bf16.mxu0 0
      %608 = vmatpush1.bf16.msra.mxu0 0
      %609 = vmatprep.subr.bf16.mxu0 0
      %610 = vmatpush1.bf16.msra.mxu0 0
      %611 = vmatprep.subr.bf16.mxu0 0
      %612 = vmatpush1.bf16.msra.mxu0 0
      %613 = vmatprep.subr.bf16.mxu0 0
      %614 = vmatpush1.bf16.msra.mxu0 0
      %615 = vmatprep.subr.bf16.mxu0 0
      %616 = vmatpush1.bf16.msra.mxu0 0
      %617 = vmatprep.subr.bf16.mxu0 0
      %618 = vmatpush1.bf16.msra.mxu0 0
      %619 = vmatprep.subr.bf16.mxu0 0
      %620 = vmatpush1.bf16.msra.mxu0 0
      %621 = vmatprep.subr.bf16.mxu0 0
      %622 = vmatpush1.bf16.msra.mxu0 0
      %623 = vmatprep.subr.bf16.mxu0 0
      %624 = vmatpush1.bf16.msra.mxu0 0
      %625 = vmatprep.subr.bf16.mxu0 0
      %626 = vmatpush1.bf16.msra.mxu0 0
      %627 = vmatprep.subr.bf16.mxu0 0
      %628 = vmatpush1.bf16.msra.mxu0 0
      %629 = vmatprep.mubr.bf16.mxu0 0
      %630 = vmatmul.mubr.bf16.gmra.mrb[0].mxu0 %v542
      %v631 = vpop.f32.mrb[0].mxu0
      %v632 = vadd.f32 %v517, %v631
      %v633 = vpop.f32.mrb[0].mxu0
      %v634 = vadd.f32 %v519, %v633
      %v635 = vpop.f32.mrb[0].mxu0
      %v636 = vpop.f32.mrb[0].mxu0
      %637 = vdwg.mxu0
      %s638 = scalar_lea.vmem %s1, 8
      %v639 = vld [vmem:[%s638] sm:$0xf]
      %v640 = vld [vmem:[%s273] sm:$0xff]
      %v641 = vld [vmem:[%s273 + $0x8] sm:$0x3]
      %v644 = vcombine.high %v640, %v640
      %v646 = vunpack.c.l.s4 1983009808
      %v647 = vunpack.c.0.s8 %v646
      %v648 = vlaneseq
      %v649 = vshrl.u32 %v648, 7
      %v650 = vsub.s32 %v647, %v649
      %v651 = vrot.slane %v640, %v650
      %v653 = vunpack.c.l.s4 1983009808
      %v654 = vunpack.c.0.s8 %v653
      %v655 = vlaneseq
      %v656 = vshrl.u32 %v655, 7
      %v657 = vsub.s32 %v654, %v656
      %v658 = vrot.slane %v644, %v657
      %v659 = vcombine.high %v651, %v651
      %v660 = vcombine.high %v658, %v658
      %v662 = vunpack.c.l.s4 1983009808
      %v663 = vunpack.c.0.s8 %v662
      %v664 = vlaneseq
      %v665 = vshrl.u32 %v664, 7
      %v666 = vsub.s32 %v663, %v665
      %v667 = vrot.slane %v641, %v666
      %668 = vrot.lane.b32.xlu0 %v651, 107
      %v669 = vpop.permute.xlu0 %668
      %670 = vrot.lane.b32.xlu0 %v659, 107
      %v671 = vpop.permute.xlu0 %670
      %672 = vrot.lane.b32.xlu0 %v658, 107
      %v673 = vpop.permute.xlu0 %672
      %674 = vrot.lane.b32.xlu0 %v660, 107
      %v675 = vpop.permute.xlu0 %674
      %676 = vrot.lane.b32.xlu0 %v667, 107
      %v677 = vpop.permute.xlu0 %676
      %vm678 = vcmask 875520
      %v679 = vsel %vm678, %v669, %v671
      %v680 = vsel %vm678, %v671, %v673
      %v681 = vsel %vm678, %v673, %v675
      %v682 = vsel %vm678, %v675, %v677
      %v684 = vsel %vm424, %v639, 0
      %v687 = vsel %vm428, %v679, 0
      %v690 = vsel %vm428, %v680, 0
      %v693 = vsel %vm428, %v681, 0
      %v696 = vsel %vm428, %v682, 0
      %698 = vmatprep.subr.bf16.mxu0 %v690
      %699 = vmatpush1.bf16.msra.mxu0 %v687
      %700 = vmatprep.subr.bf16.mxu0 0
      %701 = vmatpush1.bf16.msra.mxu0 0
      %702 = vmatprep.subr.bf16.mxu0 0
      %703 = vmatpush1.bf16.msra.mxu0 0
      %704 = vmatprep.subr.bf16.mxu0 0
      %705 = vmatpush1.bf16.msra.mxu0 0
      %706 = vmatprep.subr.bf16.mxu0 0
      %707 = vmatpush1.bf16.msra.mxu0 0
      %708 = vmatprep.subr.bf16.mxu0 0
      %709 = vmatpush1.bf16.msra.mxu0 0
      %710 = vmatprep.subr.bf16.mxu0 0
      %711 = vmatpush1.bf16.msra.mxu0 0
      %712 = vmatprep.subr.bf16.mxu0 0
      %713 = vmatpush1.bf16.msra.mxu0 0
      %714 = vmatprep.subr.bf16.mxu0 0
      %715 = vmatpush1.bf16.msra.mxu0 0
      %716 = vmatprep.subr.bf16.mxu0 0
      %717 = vmatpush1.bf16.msra.mxu0 0
      %718 = vmatprep.subr.bf16.mxu0 0
      %719 = vmatpush1.bf16.msra.mxu0 0
      %720 = vmatprep.subr.bf16.mxu0 0
      %721 = vmatpush1.bf16.msra.mxu0 0
      %722 = vmatprep.subr.bf16.mxu0 0
      %723 = vmatpush1.bf16.msra.mxu0 0
      %724 = vmatprep.subr.bf16.mxu0 0
      %725 = vmatpush1.bf16.msra.mxu0 0
      %726 = vmatprep.subr.bf16.mxu0 0
      %727 = vmatpush1.bf16.msra.mxu0 0
      %728 = vmatprep.subr.bf16.mxu0 0
      %729 = vmatpush1.bf16.msra.mxu0 0
      %730 = vmatprep.mubr.bf16.mxu0 0
      %731 = vmatmul.mubr.bf16.gmra.mrb[0].mxu0 %v684
      %v732 = vpop.f32.mrb[0].mxu0
      %v733 = vadd.f32 0.0, %v732
      %v734 = vpop.f32.mrb[0].mxu0
      %v735 = vadd.f32 0.0, %v734
      %v736 = vpop.f32.mrb[0].mxu0
      %v737 = vpop.f32.mrb[0].mxu0
      %738 = vdwg.mxu0
      %739 = vmatprep.subr.bf16.mxu0 %v696
      %740 = vmatpush1.bf16.msra.mxu0 %v693
      %741 = vmatprep.subr.bf16.mxu0 0
      %742 = vmatpush1.bf16.msra.mxu0 0
      %743 = vmatprep.subr.bf16.mxu0 0
      %744 = vmatpush1.bf16.msra.mxu0 0
      %745 = vmatprep.subr.bf16.mxu0 0
      %746 = vmatpush1.bf16.msra.mxu0 0
      %747 = vmatprep.subr.bf16.mxu0 0
      %748 = vmatpush1.bf16.msra.mxu0 0
      %749 = vmatprep.subr.bf16.mxu0 0
      %750 = vmatpush1.bf16.msra.mxu0 0
      %751 = vmatprep.subr.bf16.mxu0 0
      %752 = vmatpush1.bf16.msra.mxu0 0
      %753 = vmatprep.subr.bf16.mxu0 0
      %754 = vmatpush1.bf16.msra.mxu0 0
      %755 = vmatprep.subr.bf16.mxu0 0
      %756 = vmatpush1.bf16.msra.mxu0 0
      %757 = vmatprep.subr.bf16.mxu0 0
      %758 = vmatpush1.bf16.msra.mxu0 0
      %759 = vmatprep.subr.bf16.mxu0 0
      %760 = vmatpush1.bf16.msra.mxu0 0
      %761 = vmatprep.subr.bf16.mxu0 0
      %762 = vmatpush1.bf16.msra.mxu0 0
      %763 = vmatprep.subr.bf16.mxu0 0
      %764 = vmatpush1.bf16.msra.mxu0 0
      %765 = vmatprep.subr.bf16.mxu0 0
      %766 = vmatpush1.bf16.msra.mxu0 0
      %767 = vmatprep.subr.bf16.mxu0 0
      %768 = vmatpush1.bf16.msra.mxu0 0
      %769 = vmatprep.subr.bf16.mxu0 0
      %770 = vmatpush1.bf16.msra.mxu0 0
      %771 = vmatprep.mubr.bf16.mxu0 0
      %772 = vmatmul.mubr.bf16.gmra.mrb[0].mxu0 %v684
      %v773 = vpop.f32.mrb[0].mxu0
      %v774 = vadd.f32 0.0, %v773
      %v775 = vpop.f32.mrb[0].mxu0
      %v776 = vadd.f32 0.0, %v775
      %v777 = vpop.f32.mrb[0].mxu0
      %v778 = vpop.f32.mrb[0].mxu0
      %779 = vdwg.mxu0
      %v780 = vadd.f32 %v591, %v733
      %v781 = vadd.f32 %v593, %v735
      %v782 = vadd.f32 %v632, %v774
      %v783 = vadd.f32 %v634, %v776
      %s784 = scalar_lea.vmem %s1, 12
      %v785 = vld [vmem:[%s784] sm:$0xf]
      %v786 = vld [vmem:[%s273] sm:$0xff]
      %v787 = vld [vmem:[%s273 + $0x8] sm:$0x3]
      %v790 = vcombine.high %v786, %v786
      %v792 = vunpack.c.l.s4 1983009808
      %v793 = vunpack.c.0.s8 %v792
      %v794 = vlaneseq
      %v795 = vshrl.u32 %v794, 7
      %v796 = vsub.s32 %v793, %v795
      %v797 = vrot.slane %v786, %v796
      %v799 = vunpack.c.l.s4 1983009808
      %v800 = vunpack.c.0.s8 %v799
      %v801 = vlaneseq
      %v802 = vshrl.u32 %v801, 7
      %v803 = vsub.s32 %v800, %v802
      %v804 = vrot.slane %v790, %v803
      %v805 = vcombine.high %v797, %v797
      %v806 = vcombine.high %v804, %v804
      %v808 = vunpack.c.l.s4 1983009808
      %v809 = vunpack.c.0.s8 %v808
      %v810 = vlaneseq
      %v811 = vshrl.u32 %v810, 7
      %v812 = vsub.s32 %v809, %v811
      %v813 = vrot.slane %v787, %v812
      %814 = vrot.lane.b32.xlu0 %v797, 106
      %v815 = vpop.permute.xlu0 %814
      %816 = vrot.lane.b32.xlu0 %v805, 106
      %v817 = vpop.permute.xlu0 %816
      %818 = vrot.lane.b32.xlu0 %v804, 106
      %v819 = vpop.permute.xlu0 %818
      %820 = vrot.lane.b32.xlu0 %v806, 106
      %v821 = vpop.permute.xlu0 %820
      %822 = vrot.lane.b32.xlu0 %v813, 106
      %v823 = vpop.permute.xlu0 %822
      %vm824 = vcmask 867328
      %v825 = vsel %vm824, %v815, %v817
      %v826 = vsel %vm824, %v817, %v819
      %v827 = vsel %vm824, %v819, %v821
      %v828 = vsel %vm824, %v821, %v823
      %v830 = vsel %vm424, %v785, 0
      %v833 = vsel %vm428, %v825, 0
      %v836 = vsel %vm428, %v826, 0
      %v839 = vsel %vm428, %v827, 0
      %v842 = vsel %vm428, %v828, 0
      %844 = vmatprep.subr.bf16.mxu0 %v836
      %845 = vmatpush1.bf16.msra.mxu0 %v833
      %846 = vmatprep.subr.bf16.mxu0 0
      %847 = vmatpush1.bf16.msra.mxu0 0
      %848 = vmatprep.subr.bf16.mxu0 0
      %849 = vmatpush1.bf16.msra.mxu0 0
      %850 = vmatprep.subr.bf16.mxu0 0
      %851 = vmatpush1.bf16.msra.mxu0 0
      %852 = vmatprep.subr.bf16.mxu0 0
      %853 = vmatpush1.bf16.msra.mxu0 0
      %854 = vmatprep.subr.bf16.mxu0 0
      %855 = vmatpush1.bf16.msra.mxu0 0
      %856 = vmatprep.subr.bf16.mxu0 0
      %857 = vmatpush1.bf16.msra.mxu0 0
      %858 = vmatprep.subr.bf16.mxu0 0
      %859 = vmatpush1.bf16.msra.mxu0 0
      %860 = vmatprep.subr.bf16.mxu0 0
      %861 = vmatpush1.bf16.msra.mxu0 0
      %862 = vmatprep.subr.bf16.mxu0 0
      %863 = vmatpush1.bf16.msra.mxu0 0
      %864 = vmatprep.subr.bf16.mxu0 0
      %865 = vmatpush1.bf16.msra.mxu0 0
      %866 = vmatprep.subr.bf16.mxu0 0
      %867 = vmatpush1.bf16.msra.mxu0 0
      %868 = vmatprep.subr.bf16.mxu0 0
      %869 = vmatpush1.bf16.msra.mxu0 0
      %870 = vmatprep.subr.bf16.mxu0 0
      %871 = vmatpush1.bf16.msra.mxu0 0
      %872 = vmatprep.subr.bf16.mxu0 0
      %873 = vmatpush1.bf16.msra.mxu0 0
      %874 = vmatprep.subr.bf16.mxu0 0
      %875 = vmatpush1.bf16.msra.mxu0 0
      %876 = vmatprep.mubr.bf16.mxu0 0
      %877 = vmatmul.mubr.bf16.gmra.mrb[0].mxu0 %v830
      %v878 = vpop.f32.mrb[0].mxu0
      %v879 = vadd.f32 0.0, %v878
      %v880 = vpop.f32.mrb[0].mxu0
      %v881 = vadd.f32 0.0, %v880
      %v882 = vpop.f32.mrb[0].mxu0
      %v883 = vpop.f32.mrb[0].mxu0
      %884 = vdwg.mxu0
      %885 = vmatprep.subr.bf16.mxu0 %v842
      %886 = vmatpush1.bf16.msra.mxu0 %v839
      %887 = vmatprep.subr.bf16.mxu0 0
      %888 = vmatpush1.bf16.msra.mxu0 0
      %889 = vmatprep.subr.bf16.mxu0 0
      %890 = vmatpush1.bf16.msra.mxu0 0
      %891 = vmatprep.subr.bf16.mxu0 0
      %892 = vmatpush1.bf16.msra.mxu0 0
      %893 = vmatprep.subr.bf16.mxu0 0
      %894 = vmatpush1.bf16.msra.mxu0 0
      %895 = vmatprep.subr.bf16.mxu0 0
      %896 = vmatpush1.bf16.msra.mxu0 0
      %897 = vmatprep.subr.bf16.mxu0 0
      %898 = vmatpush1.bf16.msra.mxu0 0
      %899 = vmatprep.subr.bf16.mxu0 0
      %900 = vmatpush1.bf16.msra.mxu0 0
      %901 = vmatprep.subr.bf16.mxu0 0
      %902 = vmatpush1.bf16.msra.mxu0 0
      %903 = vmatprep.subr.bf16.mxu0 0
      %904 = vmatpush1.bf16.msra.mxu0 0
      %905 = vmatprep.subr.bf16.mxu0 0
      %906 = vmatpush1.bf16.msra.mxu0 0
      %907 = vmatprep.subr.bf16.mxu0 0
      %908 = vmatpush1.bf16.msra.mxu0 0
      %909 = vmatprep.subr.bf16.mxu0 0
      %910 = vmatpush1.bf16.msra.mxu0 0
      %911 = vmatprep.subr.bf16.mxu0 0
      %912 = vmatpush1.bf16.msra.mxu0 0
      %913 = vmatprep.subr.bf16.mxu0 0
      %914 = vmatpush1.bf16.msra.mxu0 0
      %915 = vmatprep.subr.bf16.mxu0 0
      %916 = vmatpush1.bf16.msra.mxu0 0
      %917 = vmatprep.mubr.bf16.mxu0 0
      %918 = vmatmul.mubr.bf16.gmra.mrb[0].mxu0 %v830
      %v919 = vpop.f32.mrb[0].mxu0
      %v920 = vadd.f32 0.0, %v919
      %v921 = vpop.f32.mrb[0].mxu0
      %v922 = vadd.f32 0.0, %v921
      %v923 = vpop.f32.mrb[0].mxu0
      %v924 = vpop.f32.mrb[0].mxu0
      %925 = vdwg.mxu0
      %v926 = vadd.f32 %v780, %v879
      %v927 = vadd.f32 %v781, %v881
      %v928 = vadd.f32 %v782, %v920
      %v929 = vadd.f32 %v783, %v922
      %v930 = vld [vmem:[%s2] sm:$0xff]
      %932 = vset.pattern.permute.xlu0 0
      %933 = vperm.xlu0 %932, %v930
      %v934 = vpop.permute.xlu0 %933
      %v936 = vadd.f32 %v926, %v934
      %v937 = vadd.f32 %v927, %v934
      %v938 = vadd.f32 %v928, %v934
      %v939 = vadd.f32 %v929, %v934
      %v940 = vmax.f32 %v936, 0.0
      %v941 = vmax.f32 %v937, 0.0
      %v942 = vmax.f32 %v938, 0.0
      %v943 = vmax.f32 %v939, 0.0
      %v944 = vsel %vm373, 1, 0
      %v945 = vsel %vm374, 1, 0
      %v946 = vsel %vm375, 1, 0
      %v947 = vsel %vm376, 1, 0
      %vm948 = vcmp.eq.s32.totalorder %v944, 1
      %vm949 = vcmp.eq.s32.totalorder %v945, 1
      %vm950 = vcmp.eq.s32.totalorder %v946, 1
      %vm951 = vcmp.eq.s32.totalorder %v947, 1
      %v952 = vsel %vm948, %v940, 0.0
      %v953 = vsel %vm949, %v941, 0.0
      %v954 = vsel %vm950, %v942, 0.0
      %v955 = vsel %vm951, %v943, 0.0
      %v956 = vpack.c.bf16 %v952, %v952
      %v957 = vpack.c.bf16 %v953, %v953
      %v958 = vpack.c.bf16 %v954, %v954
      %v959 = vpack.c.bf16 %v955, %v955
      %v964 = vunpack.c.l.b16 %v956
      %v965 = vunpack.c.l.b16 %v957
      %v966 = vunpack.c.l.b16 %v958
      %v967 = vunpack.c.l.b16 %v959
      %v968 = vpack.c.b16 %v965, %v964
      %v969 = vpack.c.b16 %v967, %v966
      %972 = vst [vmem:[#allocation2 + $0x4] sm:$0xff] %v968
      %973 = vst [vmem:[#allocation2 + $0xc] sm:$0xff] %v969
      %v974 = vld [vmem:[%s3] sm:$0xf]
      %v975 = vld [vmem:[#allocation2] sm:$0xff]
      %v976 = vld [vmem:[#allocation2 + $0x8] sm:$0xff]
      %v977 = vld [vmem:[#allocation2 + $0x10] sm:$0xf]
      %s978 = scalar_lea.vmem %s3, 4
      %v979 = vld [vmem:[%s978] sm:$0xf]
      %v983 = vunpack.c.l.b16 %v975
      %v984 = vunpack.c.h.b16 %v975
      %v985 = vunpack.c.l.b16 %v976
      %v986 = vunpack.c.h.b16 %v976
      %v987 = vunpack.c.l.b16 %v977
      %v988 = vpack.c.b16 %v983, %v983
      %v989 = vpack.c.b16 %v984, %v984
      %v990 = vpack.c.b16 %v985, %v985
      %v991 = vpack.c.b16 %v986, %v986
      %v992 = vpack.c.b16 %v987, %v987
      %993 = vrot.lane.b32.xlu0 %v988, 21
      %v994 = vpop.permute.xlu0 %993
      %995 = vrot.lane.b32.xlu0 %v989, 21
      %v996 = vpop.permute.xlu0 %995
      %997 = vrot.lane.b32.xlu0 %v990, 21
      %v998 = vpop.permute.xlu0 %997
      %999 = vrot.lane.b32.xlu0 %v991, 21
      %v1000 = vpop.permute.xlu0 %999
      %1001 = vrot.lane.b32.xlu0 %v992, 21
      %v1002 = vpop.permute.xlu0 %1001
      %vm1003 = vcmask 171008
      %v1004 = vsel %vm1003, %v994, %v996
      %v1005 = vsel %vm1003, %v996, %v998
      %v1006 = vsel %vm1003, %v998, %v1000
      %v1007 = vsel %vm1003, %v1000, %v1002
      %vm1008 = vcmask 64512
      %v1010 = vsel %vm1008, %v979, 0
      %vm1012 = vcmask 1043456
      %v1014 = vsel %vm1012, %v1004, 0
      %v1017 = vsel %vm1012, %v1005, 0
      %v1020 = vsel %vm1012, %v1006, 0
      %v1023 = vsel %vm1012, %v1007, 0
      %1025 = vmatprep.subr.bf16.mxu0 %v1017
      %1026 = vmatpush1.bf16.msra.mxu0 %v1014
      %1027 = vmatprep.subr.bf16.mxu0 0
      %1028 = vmatpush1.bf16.msra.mxu0 0
      %1029 = vmatprep.subr.bf16.mxu0 0
      %1030 = vmatpush1.bf16.msra.mxu0 0
      %1031 = vmatprep.subr.bf16.mxu0 0
      %1032 = vmatpush1.bf16.msra.mxu0 0
      %1033 = vmatprep.subr.bf16.mxu0 0
      %1034 = vmatpush1.bf16.msra.mxu0 0
      %1035 = vmatprep.subr.bf16.mxu0 0
      %1036 = vmatpush1.bf16.msra.mxu0 0
      %1037 = vmatprep.subr.bf16.mxu0 0
      %1038 = vmatpush1.bf16.msra.mxu0 0
      %1039 = vmatprep.subr.bf16.mxu0 0
      %1040 = vmatpush1.bf16.msra.mxu0 0
      %1041 = vmatprep.subr.bf16.mxu0 0
      %1042 = vmatpush1.bf16.msra.mxu0 0
      %1043 = vmatprep.subr.bf16.mxu0 0
      %1044 = vmatpush1.bf16.msra.mxu0 0
      %1045 = vmatprep.subr.bf16.mxu0 0
      %1046 = vmatpush1.bf16.msra.mxu0 0
      %1047 = vmatprep.subr.bf16.mxu0 0
      %1048 = vmatpush1.bf16.msra.mxu0 0
      %1049 = vmatprep.subr.bf16.mxu0 0
      %1050 = vmatpush1.bf16.msra.mxu0 0
      %1051 = vmatprep.subr.bf16.mxu0 0
      %1052 = vmatpush1.bf16.msra.mxu0 0
      %1053 = vmatprep.subr.bf16.mxu0 0
      %1054 = vmatpush1.bf16.msra.mxu0 0
      %1055 = vmatprep.subr.bf16.mxu0 0
      %1056 = vmatpush1.bf16.msra.mxu0 0
      %1057 = vmatprep.mubr.bf16.mxu0 0
      %1058 = vmatmul.mubr.bf16.gmra.mrb[0].mxu0 %v1010
      %v1059 = vpop.f32.mrb[0].mxu0
      %v1060 = vadd.f32 0.0, %v1059
      %v1061 = vpop.f32.mrb[0].mxu0
      %v1062 = vadd.f32 0.0, %v1061
      %v1063 = vpop.f32.mrb[0].mxu0
      %v1064 = vpop.f32.mrb[0].mxu0
      %1065 = vdwg.mxu0
      %1066 = vmatprep.subr.bf16.mxu0 %v1023
      %1067 = vmatpush1.bf16.msra.mxu0 %v1020
      %1068 = vmatprep.subr.bf16.mxu0 0
      %1069 = vmatpush1.bf16.msra.mxu0 0
      %1070 = vmatprep.subr.bf16.mxu0 0
      %1071 = vmatpush1.bf16.msra.mxu0 0
      %1072 = vmatprep.subr.bf16.mxu0 0
      %1073 = vmatpush1.bf16.msra.mxu0 0
      %1074 = vmatprep.subr.bf16.mxu0 0
      %1075 = vmatpush1.bf16.msra.mxu0 0
      %1076 = vmatprep.subr.bf16.mxu0 0
      %1077 = vmatpush1.bf16.msra.mxu0 0
      %1078 = vmatprep.subr.bf16.mxu0 0
      %1079 = vmatpush1.bf16.msra.mxu0 0
      %1080 = vmatprep.subr.bf16.mxu0 0
      %1081 = vmatpush1.bf16.msra.mxu0 0
      %1082 = vmatprep.subr.bf16.mxu0 0
      %1083 = vmatpush1.bf16.msra.mxu0 0
      %1084 = vmatprep.subr.bf16.mxu0 0
      %1085 = vmatpush1.bf16.msra.mxu0 0
      %1086 = vmatprep.subr.bf16.mxu0 0
      %1087 = vmatpush1.bf16.msra.mxu0 0
      %1088 = vmatprep.subr.bf16.mxu0 0
      %1089 = vmatpush1.bf16.msra.mxu0 0
      %1090 = vmatprep.subr.bf16.mxu0 0
      %1091 = vmatpush1.bf16.msra.mxu0 0
      %1092 = vmatprep.subr.bf16.mxu0 0
      %1093 = vmatpush1.bf16.msra.mxu0 0
      %1094 = vmatprep.subr.bf16.mxu0 0
      %1095 = vmatpush1.bf16.msra.mxu0 0
      %1096 = vmatprep.subr.bf16.mxu0 0
      %1097 = vmatpush1.bf16.msra.mxu0 0
      %1098 = vmatprep.mubr.bf16.mxu0 0
      %1099 = vmatmul.mubr.bf16.gmra.mrb[0].mxu0 %v1010
      %v1100 = vpop.f32.mrb[0].mxu0
      %v1101 = vadd.f32 0.0, %v1100
      %v1102 = vpop.f32.mrb[0].mxu0
      %v1103 = vadd.f32 0.0, %v1102
      %v1104 = vpop.f32.mrb[0].mxu0
      %v1105 = vpop.f32.mrb[0].mxu0
      %1106 = vdwg.mxu0
      %1107 = vrot.lane.b32.xlu0 %v988, 22
      %v1108 = vpop.permute.xlu0 %1107
      %1109 = vrot.lane.b32.xlu0 %v989, 22
      %v1110 = vpop.permute.xlu0 %1109
      %1111 = vrot.lane.b32.xlu0 %v990, 22
      %v1112 = vpop.permute.xlu0 %1111
      %1113 = vrot.lane.b32.xlu0 %v991, 22
      %v1114 = vpop.permute.xlu0 %1113
      %1115 = vrot.lane.b32.xlu0 %v992, 22
      %v1116 = vpop.permute.xlu0 %1115
      %vm1117 = vcmask 179200
      %v1118 = vsel %vm1117, %v1108, %v1110
      %v1119 = vsel %vm1117, %v1110, %v1112
      %v1120 = vsel %vm1117, %v1112, %v1114
      %v1121 = vsel %vm1117, %v1114, %v1116
      %v1123 = vsel %vm1008, %v974, 0
      %v1126 = vsel %vm1012, %v1118, 0
      %v1129 = vsel %vm1012, %v1119, 0
      %v1132 = vsel %vm1012, %v1120, 0
      %v1135 = vsel %vm1012, %v1121, 0
      %1137 = vmatprep.subr.bf16.mxu0 %v1129
      %1138 = vmatpush1.bf16.msra.mxu0 %v1126
      %1139 = vmatprep.subr.bf16.mxu0 0
      %1140 = vmatpush1.bf16.msra.mxu0 0
      %1141 = vmatprep.subr.bf16.mxu0 0
      %1142 = vmatpush1.bf16.msra.mxu0 0
      %1143 = vmatprep.subr.bf16.mxu0 0
      %1144 = vmatpush1.bf16.msra.mxu0 0
      %1145 = vmatprep.subr.bf16.mxu0 0
      %1146 = vmatpush1.bf16.msra.mxu0 0
      %1147 = vmatprep.subr.bf16.mxu0 0
      %1148 = vmatpush1.bf16.msra.mxu0 0
      %1149 = vmatprep.subr.bf16.mxu0 0
      %1150 = vmatpush1.bf16.msra.mxu0 0
      %1151 = vmatprep.subr.bf16.mxu0 0
      %1152 = vmatpush1.bf16.msra.mxu0 0
      %1153 = vmatprep.subr.bf16.mxu0 0
      %1154 = vmatpush1.bf16.msra.mxu0 0
      %1155 = vmatprep.subr.bf16.mxu0 0
      %1156 = vmatpush1.bf16.msra.mxu0 0
      %1157 = vmatprep.subr.bf16.mxu0 0
      %1158 = vmatpush1.bf16.msra.mxu0 0
      %1159 = vmatprep.subr.bf16.mxu0 0
      %1160 = vmatpush1.bf16.msra.mxu0 0
      %1161 = vmatprep.subr.bf16.mxu0 0
      %1162 = vmatpush1.bf16.msra.mxu0 0
      %1163 = vmatprep.subr.bf16.mxu0 0
      %1164 = vmatpush1.bf16.msra.mxu0 0
      %1165 = vmatprep.subr.bf16.mxu0 0
      %1166 = vmatpush1.bf16.msra.mxu0 0
      %1167 = vmatprep.subr.bf16.mxu0 0
      %1168 = vmatpush1.bf16.msra.mxu0 0
      %1169 = vmatprep.mubr.bf16.mxu0 0
      %1170 = vmatmul.mubr.bf16.gmra.mrb[0].mxu0 %v1123
      %v1171 = vpop.f32.mrb[0].mxu0
      %v1172 = vadd.f32 %v1060, %v1171
      %v1173 = vpop.f32.mrb[0].mxu0
      %v1174 = vadd.f32 %v1062, %v1173
      %v1175 = vpop.f32.mrb[0].mxu0
      %v1176 = vpop.f32.mrb[0].mxu0
      %1177 = vdwg.mxu0
      %1178 = vmatprep.subr.bf16.mxu0 %v1135
      %1179 = vmatpush1.bf16.msra.mxu0 %v1132
      %1180 = vmatprep.subr.bf16.mxu0 0
      %1181 = vmatpush1.bf16.msra.mxu0 0
      %1182 = vmatprep.subr.bf16.mxu0 0
      %1183 = vmatpush1.bf16.msra.mxu0 0
      %1184 = vmatprep.subr.bf16.mxu0 0
      %1185 = vmatpush1.bf16.msra.mxu0 0
      %1186 = vmatprep.subr.bf16.mxu0 0
      %1187 = vmatpush1.bf16.msra.mxu0 0
      %1188 = vmatprep.subr.bf16.mxu0 0
      %1189 = vmatpush1.bf16.msra.mxu0 0
      %1190 = vmatprep.subr.bf16.mxu0 0
      %1191 = vmatpush1.bf16.msra.mxu0 0
      %1192 = vmatprep.subr.bf16.mxu0 0
      %1193 = vmatpush1.bf16.msra.mxu0 0
      %1194 = vmatprep.subr.bf16.mxu0 0
      %1195 = vmatpush1.bf16.msra.mxu0 0
      %1196 = vmatprep.subr.bf16.mxu0 0
      %1197 = vmatpush1.bf16.msra.mxu0 0
      %1198 = vmatprep.subr.bf16.mxu0 0
      %1199 = vmatpush1.bf16.msra.mxu0 0
      %1200 = vmatprep.subr.bf16.mxu0 0
      %1201 = vmatpush1.bf16.msra.mxu0 0
      %1202 = vmatprep.subr.bf16.mxu0 0
      %1203 = vmatpush1.bf16.msra.mxu0 0
      %1204 = vmatprep.subr.bf16.mxu0 0
      %1205 = vmatpush1.bf16.msra.mxu0 0
      %1206 = vmatprep.subr.bf16.mxu0 0
      %1207 = vmatpush1.bf16.msra.mxu0 0
      %1208 = vmatprep.subr.bf16.mxu0 0
      %1209 = vmatpush1.bf16.msra.mxu0 0
      %1210 = vmatprep.mubr.bf16.mxu0 0
      %1211 = vmatmul.mubr.bf16.gmra.mrb[0].mxu0 %v1123
      %v1212 = vpop.f32.mrb[0].mxu0
      %v1213 = vadd.f32 %v1101, %v1212
      %v1214 = vpop.f32.mrb[0].mxu0
      %v1215 = vadd.f32 %v1103, %v1214
      %v1216 = vpop.f32.mrb[0].mxu0
      %v1217 = vpop.f32.mrb[0].mxu0
      %1218 = vdwg.mxu0
      %s1219 = scalar_lea.vmem %s3, 8
      %v1220 = vld [vmem:[%s1219] sm:$0xf]
      %1221 = vrot.lane.b32.xlu0 %v988, 20
      %v1222 = vpop.permute.xlu0 %1221
      %1223 = vrot.lane.b32.xlu0 %v989, 20
      %v1224 = vpop.permute.xlu0 %1223
      %1225 = vrot.lane.b32.xlu0 %v990, 20
      %v1226 = vpop.permute.xlu0 %1225
      %1227 = vrot.lane.b32.xlu0 %v991, 20
      %v1228 = vpop.permute.xlu0 %1227
      %1229 = vrot.lane.b32.xlu0 %v992, 20
      %v1230 = vpop.permute.xlu0 %1229
      %vm1231 = vcmask 162816
      %v1232 = vsel %vm1231, %v1222, %v1224
      %v1233 = vsel %vm1231, %v1224, %v1226
      %v1234 = vsel %vm1231, %v1226, %v1228
      %v1235 = vsel %vm1231, %v1228, %v1230
      %v1237 = vsel %vm1008, %v1220, 0
      %v1240 = vsel %vm1012, %v1232, 0
      %v1243 = vsel %vm1012, %v1233, 0
      %v1246 = vsel %vm1012, %v1234, 0
      %v1249 = vsel %vm1012, %v1235, 0
      %1251 = vmatprep.subr.bf16.mxu0 %v1243
      %1252 = vmatpush1.bf16.msra.mxu0 %v1240
      %1253 = vmatprep.subr.bf16.mxu0 0
      %1254 = vmatpush1.bf16.msra.mxu0 0
      %1255 = vmatprep.subr.bf16.mxu0 0
      %1256 = vmatpush1.bf16.msra.mxu0 0
      %1257 = vmatprep.subr.bf16.mxu0 0
      %1258 = vmatpush1.bf16.msra.mxu0 0
      %1259 = vmatprep.subr.bf16.mxu0 0
      %1260 = vmatpush1.bf16.msra.mxu0 0
      %1261 = vmatprep.subr.bf16.mxu0 0
      %1262 = vmatpush1.bf16.msra.mxu0 0
      %1263 = vmatprep.subr.bf16.mxu0 0
      %1264 = vmatpush1.bf16.msra.mxu0 0
      %1265 = vmatprep.subr.bf16.mxu0 0
      %1266 = vmatpush1.bf16.msra.mxu0 0
      %1267 = vmatprep.subr.bf16.mxu0 0
      %1268 = vmatpush1.bf16.msra.mxu0 0
      %1269 = vmatprep.subr.bf16.mxu0 0
      %1270 = vmatpush1.bf16.msra.mxu0 0
      %1271 = vmatprep.subr.bf16.mxu0 0
      %1272 = vmatpush1.bf16.msra.mxu0 0
      %1273 = vmatprep.subr.bf16.mxu0 0
      %1274 = vmatpush1.bf16.msra.mxu0 0
      %1275 = vmatprep.subr.bf16.mxu0 0
      %1276 = vmatpush1.bf16.msra.mxu0 0
      %1277 = vmatprep.subr.bf16.mxu0 0
      %1278 = vmatpush1.bf16.msra.mxu0 0
      %1279 = vmatprep.subr.bf16.mxu0 0
      %1280 = vmatpush1.bf16.msra.mxu0 0
      %1281 = vmatprep.subr.bf16.mxu0 0
      %1282 = vmatpush1.bf16.msra.mxu0 0
      %1283 = vmatprep.mubr.bf16.mxu0 0
      %1284 = vmatmul.mubr.bf16.gmra.mrb[0].mxu0 %v1237
      %v1285 = vpop.f32.mrb[0].mxu0
      %v1286 = vadd.f32 0.0, %v1285
      %v1287 = vpop.f32.mrb[0].mxu0
      %v1288 = vadd.f32 0.0, %v1287
      %v1289 = vpop.f32.mrb[0].mxu0
      %v1290 = vpop.f32.mrb[0].mxu0
      %1291 = vdwg.mxu0
      %1292 = vmatprep.subr.bf16.mxu0 %v1249
      %1293 = vmatpush1.bf16.msra.mxu0 %v1246
      %1294 = vmatprep.subr.bf16.mxu0 0
      %1295 = vmatpush1.bf16.msra.mxu0 0
      %1296 = vmatprep.subr.bf16.mxu0 0
      %1297 = vmatpush1.bf16.msra.mxu0 0
      %1298 = vmatprep.subr.bf16.mxu0 0
      %1299 = vmatpush1.bf16.msra.mxu0 0
      %1300 = vmatprep.subr.bf16.mxu0 0
      %1301 = vmatpush1.bf16.msra.mxu0 0
      %1302 = vmatprep.subr.bf16.mxu0 0
      %1303 = vmatpush1.bf16.msra.mxu0 0
      %1304 = vmatprep.subr.bf16.mxu0 0
      %1305 = vmatpush1.bf16.msra.mxu0 0
      %1306 = vmatprep.subr.bf16.mxu0 0
      %1307 = vmatpush1.bf16.msra.mxu0 0
      %1308 = vmatprep.subr.bf16.mxu0 0
      %1309 = vmatpush1.bf16.msra.mxu0 0
      %1310 = vmatprep.subr.bf16.mxu0 0
      %1311 = vmatpush1.bf16.msra.mxu0 0
      %1312 = vmatprep.subr.bf16.mxu0 0
      %1313 = vmatpush1.bf16.msra.mxu0 0
      %1314 = vmatprep.subr.bf16.mxu0 0
      %1315 = vmatpush1.bf16.msra.mxu0 0
      %1316 = vmatprep.subr.bf16.mxu0 0
      %1317 = vmatpush1.bf16.msra.mxu0 0
      %1318 = vmatprep.subr.bf16.mxu0 0
      %1319 = vmatpush1.bf16.msra.mxu0 0
      %1320 = vmatprep.subr.bf16.mxu0 0
      %1321 = vmatpush1.bf16.msra.mxu0 0
      %1322 = vmatprep.subr.bf16.mxu0 0
      %1323 = vmatpush1.bf16.msra.mxu0 0
      %1324 = vmatprep.mubr.bf16.mxu0 0
      %1325 = vmatmul.mubr.bf16.gmra.mrb[0].mxu0 %v1237
      %v1326 = vpop.f32.mrb[0].mxu0
      %v1327 = vadd.f32 0.0, %v1326
      %v1328 = vpop.f32.mrb[0].mxu0
      %v1329 = vadd.f32 0.0, %v1328
      %v1330 = vpop.f32.mrb[0].mxu0
      %v1331 = vpop.f32.mrb[0].mxu0
      %1332 = vdwg.mxu0
      %v1333 = vadd.f32 %v1172, %v1286
      %v1334 = vadd.f32 %v1174, %v1288
      %v1335 = vadd.f32 %v1213, %v1327
      %v1336 = vadd.f32 %v1215, %v1329
      %s1337 = scalar_lea.vmem %s3, 12
      %v1338 = vld [vmem:[%s1337] sm:$0xf]
      %1339 = vrot.lane.b32.xlu0 %v988, 1
      %v1340 = vpop.permute.xlu0 %1339
      %1341 = vrot.lane.b32.xlu0 %v989, 1
      %v1342 = vpop.permute.xlu0 %1341
      %1343 = vrot.lane.b32.xlu0 %v990, 1
      %v1344 = vpop.permute.xlu0 %1343
      %1345 = vrot.lane.b32.xlu0 %v991, 1
      %v1346 = vpop.permute.xlu0 %1345
      %1347 = vrot.lane.b32.xlu0 %v992, 1
      %v1348 = vpop.permute.xlu0 %1347
      %vm1349 = vcmask 7168
      %v1350 = vsel %vm1349, %v1340, %v1342
      %v1351 = vsel %vm1349, %v1342, %v1344
      %v1352 = vsel %vm1349, %v1344, %v1346
      %v1353 = vsel %vm1349, %v1346, %v1348
      %v1355 = vsel %vm1008, %v1338, 0
      %v1358 = vsel %vm1012, %v1350, 0
      %v1361 = vsel %vm1012, %v1351, 0
      %v1364 = vsel %vm1012, %v1352, 0
      %v1367 = vsel %vm1012, %v1353, 0
      %1369 = vmatprep.subr.bf16.mxu0 %v1361
      %1370 = vmatpush1.bf16.msra.mxu0 %v1358
      %1371 = vmatprep.subr.bf16.mxu0 0
      %1372 = vmatpush1.bf16.msra.mxu0 0
      %1373 = vmatprep.subr.bf16.mxu0 0
      %1374 = vmatpush1.bf16.msra.mxu0 0
      %1375 = vmatprep.subr.bf16.mxu0 0
      %1376 = vmatpush1.bf16.msra.mxu0 0
      %1377 = vmatprep.subr.bf16.mxu0 0
      %1378 = vmatpush1.bf16.msra.mxu0 0
      %1379 = vmatprep.subr.bf16.mxu0 0
      %1380 = vmatpush1.bf16.msra.mxu0 0
      %1381 = vmatprep.subr.bf16.mxu0 0
      %1382 = vmatpush1.bf16.msra.mxu0 0
      %1383 = vmatprep.subr.bf16.mxu0 0
      %1384 = vmatpush1.bf16.msra.mxu0 0
      %1385 = vmatprep.subr.bf16.mxu0 0
      %1386 = vmatpush1.bf16.msra.mxu0 0
      %1387 = vmatprep.subr.bf16.mxu0 0
      %1388 = vmatpush1.bf16.msra.mxu0 0
      %1389 = vmatprep.subr.bf16.mxu0 0
      %1390 = vmatpush1.bf16.msra.mxu0 0
      %1391 = vmatprep.subr.bf16.mxu0 0
      %1392 = vmatpush1.bf16.msra.mxu0 0
      %1393 = vmatprep.subr.bf16.mxu0 0
      %1394 = vmatpush1.bf16.msra.mxu0 0
      %1395 = vmatprep.subr.bf16.mxu0 0
      %1396 = vmatpush1.bf16.msra.mxu0 0
      %1397 = vmatprep.subr.bf16.mxu0 0
      %1398 = vmatpush1.bf16.msra.mxu0 0
      %1399 = vmatprep.subr.bf16.mxu0 0
      %1400 = vmatpush1.bf16.msra.mxu0 0
      %1401 = vmatprep.mubr.bf16.mxu0 0
      %1402 = vmatmul.mubr.bf16.gmra.mrb[0].mxu0 %v1355
      %v1403 = vpop.f32.mrb[0].mxu0
      %v1404 = vadd.f32 0.0, %v1403
      %v1405 = vpop.f32.mrb[0].mxu0
      %v1406 = vadd.f32 0.0, %v1405
      %v1407 = vpop.f32.mrb[0].mxu0
      %v1408 = vpop.f32.mrb[0].mxu0
      %1409 = vdwg.mxu0
      %1410 = vmatprep.subr.bf16.mxu0 %v1367
      %1411 = vmatpush1.bf16.msra.mxu0 %v1364
      %1412 = vmatprep.subr.bf16.mxu0 0
      %1413 = vmatpush1.bf16.msra.mxu0 0
      %1414 = vmatprep.subr.bf16.mxu0 0
      %1415 = vmatpush1.bf16.msra.mxu0 0
      %1416 = vmatprep.subr.bf16.mxu0 0
      %1417 = vmatpush1.bf16.msra.mxu0 0
      %1418 = vmatprep.subr.bf16.mxu0 0
      %1419 = vmatpush1.bf16.msra.mxu0 0
      %1420 = vmatprep.subr.bf16.mxu0 0
      %1421 = vmatpush1.bf16.msra.mxu0 0
      %1422 = vmatprep.subr.bf16.mxu0 0
      %1423 = vmatpush1.bf16.msra.mxu0 0
      %1424 = vmatprep.subr.bf16.mxu0 0
      %1425 = vmatpush1.bf16.msra.mxu0 0
      %1426 = vmatprep.subr.bf16.mxu0 0
      %1427 = vmatpush1.bf16.msra.mxu0 0
      %1428 = vmatprep.subr.bf16.mxu0 0
      %1429 = vmatpush1.bf16.msra.mxu0 0
      %1430 = vmatprep.subr.bf16.mxu0 0
      %1431 = vmatpush1.bf16.msra.mxu0 0
      %1432 = vmatprep.subr.bf16.mxu0 0
      %1433 = vmatpush1.bf16.msra.mxu0 0
      %1434 = vmatprep.subr.bf16.mxu0 0
      %1435 = vmatpush1.bf16.msra.mxu0 0
      %1436 = vmatprep.subr.bf16.mxu0 0
      %1437 = vmatpush1.bf16.msra.mxu0 0
      %1438 = vmatprep.subr.bf16.mxu0 0
      %1439 = vmatpush1.bf16.msra.mxu0 0
      %1440 = vmatprep.subr.bf16.mxu0 0
      %1441 = vmatpush1.bf16.msra.mxu0 0
      %1442 = vmatprep.mubr.bf16.mxu0 0
      %1443 = vmatmul.mubr.bf16.gmra.mrb[0].mxu0 %v1355
      %v1444 = vpop.f32.mrb[0].mxu0
      %v1445 = vadd.f32 0.0, %v1444
      %v1446 = vpop.f32.mrb[0].mxu0
      %v1447 = vadd.f32 0.0, %v1446
      %v1448 = vpop.f32.mrb[0].mxu0
      %v1449 = vpop.f32.mrb[0].mxu0
      %1450 = vdwg.mxu0
      %v1451 = vadd.f32 %v1333, %v1404
      %v1452 = vadd.f32 %v1334, %v1406
      %v1453 = vadd.f32 %v1335, %v1445
      %v1454 = vadd.f32 %v1336, %v1447
      %s1455 = scalar_lea.vmem %s3, 16
      %v1456 = vld [vmem:[%s1455] sm:$0xf]
      %v1457 = vld [vmem:[#allocation2 + $0x4] sm:$0xff]
      %v1458 = vld [vmem:[#allocation2 + $0xc] sm:$0xff]
      %v1461 = vunpack.c.l.b16 %v1457
      %v1462 = vunpack.c.h.b16 %v1457
      %v1463 = vunpack.c.l.b16 %v1458
      %v1464 = vunpack.c.h.b16 %v1458
      %v1465 = vpack.c.b16 %v1461, %v1461
      %v1466 = vpack.c.b16 %v1462, %v1462
      %v1467 = vpack.c.b16 %v1463, %v1463
      %v1468 = vpack.c.b16 %v1464, %v1464
      %v1470 = vsel %vm1008, %v1456, 0
      %v1473 = vsel %vm1012, %v1465, 0
      %v1476 = vsel %vm1012, %v1466, 0
      %v1479 = vsel %vm1012, %v1467, 0
      %v1482 = vsel %vm1012, %v1468, 0
      %1484 = vmatprep.subr.bf16.mxu0 %v1476
      %1485 = vmatpush1.bf16.msra.mxu0 %v1473
      %1486 = vmatprep.subr.bf16.mxu0 0
      %1487 = vmatpush1.bf16.msra.mxu0 0
      %1488 = vmatprep.subr.bf16.mxu0 0
      %1489 = vmatpush1.bf16.msra.mxu0 0
      %1490 = vmatprep.subr.bf16.mxu0 0
      %1491 = vmatpush1.bf16.msra.mxu0 0
      %1492 = vmatprep.subr.bf16.mxu0 0
      %1493 = vmatpush1.bf16.msra.mxu0 0
      %1494 = vmatprep.subr.bf16.mxu0 0
      %1495 = vmatpush1.bf16.msra.mxu0 0
      %1496 = vmatprep.subr.bf16.mxu0 0
      %1497 = vmatpush1.bf16.msra.mxu0 0
      %1498 = vmatprep.subr.bf16.mxu0 0
      %1499 = vmatpush1.bf16.msra.mxu0 0
      %1500 = vmatprep.subr.bf16.mxu0 0
      %1501 = vmatpush1.bf16.msra.mxu0 0
      %1502 = vmatprep.subr.bf16.mxu0 0
      %1503 = vmatpush1.bf16.msra.mxu0 0
      %1504 = vmatprep.subr.bf16.mxu0 0
      %1505 = vmatpush1.bf16.msra.mxu0 0
      %1506 = vmatprep.subr.bf16.mxu0 0
      %1507 = vmatpush1.bf16.msra.mxu0 0
      %1508 = vmatprep.subr.bf16.mxu0 0
      %1509 = vmatpush1.bf16.msra.mxu0 0
      %1510 = vmatprep.subr.bf16.mxu0 0
      %1511 = vmatpush1.bf16.msra.mxu0 0
      %1512 = vmatprep.subr.bf16.mxu0 0
      %1513 = vmatpush1.bf16.msra.mxu0 0
      %1514 = vmatprep.subr.bf16.mxu0 0
      %1515 = vmatpush1.bf16.msra.mxu0 0
      %1516 = vmatprep.mubr.bf16.mxu0 0
      %1517 = vmatmul.mubr.bf16.gmra.mrb[0].mxu0 %v1470
      %v1518 = vpop.f32.mrb[0].mxu0
      %v1519 = vadd.f32 0.0, %v1518
      %v1520 = vpop.f32.mrb[0].mxu0
      %v1521 = vadd.f32 0.0, %v1520
      %v1522 = vpop.f32.mrb[0].mxu0
      %v1523 = vpop.f32.mrb[0].mxu0
      %1524 = vdwg.mxu0
      %1525 = vmatprep.subr.bf16.mxu0 %v1482
      %1526 = vmatpush1.bf16.msra.mxu0 %v1479
      %1527 = vmatprep.subr.bf16.mxu0 0
      %1528 = vmatpush1.bf16.msra.mxu0 0
      %1529 = vmatprep.subr.bf16.mxu0 0
      %1530 = vmatpush1.bf16.msra.mxu0 0
      %1531 = vmatprep.subr.bf16.mxu0 0
      %1532 = vmatpush1.bf16.msra.mxu0 0
      %1533 = vmatprep.subr.bf16.mxu0 0
      %1534 = vmatpush1.bf16.msra.mxu0 0
      %1535 = vmatprep.subr.bf16.mxu0 0
      %1536 = vmatpush1.bf16.msra.mxu0 0
      %1537 = vmatprep.subr.bf16.mxu0 0
      %1538 = vmatpush1.bf16.msra.mxu0 0
      %1539 = vmatprep.subr.bf16.mxu0 0
      %1540 = vmatpush1.bf16.msra.mxu0 0
      %1541 = vmatprep.subr.bf16.mxu0 0
      %1542 = vmatpush1.bf16.msra.mxu0 0
      %1543 = vmatprep.subr.bf16.mxu0 0
      %1544 = vmatpush1.bf16.msra.mxu0 0
      %1545 = vmatprep.subr.bf16.mxu0 0
      %1546 = vmatpush1.bf16.msra.mxu0 0
      %1547 = vmatprep.subr.bf16.mxu0 0
      %1548 = vmatpush1.bf16.msra.mxu0 0
      %1549 = vmatprep.subr.bf16.mxu0 0
      %1550 = vmatpush1.bf16.msra.mxu0 0
      %1551 = vmatprep.subr.bf16.mxu0 0
      %1552 = vmatpush1.bf16.msra.mxu0 0
      %1553 = vmatprep.subr.bf16.mxu0 0
      %1554 = vmatpush1.bf16.msra.mxu0 0
      %1555 = vmatprep.subr.bf16.mxu0 0
      %1556 = vmatpush1.bf16.msra.mxu0 0
      %1557 = vmatprep.mubr.bf16.mxu0 0
      %1558 = vmatmul.mubr.bf16.gmra.mrb[0].mxu0 %v1470
      %v1559 = vpop.f32.mrb[0].mxu0
      %v1560 = vadd.f32 0.0, %v1559
      %v1561 = vpop.f32.mrb[0].mxu0
      %v1562 = vadd.f32 0.0, %v1561
      %v1563 = vpop.f32.mrb[0].mxu0
      %v1564 = vpop.f32.mrb[0].mxu0
      %1565 = vdwg.mxu0
      %v1566 = vadd.f32 %v1451, %v1519
      %v1567 = vadd.f32 %v1452, %v1521
      %v1568 = vadd.f32 %v1453, %v1560
      %v1569 = vadd.f32 %v1454, %v1562
      %s1570 = scalar_lea.vmem %s3, 20
      %v1571 = vld [vmem:[%s1570] sm:$0xf]
      %v1572 = vld [vmem:[#allocation2 + $0x4] sm:$0xff]
      %v1573 = vld [vmem:[#allocation2 + $0xc] sm:$0xff]
      %v1574 = vld [vmem:[#allocation2 + $0x14] sm:$0xf]
      %v1578 = vunpack.c.l.b16 %v1572
      %v1579 = vunpack.c.h.b16 %v1572
      %v1580 = vunpack.c.l.b16 %v1573
      %v1581 = vunpack.c.h.b16 %v1573
      %v1582 = vunpack.c.l.b16 %v1574
      %v1583 = vpack.c.b16 %v1578, %v1578
      %v1584 = vpack.c.b16 %v1579, %v1579
      %v1585 = vpack.c.b16 %v1580, %v1580
      %v1586 = vpack.c.b16 %v1581, %v1581
      %v1587 = vpack.c.b16 %v1582, %v1582
      %1588 = vrot.lane.b32.xlu0 %v1583, 127
      %v1589 = vpop.permute.xlu0 %1588
      %1590 = vrot.lane.b32.xlu0 %v1584, 127
      %v1591 = vpop.permute.xlu0 %1590
      %1592 = vrot.lane.b32.xlu0 %v1585, 127
      %v1593 = vpop.permute.xlu0 %1592
      %1594 = vrot.lane.b32.xlu0 %v1586, 127
      %v1595 = vpop.permute.xlu0 %1594
      %1596 = vrot.lane.b32.xlu0 %v1587, 127
      %v1597 = vpop.permute.xlu0 %1596
      %v1598 = vsel %vm419, %v1589, %v1591
      %v1599 = vsel %vm419, %v1591, %v1593
      %v1600 = vsel %vm419, %v1593, %v1595
      %v1601 = vsel %vm419, %v1595, %v1597
      %v1603 = vsel %vm1008, %v1571, 0
      %v1606 = vsel %vm1012, %v1598, 0
      %v1609 = vsel %vm1012, %v1599, 0
      %v1612 = vsel %vm1012, %v1600, 0
      %v1615 = vsel %vm1012, %v1601, 0
      %1617 = vmatprep.subr.bf16.mxu0 %v1609
      %1618 = vmatpush1.bf16.msra.mxu0 %v1606
      %1619 = vmatprep.subr.bf16.mxu0 0
      %1620 = vmatpush1.bf16.msra.mxu0 0
      %1621 = vmatprep.subr.bf16.mxu0 0
      %1622 = vmatpush1.bf16.msra.mxu0 0
      %1623 = vmatprep.subr.bf16.mxu0 0
      %1624 = vmatpush1.bf16.msra.mxu0 0
      %1625 = vmatprep.subr.bf16.mxu0 0
      %1626 = vmatpush1.bf16.msra.mxu0 0
      %1627 = vmatprep.subr.bf16.mxu0 0
      %1628 = vmatpush1.bf16.msra.mxu0 0
      %1629 = vmatprep.subr.bf16.mxu0 0
      %1630 = vmatpush1.bf16.msra.mxu0 0
      %1631 = vmatprep.subr.bf16.mxu0 0
      %1632 = vmatpush1.bf16.msra.mxu0 0
      %1633 = vmatprep.subr.bf16.mxu0 0
      %1634 = vmatpush1.bf16.msra.mxu0 0
      %1635 = vmatprep.subr.bf16.mxu0 0
      %1636 = vmatpush1.bf16.msra.mxu0 0
      %1637 = vmatprep.subr.bf16.mxu0 0
      %1638 = vmatpush1.bf16.msra.mxu0 0
      %1639 = vmatprep.subr.bf16.mxu0 0
      %1640 = vmatpush1.bf16.msra.mxu0 0
      %1641 = vmatprep.subr.bf16.mxu0 0
      %1642 = vmatpush1.bf16.msra.mxu0 0
      %1643 = vmatprep.subr.bf16.mxu0 0
      %1644 = vmatpush1.bf16.msra.mxu0 0
      %1645 = vmatprep.subr.bf16.mxu0 0
      %1646 = vmatpush1.bf16.msra.mxu0 0
      %1647 = vmatprep.subr.bf16.mxu0 0
      %1648 = vmatpush1.bf16.msra.mxu0 0
      %1649 = vmatprep.mubr.bf16.mxu0 0
      %1650 = vmatmul.mubr.bf16.gmra.mrb[0].mxu0 %v1603
      %v1651 = vpop.f32.mrb[0].mxu0
      %v1652 = vadd.f32 0.0, %v1651
      %v1653 = vpop.f32.mrb[0].mxu0
      %v1654 = vadd.f32 0.0, %v1653
      %v1655 = vpop.f32.mrb[0].mxu0
      %v1656 = vpop.f32.mrb[0].mxu0
      %1657 = vdwg.mxu0
      %1658 = vmatprep.subr.bf16.mxu0 %v1615
      %1659 = vmatpush1.bf16.msra.mxu0 %v1612
      %1660 = vmatprep.subr.bf16.mxu0 0
      %1661 = vmatpush1.bf16.msra.mxu0 0
      %1662 = vmatprep.subr.bf16.mxu0 0
      %1663 = vmatpush1.bf16.msra.mxu0 0
      %1664 = vmatprep.subr.bf16.mxu0 0
      %1665 = vmatpush1.bf16.msra.mxu0 0
      %1666 = vmatprep.subr.bf16.mxu0 0
      %1667 = vmatpush1.bf16.msra.mxu0 0
      %1668 = vmatprep.subr.bf16.mxu0 0
      %1669 = vmatpush1.bf16.msra.mxu0 0
      %1670 = vmatprep.subr.bf16.mxu0 0
      %1671 = vmatpush1.bf16.msra.mxu0 0
      %1672 = vmatprep.subr.bf16.mxu0 0
      %1673 = vmatpush1.bf16.msra.mxu0 0
      %1674 = vmatprep.subr.bf16.mxu0 0
      %1675 = vmatpush1.bf16.msra.mxu0 0
      %1676 = vmatprep.subr.bf16.mxu0 0
      %1677 = vmatpush1.bf16.msra.mxu0 0
      %1678 = vmatprep.subr.bf16.mxu0 0
      %1679 = vmatpush1.bf16.msra.mxu0 0
      %1680 = vmatprep.subr.bf16.mxu0 0
      %1681 = vmatpush1.bf16.msra.mxu0 0
      %1682 = vmatprep.subr.bf16.mxu0 0
      %1683 = vmatpush1.bf16.msra.mxu0 0
      %1684 = vmatprep.subr.bf16.mxu0 0
      %1685 = vmatpush1.bf16.msra.mxu0 0
      %1686 = vmatprep.subr.bf16.mxu0 0
      %1687 = vmatpush1.bf16.msra.mxu0 0
      %1688 = vmatprep.subr.bf16.mxu0 0
      %1689 = vmatpush1.bf16.msra.mxu0 0
      %1690 = vmatprep.mubr.bf16.mxu0 0
      %1691 = vmatmul.mubr.bf16.gmra.mrb[0].mxu0 %v1603
      %v1692 = vpop.f32.mrb[0].mxu0
      %v1693 = vadd.f32 0.0, %v1692
      %v1694 = vpop.f32.mrb[0].mxu0
      %v1695 = vadd.f32 0.0, %v1694
      %v1696 = vpop.f32.mrb[0].mxu0
      %v1697 = vpop.f32.mrb[0].mxu0
      %1698 = vdwg.mxu0
      %v1699 = vadd.f32 %v1566, %v1652
      %v1700 = vadd.f32 %v1567, %v1654
      %v1701 = vadd.f32 %v1568, %v1693
      %v1702 = vadd.f32 %v1569, %v1695
      %s1703 = scalar_lea.vmem %s3, 24
      %v1704 = vld [vmem:[%s1703] sm:$0xf]
      %1705 = vrot.lane.b32.xlu0 %v1583, 108
      %v1706 = vpop.permute.xlu0 %1705
      %1707 = vrot.lane.b32.xlu0 %v1584, 108
      %v1708 = vpop.permute.xlu0 %1707
      %1709 = vrot.lane.b32.xlu0 %v1585, 108
      %v1710 = vpop.permute.xlu0 %1709
      %1711 = vrot.lane.b32.xlu0 %v1586, 108
      %v1712 = vpop.permute.xlu0 %1711
      %1713 = vrot.lane.b32.xlu0 %v1587, 108
      %v1714 = vpop.permute.xlu0 %1713
      %vm1715 = vcmask 883712
      %v1716 = vsel %vm1715, %v1706, %v1708
      %v1717 = vsel %vm1715, %v1708, %v1710
      %v1718 = vsel %vm1715, %v1710, %v1712
      %v1719 = vsel %vm1715, %v1712, %v1714
      %v1721 = vsel %vm1008, %v1704, 0
      %v1724 = vsel %vm1012, %v1716, 0
      %v1727 = vsel %vm1012, %v1717, 0
      %v1730 = vsel %vm1012, %v1718, 0
      %v1733 = vsel %vm1012, %v1719, 0
      %1735 = vmatprep.subr.bf16.mxu0 %v1727
      %1736 = vmatpush1.bf16.msra.mxu0 %v1724
      %1737 = vmatprep.subr.bf16.mxu0 0
      %1738 = vmatpush1.bf16.msra.mxu0 0
      %1739 = vmatprep.subr.bf16.mxu0 0
      %1740 = vmatpush1.bf16.msra.mxu0 0
      %1741 = vmatprep.subr.bf16.mxu0 0
      %1742 = vmatpush1.bf16.msra.mxu0 0
      %1743 = vmatprep.subr.bf16.mxu0 0
      %1744 = vmatpush1.bf16.msra.mxu0 0
      %1745 = vmatprep.subr.bf16.mxu0 0
      %1746 = vmatpush1.bf16.msra.mxu0 0
      %1747 = vmatprep.subr.bf16.mxu0 0
      %1748 = vmatpush1.bf16.msra.mxu0 0
      %1749 = vmatprep.subr.bf16.mxu0 0
      %1750 = vmatpush1.bf16.msra.mxu0 0
      %1751 = vmatprep.subr.bf16.mxu0 0
      %1752 = vmatpush1.bf16.msra.mxu0 0
      %1753 = vmatprep.subr.bf16.mxu0 0
      %1754 = vmatpush1.bf16.msra.mxu0 0
      %1755 = vmatprep.subr.bf16.mxu0 0
      %1756 = vmatpush1.bf16.msra.mxu0 0
      %1757 = vmatprep.subr.bf16.mxu0 0
      %1758 = vmatpush1.bf16.msra.mxu0 0
      %1759 = vmatprep.subr.bf16.mxu0 0
      %1760 = vmatpush1.bf16.msra.mxu0 0
      %1761 = vmatprep.subr.bf16.mxu0 0
      %1762 = vmatpush1.bf16.msra.mxu0 0
      %1763 = vmatprep.subr.bf16.mxu0 0
      %1764 = vmatpush1.bf16.msra.mxu0 0
      %1765 = vmatprep.subr.bf16.mxu0 0
      %1766 = vmatpush1.bf16.msra.mxu0 0
      %1767 = vmatprep.mubr.bf16.mxu0 0
      %1768 = vmatmul.mubr.bf16.gmra.mrb[0].mxu0 %v1721
      %v1769 = vpop.f32.mrb[0].mxu0
      %v1770 = vadd.f32 0.0, %v1769
      %v1771 = vpop.f32.mrb[0].mxu0
      %v1772 = vadd.f32 0.0, %v1771
      %v1773 = vpop.f32.mrb[0].mxu0
      %v1774 = vpop.f32.mrb[0].mxu0
      %1775 = vdwg.mxu0
      %1776 = vmatprep.subr.bf16.mxu0 %v1733
      %1777 = vmatpush1.bf16.msra.mxu0 %v1730
      %1778 = vmatprep.subr.bf16.mxu0 0
      %1779 = vmatpush1.bf16.msra.mxu0 0
      %1780 = vmatprep.subr.bf16.mxu0 0
      %1781 = vmatpush1.bf16.msra.mxu0 0
      %1782 = vmatprep.subr.bf16.mxu0 0
      %1783 = vmatpush1.bf16.msra.mxu0 0
      %1784 = vmatprep.subr.bf16.mxu0 0
      %1785 = vmatpush1.bf16.msra.mxu0 0
      %1786 = vmatprep.subr.bf16.mxu0 0
      %1787 = vmatpush1.bf16.msra.mxu0 0
      %1788 = vmatprep.subr.bf16.mxu0 0
      %1789 = vmatpush1.bf16.msra.mxu0 0
      %1790 = vmatprep.subr.bf16.mxu0 0
      %1791 = vmatpush1.bf16.msra.mxu0 0
      %1792 = vmatprep.subr.bf16.mxu0 0
      %1793 = vmatpush1.bf16.msra.mxu0 0
      %1794 = vmatprep.subr.bf16.mxu0 0
      %1795 = vmatpush1.bf16.msra.mxu0 0
      %1796 = vmatprep.subr.bf16.mxu0 0
      %1797 = vmatpush1.bf16.msra.mxu0 0
      %1798 = vmatprep.subr.bf16.mxu0 0
      %1799 = vmatpush1.bf16.msra.mxu0 0
      %1800 = vmatprep.subr.bf16.mxu0 0
      %1801 = vmatpush1.bf16.msra.mxu0 0
      %1802 = vmatprep.subr.bf16.mxu0 0
      %1803 = vmatpush1.bf16.msra.mxu0 0
      %1804 = vmatprep.subr.bf16.mxu0 0
      %1805 = vmatpush1.bf16.msra.mxu0 0
      %1806 = vmatprep.subr.bf16.mxu0 0
      %1807 = vmatpush1.bf16.msra.mxu0 0
      %1808 = vmatprep.mubr.bf16.mxu0 0
      %1809 = vmatmul.mubr.bf16.gmra.mrb[0].mxu0 %v1721
      %v1810 = vpop.f32.mrb[0].mxu0
      %v1811 = vadd.f32 0.0, %v1810
      %v1812 = vpop.f32.mrb[0].mxu0
      %v1813 = vadd.f32 0.0, %v1812
      %v1814 = vpop.f32.mrb[0].mxu0
      %v1815 = vpop.f32.mrb[0].mxu0
      %1816 = vdwg.mxu0
      %v1817 = vadd.f32 %v1699, %v1770
      %v1818 = vadd.f32 %v1700, %v1772
      %v1819 = vadd.f32 %v1701, %v1811
      %v1820 = vadd.f32 %v1702, %v1813
      %s1821 = scalar_lea.vmem %s3, 28
      %v1822 = vld [vmem:[%s1821] sm:$0xf]
      %1823 = vrot.lane.b32.xlu0 %v1583, 107
      %v1824 = vpop.permute.xlu0 %1823
      %1825 = vrot.lane.b32.xlu0 %v1584, 107
      %v1826 = vpop.permute.xlu0 %1825
      %1827 = vrot.lane.b32.xlu0 %v1585, 107
      %v1828 = vpop.permute.xlu0 %1827
      %1829 = vrot.lane.b32.xlu0 %v1586, 107
      %v1830 = vpop.permute.xlu0 %1829
      %1831 = vrot.lane.b32.xlu0 %v1587, 107
      %v1832 = vpop.permute.xlu0 %1831
      %v1833 = vsel %vm678, %v1824, %v1826
      %v1834 = vsel %vm678, %v1826, %v1828
      %v1835 = vsel %vm678, %v1828, %v1830
      %v1836 = vsel %vm678, %v1830, %v1832
      %v1838 = vsel %vm1008, %v1822, 0
      %v1841 = vsel %vm1012, %v1833, 0
      %v1844 = vsel %vm1012, %v1834, 0
      %v1847 = vsel %vm1012, %v1835, 0
      %v1850 = vsel %vm1012, %v1836, 0
      %1852 = vmatprep.subr.bf16.mxu0 %v1844
      %1853 = vmatpush1.bf16.msra.mxu0 %v1841
      %1854 = vmatprep.subr.bf16.mxu0 0
      %1855 = vmatpush1.bf16.msra.mxu0 0
      %1856 = vmatprep.subr.bf16.mxu0 0
      %1857 = vmatpush1.bf16.msra.mxu0 0
      %1858 = vmatprep.subr.bf16.mxu0 0
      %1859 = vmatpush1.bf16.msra.mxu0 0
      %1860 = vmatprep.subr.bf16.mxu0 0
      %1861 = vmatpush1.bf16.msra.mxu0 0
      %1862 = vmatprep.subr.bf16.mxu0 0
      %1863 = vmatpush1.bf16.msra.mxu0 0
      %1864 = vmatprep.subr.bf16.mxu0 0
      %1865 = vmatpush1.bf16.msra.mxu0 0
      %1866 = vmatprep.subr.bf16.mxu0 0
      %1867 = vmatpush1.bf16.msra.mxu0 0
      %1868 = vmatprep.subr.bf16.mxu0 0
      %1869 = vmatpush1.bf16.msra.mxu0 0
      %1870 = vmatprep.subr.bf16.mxu0 0
      %1871 = vmatpush1.bf16.msra.mxu0 0
      %1872 = vmatprep.subr.bf16.mxu0 0
      %1873 = vmatpush1.bf16.msra.mxu0 0
      %1874 = vmatprep.subr.bf16.mxu0 0
      %1875 = vmatpush1.bf16.msra.mxu0 0
      %1876 = vmatprep.subr.bf16.mxu0 0
      %1877 = vmatpush1.bf16.msra.mxu0 0
      %1878 = vmatprep.subr.bf16.mxu0 0
      %1879 = vmatpush1.bf16.msra.mxu0 0
      %1880 = vmatprep.subr.bf16.mxu0 0
      %1881 = vmatpush1.bf16.msra.mxu0 0
      %1882 = vmatprep.subr.bf16.mxu0 0
      %1883 = vmatpush1.bf16.msra.mxu0 0
      %1884 = vmatprep.mubr.bf16.mxu0 0
      %1885 = vmatmul.mubr.bf16.gmra.mrb[0].mxu0 %v1838
      %v1886 = vpop.f32.mrb[0].mxu0
      %v1887 = vadd.f32 0.0, %v1886
      %v1888 = vpop.f32.mrb[0].mxu0
      %v1889 = vadd.f32 0.0, %v1888
      %v1890 = vpop.f32.mrb[0].mxu0
      %v1891 = vpop.f32.mrb[0].mxu0
      %1892 = vdwg.mxu0
      %1893 = vmatprep.subr.bf16.mxu0 %v1850
      %1894 = vmatpush1.bf16.msra.mxu0 %v1847
      %1895 = vmatprep.subr.bf16.mxu0 0
      %1896 = vmatpush1.bf16.msra.mxu0 0
      %1897 = vmatprep.subr.bf16.mxu0 0
      %1898 = vmatpush1.bf16.msra.mxu0 0
      %1899 = vmatprep.subr.bf16.mxu0 0
      %1900 = vmatpush1.bf16.msra.mxu0 0
      %1901 = vmatprep.subr.bf16.mxu0 0
      %1902 = vmatpush1.bf16.msra.mxu0 0
      %1903 = vmatprep.subr.bf16.mxu0 0
      %1904 = vmatpush1.bf16.msra.mxu0 0
      %1905 = vmatprep.subr.bf16.mxu0 0
      %1906 = vmatpush1.bf16.msra.mxu0 0
      %1907 = vmatprep.subr.bf16.mxu0 0
      %1908 = vmatpush1.bf16.msra.mxu0 0
      %1909 = vmatprep.subr.bf16.mxu0 0
      %1910 = vmatpush1.bf16.msra.mxu0 0
      %1911 = vmatprep.subr.bf16.mxu0 0
      %1912 = vmatpush1.bf16.msra.mxu0 0
      %1913 = vmatprep.subr.bf16.mxu0 0
      %1914 = vmatpush1.bf16.msra.mxu0 0
      %1915 = vmatprep.subr.bf16.mxu0 0
      %1916 = vmatpush1.bf16.msra.mxu0 0
      %1917 = vmatprep.subr.bf16.mxu0 0
      %1918 = vmatpush1.bf16.msra.mxu0 0
      %1919 = vmatprep.subr.bf16.mxu0 0
      %1920 = vmatpush1.bf16.msra.mxu0 0
      %1921 = vmatprep.subr.bf16.mxu0 0
      %1922 = vmatpush1.bf16.msra.mxu0 0
      %1923 = vmatprep.subr.bf16.mxu0 0
      %1924 = vmatpush1.bf16.msra.mxu0 0
      %1925 = vmatprep.mubr.bf16.mxu0 0
      %1926 = vmatmul.mubr.bf16.gmra.mrb[0].mxu0 %v1838
      %v1927 = vpop.f32.mrb[0].mxu0
      %v1928 = vadd.f32 0.0, %v1927
      %v1929 = vpop.f32.mrb[0].mxu0
      %v1930 = vadd.f32 0.0, %v1929
      %v1931 = vpop.f32.mrb[0].mxu0
      %v1932 = vpop.f32.mrb[0].mxu0
      %1933 = vdwg.mxu0
      %v1934 = vadd.f32 %v1817, %v1887
      %v1935 = vadd.f32 %v1818, %v1889
      %v1936 = vadd.f32 %v1819, %v1928
      %v1937 = vadd.f32 %v1820, %v1930
      %s1938 = scalar_lea.vmem %s3, 32
      %v1939 = vld [vmem:[%s1938] sm:$0xf]
      %1940 = vrot.lane.b32.xlu0 %v1583, 106
      %v1941 = vpop.permute.xlu0 %1940
      %1942 = vrot.lane.b32.xlu0 %v1584, 106
      %v1943 = vpop.permute.xlu0 %1942
      %1944 = vrot.lane.b32.xlu0 %v1585, 106
      %v1945 = vpop.permute.xlu0 %1944
      %1946 = vrot.lane.b32.xlu0 %v1586, 106
      %v1947 = vpop.permute.xlu0 %1946
      %1948 = vrot.lane.b32.xlu0 %v1587, 106
      %v1949 = vpop.permute.xlu0 %1948
      %v1950 = vsel %vm824, %v1941, %v1943
      %v1951 = vsel %vm824, %v1943, %v1945
      %v1952 = vsel %vm824, %v1945, %v1947
      %v1953 = vsel %vm824, %v1947, %v1949
      %v1955 = vsel %vm1008, %v1939, 0
      %v1958 = vsel %vm1012, %v1950, 0
      %v1961 = vsel %vm1012, %v1951, 0
      %v1964 = vsel %vm1012, %v1952, 0
      %v1967 = vsel %vm1012, %v1953, 0
      %1969 = vmatprep.subr.bf16.mxu0 %v1961
      %1970 = vmatpush1.bf16.msra.mxu0 %v1958
      %1971 = vmatprep.subr.bf16.mxu0 0
      %1972 = vmatpush1.bf16.msra.mxu0 0
      %1973 = vmatprep.subr.bf16.mxu0 0
      %1974 = vmatpush1.bf16.msra.mxu0 0
      %1975 = vmatprep.subr.bf16.mxu0 0
      %1976 = vmatpush1.bf16.msra.mxu0 0
      %1977 = vmatprep.subr.bf16.mxu0 0
      %1978 = vmatpush1.bf16.msra.mxu0 0
      %1979 = vmatprep.subr.bf16.mxu0 0
      %1980 = vmatpush1.bf16.msra.mxu0 0
      %1981 = vmatprep.subr.bf16.mxu0 0
      %1982 = vmatpush1.bf16.msra.mxu0 0
      %1983 = vmatprep.subr.bf16.mxu0 0
      %1984 = vmatpush1.bf16.msra.mxu0 0
      %1985 = vmatprep.subr.bf16.mxu0 0
      %1986 = vmatpush1.bf16.msra.mxu0 0
      %1987 = vmatprep.subr.bf16.mxu0 0
      %1988 = vmatpush1.bf16.msra.mxu0 0
      %1989 = vmatprep.subr.bf16.mxu0 0
      %1990 = vmatpush1.bf16.msra.mxu0 0
      %1991 = vmatprep.subr.bf16.mxu0 0
      %1992 = vmatpush1.bf16.msra.mxu0 0
      %1993 = vmatprep.subr.bf16.mxu0 0
      %1994 = vmatpush1.bf16.msra.mxu0 0
      %1995 = vmatprep.subr.bf16.mxu0 0
      %1996 = vmatpush1.bf16.msra.mxu0 0
      %1997 = vmatprep.subr.bf16.mxu0 0
      %1998 = vmatpush1.bf16.msra.mxu0 0
      %1999 = vmatprep.subr.bf16.mxu0 0
      %2000 = vmatpush1.bf16.msra.mxu0 0
      %2001 = vmatprep.mubr.bf16.mxu0 0
      %2002 = vmatmul.mubr.bf16.gmra.mrb[0].mxu0 %v1955
      %v2003 = vpop.f32.mrb[0].mxu0
      %v2004 = vadd.f32 0.0, %v2003
      %v2005 = vpop.f32.mrb[0].mxu0
      %v2006 = vadd.f32 0.0, %v2005
      %v2007 = vpop.f32.mrb[0].mxu0
      %v2008 = vpop.f32.mrb[0].mxu0
      %2009 = vdwg.mxu0
      %2010 = vmatprep.subr.bf16.mxu0 %v1967
      %2011 = vmatpush1.bf16.msra.mxu0 %v1964
      %2012 = vmatprep.subr.bf16.mxu0 0
      %2013 = vmatpush1.bf16.msra.mxu0 0
      %2014 = vmatprep.subr.bf16.mxu0 0
      %2015 = vmatpush1.bf16.msra.mxu0 0
      %2016 = vmatprep.subr.bf16.mxu0 0
      %2017 = vmatpush1.bf16.msra.mxu0 0
      %2018 = vmatprep.subr.bf16.mxu0 0
      %2019 = vmatpush1.bf16.msra.mxu0 0
      %2020 = vmatprep.subr.bf16.mxu0 0
      %2021 = vmatpush1.bf16.msra.mxu0 0
      %2022 = vmatprep.subr.bf16.mxu0 0
      %2023 = vmatpush1.bf16.msra.mxu0 0
      %2024 = vmatprep.subr.bf16.mxu0 0
      %2025 = vmatpush1.bf16.msra.mxu0 0
      %2026 = vmatprep.subr.bf16.mxu0 0
      %2027 = vmatpush1.bf16.msra.mxu0 0
      %2028 = vmatprep.subr.bf16.mxu0 0
      %2029 = vmatpush1.bf16.msra.mxu0 0
      %2030 = vmatprep.subr.bf16.mxu0 0
      %2031 = vmatpush1.bf16.msra.mxu0 0
      %2032 = vmatprep.subr.bf16.mxu0 0
      %2033 = vmatpush1.bf16.msra.mxu0 0
      %2034 = vmatprep.subr.bf16.mxu0 0
      %2035 = vmatpush1.bf16.msra.mxu0 0
      %2036 = vmatprep.subr.bf16.mxu0 0
      %2037 = vmatpush1.bf16.msra.mxu0 0
      %2038 = vmatprep.subr.bf16.mxu0 0
      %2039 = vmatpush1.bf16.msra.mxu0 0
      %2040 = vmatprep.subr.bf16.mxu0 0
      %2041 = vmatpush1.bf16.msra.mxu0 0
      %2042 = vmatprep.mubr.bf16.mxu0 0
      %2043 = vmatmul.mubr.bf16.gmra.mrb[0].mxu0 %v1955
      %v2044 = vpop.f32.mrb[0].mxu0
      %v2045 = vadd.f32 0.0, %v2044
      %v2046 = vpop.f32.mrb[0].mxu0
      %v2047 = vadd.f32 0.0, %v2046
      %v2048 = vpop.f32.mrb[0].mxu0
      %v2049 = vpop.f32.mrb[0].mxu0
      %2050 = vdwg.mxu0
      %v2051 = vadd.f32 %v1934, %v2004
      %v2052 = vadd.f32 %v1935, %v2006
      %v2053 = vadd.f32 %v1936, %v2045
      %v2054 = vadd.f32 %v1937, %v2047
      %v2055 = vld [vmem:[%s4] sm:$0xff]
      %2057 = vset.pattern.permute.xlu0 0
      %2058 = vperm.xlu0 %2057, %v2055
      %v2059 = vpop.permute.xlu0 %2058
      %v2061 = vadd.f32 %v2051, %v2059
      %v2062 = vadd.f32 %v2052, %v2059
      %v2063 = vadd.f32 %v2053, %v2059
      %v2064 = vadd.f32 %v2054, %v2059
      %v2065 = vmax.f32 %v2061, 0.0
      %v2066 = vmax.f32 %v2062, 0.0
      %v2067 = vmax.f32 %v2063, 0.0
      %v2068 = vmax.f32 %v2064, 0.0
      %v2069 = vsel %vm948, %v2065, 0.0
      %v2070 = vsel %vm949, %v2066, 0.0
      %v2071 = vsel %vm950, %v2067, 0.0
      %v2072 = vsel %vm951, %v2068, 0.0
      %v2073 = vpack.c.bf16 %v2069, %v2069
      %v2074 = vpack.c.bf16 %v2070, %v2070
      %v2075 = vpack.c.bf16 %v2071, %v2071
      %v2076 = vpack.c.bf16 %v2072, %v2072
      %v2081 = vunpack.c.l.b16 %v2073
      %v2082 = vunpack.c.l.b16 %v2074
      %v2083 = vunpack.c.l.b16 %v2075
      %v2084 = vunpack.c.l.b16 %v2076
      %v2085 = vpack.c.b16 %v2082, %v2081
      %v2086 = vpack.c.b16 %v2084, %v2083
      %2089 = vst [vmem:[#allocation3 + $0x4] sm:$0xff] %v2085
      %2090 = vst [vmem:[#allocation3 + $0xc] sm:$0xff] %v2086
      %v2091 = vld [vmem:[%s5] sm:$0xf]
      %v2092 = vld [vmem:[#allocation3] sm:$0xff]
      %v2093 = vld [vmem:[#allocation3 + $0x8] sm:$0xff]
      %v2094 = vld [vmem:[#allocation3 + $0x10] sm:$0xf]
      %s2095 = scalar_lea.vmem %s5, 4
      %v2096 = vld [vmem:[%s2095] sm:$0xf]
      %v2100 = vunpack.c.l.b16 %v2092
      %v2101 = vunpack.c.h.b16 %v2092
      %v2102 = vunpack.c.l.b16 %v2093
      %v2103 = vunpack.c.h.b16 %v2093
      %v2104 = vunpack.c.l.b16 %v2094
      %v2105 = vpack.c.b16 %v2100, %v2100
      %v2106 = vpack.c.b16 %v2101, %v2101
      %v2107 = vpack.c.b16 %v2102, %v2102
      %v2108 = vpack.c.b16 %v2103, %v2103
      %v2109 = vpack.c.b16 %v2104, %v2104
      %2110 = vrot.lane.b32.xlu0 %v2105, 21
      %v2111 = vpop.permute.xlu0 %2110
      %2112 = vrot.lane.b32.xlu0 %v2106, 21
      %v2113 = vpop.permute.xlu0 %2112
      %2114 = vrot.lane.b32.xlu0 %v2107, 21
      %v2115 = vpop.permute.xlu0 %2114
      %2116 = vrot.lane.b32.xlu0 %v2108, 21
      %v2117 = vpop.permute.xlu0 %2116
      %2118 = vrot.lane.b32.xlu0 %v2109, 21
      %v2119 = vpop.permute.xlu0 %2118
      %v2120 = vsel %vm1003, %v2111, %v2113
      %v2121 = vsel %vm1003, %v2113, %v2115
      %v2122 = vsel %vm1003, %v2115, %v2117
      %v2123 = vsel %vm1003, %v2117, %v2119
      %v2125 = vsel %vm1008, %v2096, 0
      %v2128 = vsel %vm1012, %v2120, 0
      %v2131 = vsel %vm1012, %v2121, 0
      %v2134 = vsel %vm1012, %v2122, 0
      %v2137 = vsel %vm1012, %v2123, 0
      %2139 = vmatprep.subr.bf16.mxu0 %v2131
      %2140 = vmatpush1.bf16.msra.mxu0 %v2128
      %2141 = vmatprep.subr.bf16.mxu0 0
      %2142 = vmatpush1.bf16.msra.mxu0 0
      %2143 = vmatprep.subr.bf16.mxu0 0
      %2144 = vmatpush1.bf16.msra.mxu0 0
      %2145 = vmatprep.subr.bf16.mxu0 0
      %2146 = vmatpush1.bf16.msra.mxu0 0
      %2147 = vmatprep.subr.bf16.mxu0 0
      %2148 = vmatpush1.bf16.msra.mxu0 0
      %2149 = vmatprep.subr.bf16.mxu0 0
      %2150 = vmatpush1.bf16.msra.mxu0 0
      %2151 = vmatprep.subr.bf16.mxu0 0
      %2152 = vmatpush1.bf16.msra.mxu0 0
      %2153 = vmatprep.subr.bf16.mxu0 0
      %2154 = vmatpush1.bf16.msra.mxu0 0
      %2155 = vmatprep.subr.bf16.mxu0 0
      %2156 = vmatpush1.bf16.msra.mxu0 0
      %2157 = vmatprep.subr.bf16.mxu0 0
      %2158 = vmatpush1.bf16.msra.mxu0 0
      %2159 = vmatprep.subr.bf16.mxu0 0
      %2160 = vmatpush1.bf16.msra.mxu0 0
      %2161 = vmatprep.subr.bf16.mxu0 0
      %2162 = vmatpush1.bf16.msra.mxu0 0
      %2163 = vmatprep.subr.bf16.mxu0 0
      %2164 = vmatpush1.bf16.msra.mxu0 0
      %2165 = vmatprep.subr.bf16.mxu0 0
      %2166 = vmatpush1.bf16.msra.mxu0 0
      %2167 = vmatprep.subr.bf16.mxu0 0
      %2168 = vmatpush1.bf16.msra.mxu0 0
      %2169 = vmatprep.subr.bf16.mxu0 0
      %2170 = vmatpush1.bf16.msra.mxu0 0
      %2171 = vmatprep.mubr.bf16.mxu0 0
      %2172 = vmatmul.mubr.bf16.gmra.mrb[0].mxu0 %v2125
      %v2173 = vpop.f32.mrb[0].mxu0
      %v2174 = vadd.f32 0.0, %v2173
      %v2175 = vpop.f32.mrb[0].mxu0
      %v2176 = vadd.f32 0.0, %v2175
      %v2177 = vpop.f32.mrb[0].mxu0
      %v2178 = vpop.f32.mrb[0].mxu0
      %2179 = vdwg.mxu0
      %2180 = vmatprep.subr.bf16.mxu0 %v2137
      %2181 = vmatpush1.bf16.msra.mxu0 %v2134
      %2182 = vmatprep.subr.bf16.mxu0 0
      %2183 = vmatpush1.bf16.msra.mxu0 0
      %2184 = vmatprep.subr.bf16.mxu0 0
      %2185 = vmatpush1.bf16.msra.mxu0 0
      %2186 = vmatprep.subr.bf16.mxu0 0
      %2187 = vmatpush1.bf16.msra.mxu0 0
      %2188 = vmatprep.subr.bf16.mxu0 0
      %2189 = vmatpush1.bf16.msra.mxu0 0
      %2190 = vmatprep.subr.bf16.mxu0 0
      %2191 = vmatpush1.bf16.msra.mxu0 0
      %2192 = vmatprep.subr.bf16.mxu0 0
      %2193 = vmatpush1.bf16.msra.mxu0 0
      %2194 = vmatprep.subr.bf16.mxu0 0
      %2195 = vmatpush1.bf16.msra.mxu0 0
      %2196 = vmatprep.subr.bf16.mxu0 0
      %2197 = vmatpush1.bf16.msra.mxu0 0
      %2198 = vmatprep.subr.bf16.mxu0 0
      %2199 = vmatpush1.bf16.msra.mxu0 0
      %2200 = vmatprep.subr.bf16.mxu0 0
      %2201 = vmatpush1.bf16.msra.mxu0 0
      %2202 = vmatprep.subr.bf16.mxu0 0
      %2203 = vmatpush1.bf16.msra.mxu0 0
      %2204 = vmatprep.subr.bf16.mxu0 0
      %2205 = vmatpush1.bf16.msra.mxu0 0
      %2206 = vmatprep.subr.bf16.mxu0 0
      %2207 = vmatpush1.bf16.msra.mxu0 0
      %2208 = vmatprep.subr.bf16.mxu0 0
      %2209 = vmatpush1.bf16.msra.mxu0 0
      %2210 = vmatprep.subr.bf16.mxu0 0
      %2211 = vmatpush1.bf16.msra.mxu0 0
      %2212 = vmatprep.mubr.bf16.mxu0 0
      %2213 = vmatmul.mubr.bf16.gmra.mrb[0].mxu0 %v2125
      %v2214 = vpop.f32.mrb[0].mxu0
      %v2215 = vadd.f32 0.0, %v2214
      %v2216 = vpop.f32.mrb[0].mxu0
      %v2217 = vadd.f32 0.0, %v2216
      %v2218 = vpop.f32.mrb[0].mxu0
      %v2219 = vpop.f32.mrb[0].mxu0
      %2220 = vdwg.mxu0
      %2221 = vrot.lane.b32.xlu0 %v2105, 22
      %v2222 = vpop.permute.xlu0 %2221
      %2223 = vrot.lane.b32.xlu0 %v2106, 22
      %v2224 = vpop.permute.xlu0 %2223
      %2225 = vrot.lane.b32.xlu0 %v2107, 22
      %v2226 = vpop.permute.xlu0 %2225
      %2227 = vrot.lane.b32.xlu0 %v2108, 22
      %v2228 = vpop.permute.xlu0 %2227
      %2229 = vrot.lane.b32.xlu0 %v2109, 22
      %v2230 = vpop.permute.xlu0 %2229
      %v2231 = vsel %vm1117, %v2222, %v2224
      %v2232 = vsel %vm1117, %v2224, %v2226
      %v2233 = vsel %vm1117, %v2226, %v2228
      %v2234 = vsel %vm1117, %v2228, %v2230
      %v2236 = vsel %vm1008, %v2091, 0
      %v2239 = vsel %vm1012, %v2231, 0
      %v2242 = vsel %vm1012, %v2232, 0
      %v2245 = vsel %vm1012, %v2233, 0
      %v2248 = vsel %vm1012, %v2234, 0
      %2250 = vmatprep.subr.bf16.mxu0 %v2242
      %2251 = vmatpush1.bf16.msra.mxu0 %v2239
      %2252 = vmatprep.subr.bf16.mxu0 0
      %2253 = vmatpush1.bf16.msra.mxu0 0
      %2254 = vmatprep.subr.bf16.mxu0 0
      %2255 = vmatpush1.bf16.msra.mxu0 0
      %2256 = vmatprep.subr.bf16.mxu0 0
      %2257 = vmatpush1.bf16.msra.mxu0 0
      %2258 = vmatprep.subr.bf16.mxu0 0
      %2259 = vmatpush1.bf16.msra.mxu0 0
      %2260 = vmatprep.subr.bf16.mxu0 0
      %2261 = vmatpush1.bf16.msra.mxu0 0
      %2262 = vmatprep.subr.bf16.mxu0 0
      %2263 = vmatpush1.bf16.msra.mxu0 0
      %2264 = vmatprep.subr.bf16.mxu0 0
      %2265 = vmatpush1.bf16.msra.mxu0 0
      %2266 = vmatprep.subr.bf16.mxu0 0
      %2267 = vmatpush1.bf16.msra.mxu0 0
      %2268 = vmatprep.subr.bf16.mxu0 0
      %2269 = vmatpush1.bf16.msra.mxu0 0
      %2270 = vmatprep.subr.bf16.mxu0 0
      %2271 = vmatpush1.bf16.msra.mxu0 0
      %2272 = vmatprep.subr.bf16.mxu0 0
      %2273 = vmatpush1.bf16.msra.mxu0 0
      %2274 = vmatprep.subr.bf16.mxu0 0
      %2275 = vmatpush1.bf16.msra.mxu0 0
      %2276 = vmatprep.subr.bf16.mxu0 0
      %2277 = vmatpush1.bf16.msra.mxu0 0
      %2278 = vmatprep.subr.bf16.mxu0 0
      %2279 = vmatpush1.bf16.msra.mxu0 0
      %2280 = vmatprep.subr.bf16.mxu0 0
      %2281 = vmatpush1.bf16.msra.mxu0 0
      %2282 = vmatprep.mubr.bf16.mxu0 0
      %2283 = vmatmul.mubr.bf16.gmra.mrb[0].mxu0 %v2236
      %v2284 = vpop.f32.mrb[0].mxu0
      %v2285 = vadd.f32 %v2174, %v2284
      %v2286 = vpop.f32.mrb[0].mxu0
      %v2287 = vadd.f32 %v2176, %v2286
      %v2288 = vpop.f32.mrb[0].mxu0
      %v2289 = vpop.f32.mrb[0].mxu0
      %2290 = vdwg.mxu0
      %2291 = vmatprep.subr.bf16.mxu0 %v2248
      %2292 = vmatpush1.bf16.msra.mxu0 %v2245
      %2293 = vmatprep.subr.bf16.mxu0 0
      %2294 = vmatpush1.bf16.msra.mxu0 0
      %2295 = vmatprep.subr.bf16.mxu0 0
      %2296 = vmatpush1.bf16.msra.mxu0 0
      %2297 = vmatprep.subr.bf16.mxu0 0
      %2298 = vmatpush1.bf16.msra.mxu0 0
      %2299 = vmatprep.subr.bf16.mxu0 0
      %2300 = vmatpush1.bf16.msra.mxu0 0
      %2301 = vmatprep.subr.bf16.mxu0 0
      %2302 = vmatpush1.bf16.msra.mxu0 0
      %2303 = vmatprep.subr.bf16.mxu0 0
      %2304 = vmatpush1.bf16.msra.mxu0 0
      %2305 = vmatprep.subr.bf16.mxu0 0
      %2306 = vmatpush1.bf16.msra.mxu0 0
      %2307 = vmatprep.subr.bf16.mxu0 0
      %2308 = vmatpush1.bf16.msra.mxu0 0
      %2309 = vmatprep.subr.bf16.mxu0 0
      %2310 = vmatpush1.bf16.msra.mxu0 0
      %2311 = vmatprep.subr.bf16.mxu0 0
      %2312 = vmatpush1.bf16.msra.mxu0 0
      %2313 = vmatprep.subr.bf16.mxu0 0
      %2314 = vmatpush1.bf16.msra.mxu0 0
      %2315 = vmatprep.subr.bf16.mxu0 0
      %2316 = vmatpush1.bf16.msra.mxu0 0
      %2317 = vmatprep.subr.bf16.mxu0 0
      %2318 = vmatpush1.bf16.msra.mxu0 0
      %2319 = vmatprep.subr.bf16.mxu0 0
      %2320 = vmatpush1.bf16.msra.mxu0 0
      %2321 = vmatprep.subr.bf16.mxu0 0
      %2322 = vmatpush1.bf16.msra.mxu0 0
      %2323 = vmatprep.mubr.bf16.mxu0 0
      %2324 = vmatmul.mubr.bf16.gmra.mrb[0].mxu0 %v2236
      %v2325 = vpop.f32.mrb[0].mxu0
      %v2326 = vadd.f32 %v2215, %v2325
      %v2327 = vpop.f32.mrb[0].mxu0
      %v2328 = vadd.f32 %v2217, %v2327
      %v2329 = vpop.f32.mrb[0].mxu0
      %v2330 = vpop.f32.mrb[0].mxu0
      %2331 = vdwg.mxu0
      %s2332 = scalar_lea.vmem %s5, 8
      %v2333 = vld [vmem:[%s2332] sm:$0xf]
      %2334 = vrot.lane.b32.xlu0 %v2105, 20
      %v2335 = vpop.permute.xlu0 %2334
      %2336 = vrot.lane.b32.xlu0 %v2106, 20
      %v2337 = vpop.permute.xlu0 %2336
      %2338 = vrot.lane.b32.xlu0 %v2107, 20
      %v2339 = vpop.permute.xlu0 %2338
      %2340 = vrot.lane.b32.xlu0 %v2108, 20
      %v2341 = vpop.permute.xlu0 %2340
      %2342 = vrot.lane.b32.xlu0 %v2109, 20
      %v2343 = vpop.permute.xlu0 %2342
      %v2344 = vsel %vm1231, %v2335, %v2337
      %v2345 = vsel %vm1231, %v2337, %v2339
      %v2346 = vsel %vm1231, %v2339, %v2341
      %v2347 = vsel %vm1231, %v2341, %v2343
      %v2349 = vsel %vm1008, %v2333, 0
      %v2352 = vsel %vm1012, %v2344, 0
      %v2355 = vsel %vm1012, %v2345, 0
      %v2358 = vsel %vm1012, %v2346, 0
      %v2361 = vsel %vm1012, %v2347, 0
      %2363 = vmatprep.subr.bf16.mxu0 %v2355
      %2364 = vmatpush1.bf16.msra.mxu0 %v2352
      %2365 = vmatprep.subr.bf16.mxu0 0
      %2366 = vmatpush1.bf16.msra.mxu0 0
      %2367 = vmatprep.subr.bf16.mxu0 0
      %2368 = vmatpush1.bf16.msra.mxu0 0
      %2369 = vmatprep.subr.bf16.mxu0 0
      %2370 = vmatpush1.bf16.msra.mxu0 0
      %2371 = vmatprep.subr.bf16.mxu0 0
      %2372 = vmatpush1.bf16.msra.mxu0 0
      %2373 = vmatprep.subr.bf16.mxu0 0
      %2374 = vmatpush1.bf16.msra.mxu0 0
      %2375 = vmatprep.subr.bf16.mxu0 0
      %2376 = vmatpush1.bf16.msra.mxu0 0
      %2377 = vmatprep.subr.bf16.mxu0 0
      %2378 = vmatpush1.bf16.msra.mxu0 0
      %2379 = vmatprep.subr.bf16.mxu0 0
      %2380 = vmatpush1.bf16.msra.mxu0 0
      %2381 = vmatprep.subr.bf16.mxu0 0
      %2382 = vmatpush1.bf16.msra.mxu0 0
      %2383 = vmatprep.subr.bf16.mxu0 0
      %2384 = vmatpush1.bf16.msra.mxu0 0
      %2385 = vmatprep.subr.bf16.mxu0 0
      %2386 = vmatpush1.bf16.msra.mxu0 0
      %2387 = vmatprep.subr.bf16.mxu0 0
      %2388 = vmatpush1.bf16.msra.mxu0 0
      %2389 = vmatprep.subr.bf16.mxu0 0
      %2390 = vmatpush1.bf16.msra.mxu0 0
      %2391 = vmatprep.subr.bf16.mxu0 0
      %2392 = vmatpush1.bf16.msra.mxu0 0
      %2393 = vmatprep.subr.bf16.mxu0 0
      %2394 = vmatpush1.bf16.msra.mxu0 0
      %2395 = vmatprep.mubr.bf16.mxu0 0
      %2396 = vmatmul.mubr.bf16.gmra.mrb[0].mxu0 %v2349
      %v2397 = vpop.f32.mrb[0].mxu0
      %v2398 = vadd.f32 0.0, %v2397
      %v2399 = vpop.f32.mrb[0].mxu0
      %v2400 = vadd.f32 0.0, %v2399
      %v2401 = vpop.f32.mrb[0].mxu0
      %v2402 = vpop.f32.mrb[0].mxu0
      %2403 = vdwg.mxu0
      %2404 = vmatprep.subr.bf16.mxu0 %v2361
      %2405 = vmatpush1.bf16.msra.mxu0 %v2358
      %2406 = vmatprep.subr.bf16.mxu0 0
      %2407 = vmatpush1.bf16.msra.mxu0 0
      %2408 = vmatprep.subr.bf16.mxu0 0
      %2409 = vmatpush1.bf16.msra.mxu0 0
      %2410 = vmatprep.subr.bf16.mxu0 0
      %2411 = vmatpush1.bf16.msra.mxu0 0
      %2412 = vmatprep.subr.bf16.mxu0 0
      %2413 = vmatpush1.bf16.msra.mxu0 0
      %2414 = vmatprep.subr.bf16.mxu0 0
      %2415 = vmatpush1.bf16.msra.mxu0 0
      %2416 = vmatprep.subr.bf16.mxu0 0
      %2417 = vmatpush1.bf16.msra.mxu0 0
      %2418 = vmatprep.subr.bf16.mxu0 0
      %2419 = vmatpush1.bf16.msra.mxu0 0
      %2420 = vmatprep.subr.bf16.mxu0 0
      %2421 = vmatpush1.bf16.msra.mxu0 0
      %2422 = vmatprep.subr.bf16.mxu0 0
      %2423 = vmatpush1.bf16.msra.mxu0 0
      %2424 = vmatprep.subr.bf16.mxu0 0
      %2425 = vmatpush1.bf16.msra.mxu0 0
      %2426 = vmatprep.subr.bf16.mxu0 0
      %2427 = vmatpush1.bf16.msra.mxu0 0
      %2428 = vmatprep.subr.bf16.mxu0 0
      %2429 = vmatpush1.bf16.msra.mxu0 0
      %2430 = vmatprep.subr.bf16.mxu0 0
      %2431 = vmatpush1.bf16.msra.mxu0 0
      %2432 = vmatprep.subr.bf16.mxu0 0
      %2433 = vmatpush1.bf16.msra.mxu0 0
      %2434 = vmatprep.subr.bf16.mxu0 0
      %2435 = vmatpush1.bf16.msra.mxu0 0
      %2436 = vmatprep.mubr.bf16.mxu0 0
      %2437 = vmatmul.mubr.bf16.gmra.mrb[0].mxu0 %v2349
      %v2438 = vpop.f32.mrb[0].mxu0
      %v2439 = vadd.f32 0.0, %v2438
      %v2440 = vpop.f32.mrb[0].mxu0
      %v2441 = vadd.f32 0.0, %v2440
      %v2442 = vpop.f32.mrb[0].mxu0
      %v2443 = vpop.f32.mrb[0].mxu0
      %2444 = vdwg.mxu0
      %v2445 = vadd.f32 %v2285, %v2398
      %v2446 = vadd.f32 %v2287, %v2400
      %v2447 = vadd.f32 %v2326, %v2439
      %v2448 = vadd.f32 %v2328, %v2441
      %s2449 = scalar_lea.vmem %s5, 12
      %v2450 = vld [vmem:[%s2449] sm:$0xf]
      %2451 = vrot.lane.b32.xlu0 %v2105, 1
      %v2452 = vpop.permute.xlu0 %2451
      %2453 = vrot.lane.b32.xlu0 %v2106, 1
      %v2454 = vpop.permute.xlu0 %2453
      %2455 = vrot.lane.b32.xlu0 %v2107, 1
      %v2456 = vpop.permute.xlu0 %2455
      %2457 = vrot.lane.b32.xlu0 %v2108, 1
      %v2458 = vpop.permute.xlu0 %2457
      %2459 = vrot.lane.b32.xlu0 %v2109, 1
      %v2460 = vpop.permute.xlu0 %2459
      %v2461 = vsel %vm1349, %v2452, %v2454
      %v2462 = vsel %vm1349, %v2454, %v2456
      %v2463 = vsel %vm1349, %v2456, %v2458
      %v2464 = vsel %vm1349, %v2458, %v2460
      %v2466 = vsel %vm1008, %v2450, 0
      %v2469 = vsel %vm1012, %v2461, 0
      %v2472 = vsel %vm1012, %v2462, 0
      %v2475 = vsel %vm1012, %v2463, 0
      %v2478 = vsel %vm1012, %v2464, 0
      %2480 = vmatprep.subr.bf16.mxu0 %v2472
      %2481 = vmatpush1.bf16.msra.mxu0 %v2469
      %2482 = vmatprep.subr.bf16.mxu0 0
      %2483 = vmatpush1.bf16.msra.mxu0 0
      %2484 = vmatprep.subr.bf16.mxu0 0
      %2485 = vmatpush1.bf16.msra.mxu0 0
      %2486 = vmatprep.subr.bf16.mxu0 0
      %2487 = vmatpush1.bf16.msra.mxu0 0
      %2488 = vmatprep.subr.bf16.mxu0 0
      %2489 = vmatpush1.bf16.msra.mxu0 0
      %2490 = vmatprep.subr.bf16.mxu0 0
      %2491 = vmatpush1.bf16.msra.mxu0 0
      %2492 = vmatprep.subr.bf16.mxu0 0
      %2493 = vmatpush1.bf16.msra.mxu0 0
      %2494 = vmatprep.subr.bf16.mxu0 0
      %2495 = vmatpush1.bf16.msra.mxu0 0
      %2496 = vmatprep.subr.bf16.mxu0 0
      %2497 = vmatpush1.bf16.msra.mxu0 0
      %2498 = vmatprep.subr.bf16.mxu0 0
      %2499 = vmatpush1.bf16.msra.mxu0 0
      %2500 = vmatprep.subr.bf16.mxu0 0
      %2501 = vmatpush1.bf16.msra.mxu0 0
      %2502 = vmatprep.subr.bf16.mxu0 0
      %2503 = vmatpush1.bf16.msra.mxu0 0
      %2504 = vmatprep.subr.bf16.mxu0 0
      %2505 = vmatpush1.bf16.msra.mxu0 0
      %2506 = vmatprep.subr.bf16.mxu0 0
      %2507 = vmatpush1.bf16.msra.mxu0 0
      %2508 = vmatprep.subr.bf16.mxu0 0
      %2509 = vmatpush1.bf16.msra.mxu0 0
      %2510 = vmatprep.subr.bf16.mxu0 0
      %2511 = vmatpush1.bf16.msra.mxu0 0
      %2512 = vmatprep.mubr.bf16.mxu0 0
      %2513 = vmatmul.mubr.bf16.gmra.mrb[0].mxu0 %v2466
      %v2514 = vpop.f32.mrb[0].mxu0
      %v2515 = vadd.f32 0.0, %v2514
      %v2516 = vpop.f32.mrb[0].mxu0
      %v2517 = vadd.f32 0.0, %v2516
      %v2518 = vpop.f32.mrb[0].mxu0
      %v2519 = vpop.f32.mrb[0].mxu0
      %2520 = vdwg.mxu0
      %2521 = vmatprep.subr.bf16.mxu0 %v2478
      %2522 = vmatpush1.bf16.msra.mxu0 %v2475
      %2523 = vmatprep.subr.bf16.mxu0 0
      %2524 = vmatpush1.bf16.msra.mxu0 0
      %2525 = vmatprep.subr.bf16.mxu0 0
      %2526 = vmatpush1.bf16.msra.mxu0 0
      %2527 = vmatprep.subr.bf16.mxu0 0
      %2528 = vmatpush1.bf16.msra.mxu0 0
      %2529 = vmatprep.subr.bf16.mxu0 0
      %2530 = vmatpush1.bf16.msra.mxu0 0
      %2531 = vmatprep.subr.bf16.mxu0 0
      %2532 = vmatpush1.bf16.msra.mxu0 0
      %2533 = vmatprep.subr.bf16.mxu0 0
      %2534 = vmatpush1.bf16.msra.mxu0 0
      %2535 = vmatprep.subr.bf16.mxu0 0
      %2536 = vmatpush1.bf16.msra.mxu0 0
      %2537 = vmatprep.subr.bf16.mxu0 0
      %2538 = vmatpush1.bf16.msra.mxu0 0
      %2539 = vmatprep.subr.bf16.mxu0 0
      %2540 = vmatpush1.bf16.msra.mxu0 0
      %2541 = vmatprep.subr.bf16.mxu0 0
      %2542 = vmatpush1.bf16.msra.mxu0 0
      %2543 = vmatprep.subr.bf16.mxu0 0
      %2544 = vmatpush1.bf16.msra.mxu0 0
      %2545 = vmatprep.subr.bf16.mxu0 0
      %2546 = vmatpush1.bf16.msra.mxu0 0
      %2547 = vmatprep.subr.bf16.mxu0 0
      %2548 = vmatpush1.bf16.msra.mxu0 0
      %2549 = vmatprep.subr.bf16.mxu0 0
      %2550 = vmatpush1.bf16.msra.mxu0 0
      %2551 = vmatprep.subr.bf16.mxu0 0
      %2552 = vmatpush1.bf16.msra.mxu0 0
      %2553 = vmatprep.mubr.bf16.mxu0 0
      %2554 = vmatmul.mubr.bf16.gmra.mrb[0].mxu0 %v2466
      %v2555 = vpop.f32.mrb[0].mxu0
      %v2556 = vadd.f32 0.0, %v2555
      %v2557 = vpop.f32.mrb[0].mxu0
      %v2558 = vadd.f32 0.0, %v2557
      %v2559 = vpop.f32.mrb[0].mxu0
      %v2560 = vpop.f32.mrb[0].mxu0
      %2561 = vdwg.mxu0
      %v2562 = vadd.f32 %v2445, %v2515
      %v2563 = vadd.f32 %v2446, %v2517
      %v2564 = vadd.f32 %v2447, %v2556
      %v2565 = vadd.f32 %v2448, %v2558
      %s2566 = scalar_lea.vmem %s5, 16
      %v2567 = vld [vmem:[%s2566] sm:$0xf]
      %v2568 = vld [vmem:[#allocation3 + $0x4] sm:$0xff]
      %v2569 = vld [vmem:[#allocation3 + $0xc] sm:$0xff]
      %v2572 = vunpack.c.l.b16 %v2568
      %v2573 = vunpack.c.h.b16 %v2568
      %v2574 = vunpack.c.l.b16 %v2569
      %v2575 = vunpack.c.h.b16 %v2569
      %v2576 = vpack.c.b16 %v2572, %v2572
      %v2577 = vpack.c.b16 %v2573, %v2573
      %v2578 = vpack.c.b16 %v2574, %v2574
      %v2579 = vpack.c.b16 %v2575, %v2575
      %v2581 = vsel %vm1008, %v2567, 0
      %v2584 = vsel %vm1012, %v2576, 0
      %v2587 = vsel %vm1012, %v2577, 0
      %v2590 = vsel %vm1012, %v2578, 0
      %v2593 = vsel %vm1012, %v2579, 0
      %2595 = vmatprep.subr.bf16.mxu0 %v2587
      %2596 = vmatpush1.bf16.msra.mxu0 %v2584
      %2597 = vmatprep.subr.bf16.mxu0 0
      %2598 = vmatpush1.bf16.msra.mxu0 0
      %2599 = vmatprep.subr.bf16.mxu0 0
      %2600 = vmatpush1.bf16.msra.mxu0 0
      %2601 = vmatprep.subr.bf16.mxu0 0
      %2602 = vmatpush1.bf16.msra.mxu0 0
      %2603 = vmatprep.subr.bf16.mxu0 0
      %2604 = vmatpush1.bf16.msra.mxu0 0
      %2605 = vmatprep.subr.bf16.mxu0 0
      %2606 = vmatpush1.bf16.msra.mxu0 0
      %2607 = vmatprep.subr.bf16.mxu0 0
      %2608 = vmatpush1.bf16.msra.mxu0 0
      %2609 = vmatprep.subr.bf16.mxu0 0
      %2610 = vmatpush1.bf16.msra.mxu0 0
      %2611 = vmatprep.subr.bf16.mxu0 0
      %2612 = vmatpush1.bf16.msra.mxu0 0
      %2613 = vmatprep.subr.bf16.mxu0 0
      %2614 = vmatpush1.bf16.msra.mxu0 0
      %2615 = vmatprep.subr.bf16.mxu0 0
      %2616 = vmatpush1.bf16.msra.mxu0 0
      %2617 = vmatprep.subr.bf16.mxu0 0
      %2618 = vmatpush1.bf16.msra.mxu0 0
      %2619 = vmatprep.subr.bf16.mxu0 0
      %2620 = vmatpush1.bf16.msra.mxu0 0
      %2621 = vmatprep.subr.bf16.mxu0 0
      %2622 = vmatpush1.bf16.msra.mxu0 0
      %2623 = vmatprep.subr.bf16.mxu0 0
      %2624 = vmatpush1.bf16.msra.mxu0 0
      %2625 = vmatprep.subr.bf16.mxu0 0
      %2626 = vmatpush1.bf16.msra.mxu0 0
      %2627 = vmatprep.mubr.bf16.mxu0 0
      %2628 = vmatmul.mubr.bf16.gmra.mrb[0].mxu0 %v2581
      %v2629 = vpop.f32.mrb[0].mxu0
      %v2630 = vadd.f32 0.0, %v2629
      %v2631 = vpop.f32.mrb[0].mxu0
      %v2632 = vadd.f32 0.0, %v2631
      %v2633 = vpop.f32.mrb[0].mxu0
      %v2634 = vpop.f32.mrb[0].mxu0
      %2635 = vdwg.mxu0
      %2636 = vmatprep.subr.bf16.mxu0 %v2593
      %2637 = vmatpush1.bf16.msra.mxu0 %v2590
      %2638 = vmatprep.subr.bf16.mxu0 0
      %2639 = vmatpush1.bf16.msra.mxu0 0
      %2640 = vmatprep.subr.bf16.mxu0 0
      %2641 = vmatpush1.bf16.msra.mxu0 0
      %2642 = vmatprep.subr.bf16.mxu0 0
      %2643 = vmatpush1.bf16.msra.mxu0 0
      %2644 = vmatprep.subr.bf16.mxu0 0
      %2645 = vmatpush1.bf16.msra.mxu0 0
      %2646 = vmatprep.subr.bf16.mxu0 0
      %2647 = vmatpush1.bf16.msra.mxu0 0
      %2648 = vmatprep.subr.bf16.mxu0 0
      %2649 = vmatpush1.bf16.msra.mxu0 0
      %2650 = vmatprep.subr.bf16.mxu0 0
      %2651 = vmatpush1.bf16.msra.mxu0 0
      %2652 = vmatprep.subr.bf16.mxu0 0
      %2653 = vmatpush1.bf16.msra.mxu0 0
      %2654 = vmatprep.subr.bf16.mxu0 0
      %2655 = vmatpush1.bf16.msra.mxu0 0
      %2656 = vmatprep.subr.bf16.mxu0 0
      %2657 = vmatpush1.bf16.msra.mxu0 0
      %2658 = vmatprep.subr.bf16.mxu0 0
      %2659 = vmatpush1.bf16.msra.mxu0 0
      %2660 = vmatprep.subr.bf16.mxu0 0
      %2661 = vmatpush1.bf16.msra.mxu0 0
      %2662 = vmatprep.subr.bf16.mxu0 0
      %2663 = vmatpush1.bf16.msra.mxu0 0
      %2664 = vmatprep.subr.bf16.mxu0 0
      %2665 = vmatpush1.bf16.msra.mxu0 0
      %2666 = vmatprep.subr.bf16.mxu0 0
      %2667 = vmatpush1.bf16.msra.mxu0 0
      %2668 = vmatprep.mubr.bf16.mxu0 0
      %2669 = vmatmul.mubr.bf16.gmra.mrb[0].mxu0 %v2581
      %v2670 = vpop.f32.mrb[0].mxu0
      %v2671 = vadd.f32 0.0, %v2670
      %v2672 = vpop.f32.mrb[0].mxu0
      %v2673 = vadd.f32 0.0, %v2672
      %v2674 = vpop.f32.mrb[0].mxu0
      %v2675 = vpop.f32.mrb[0].mxu0
      %2676 = vdwg.mxu0
      %v2677 = vadd.f32 %v2562, %v2630
      %v2678 = vadd.f32 %v2563, %v2632
      %v2679 = vadd.f32 %v2564, %v2671
      %v2680 = vadd.f32 %v2565, %v2673
      %s2681 = scalar_lea.vmem %s5, 20
      %v2682 = vld [vmem:[%s2681] sm:$0xf]
      %v2683 = vld [vmem:[#allocation3 + $0x4] sm:$0xff]
      %v2684 = vld [vmem:[#allocation3 + $0xc] sm:$0xff]
      %v2685 = vld [vmem:[#allocation3 + $0x14] sm:$0xf]
      %v2689 = vunpack.c.l.b16 %v2683
      %v2690 = vunpack.c.h.b16 %v2683
      %v2691 = vunpack.c.l.b16 %v2684
      %v2692 = vunpack.c.h.b16 %v2684
      %v2693 = vunpack.c.l.b16 %v2685
      %v2694 = vpack.c.b16 %v2689, %v2689
      %v2695 = vpack.c.b16 %v2690, %v2690
      %v2696 = vpack.c.b16 %v2691, %v2691
      %v2697 = vpack.c.b16 %v2692, %v2692
      %v2698 = vpack.c.b16 %v2693, %v2693
      %2699 = vrot.lane.b32.xlu0 %v2694, 127
      %v2700 = vpop.permute.xlu0 %2699
      %2701 = vrot.lane.b32.xlu0 %v2695, 127
      %v2702 = vpop.permute.xlu0 %2701
      %2703 = vrot.lane.b32.xlu0 %v2696, 127
      %v2704 = vpop.permute.xlu0 %2703
      %2705 = vrot.lane.b32.xlu0 %v2697, 127
      %v2706 = vpop.permute.xlu0 %2705
      %2707 = vrot.lane.b32.xlu0 %v2698, 127
      %v2708 = vpop.permute.xlu0 %2707
      %v2709 = vsel %vm419, %v2700, %v2702
      %v2710 = vsel %vm419, %v2702, %v2704
      %v2711 = vsel %vm419, %v2704, %v2706
      %v2712 = vsel %vm419, %v2706, %v2708
      %v2714 = vsel %vm1008, %v2682, 0
      %v2717 = vsel %vm1012, %v2709, 0
      %v2720 = vsel %vm1012, %v2710, 0
      %v2723 = vsel %vm1012, %v2711, 0
      %v2726 = vsel %vm1012, %v2712, 0
      %2728 = vmatprep.subr.bf16.mxu0 %v2720
      %2729 = vmatpush1.bf16.msra.mxu0 %v2717
      %2730 = vmatprep.subr.bf16.mxu0 0
      %2731 = vmatpush1.bf16.msra.mxu0 0
      %2732 = vmatprep.subr.bf16.mxu0 0
      %2733 = vmatpush1.bf16.msra.mxu0 0
      %2734 = vmatprep.subr.bf16.mxu0 0
      %2735 = vmatpush1.bf16.msra.mxu0 0
      %2736 = vmatprep.subr.bf16.mxu0 0
      %2737 = vmatpush1.bf16.msra.mxu0 0
      %2738 = vmatprep.subr.bf16.mxu0 0
      %2739 = vmatpush1.bf16.msra.mxu0 0
      %2740 = vmatprep.subr.bf16.mxu0 0
      %2741 = vmatpush1.bf16.msra.mxu0 0
      %2742 = vmatprep.subr.bf16.mxu0 0
      %2743 = vmatpush1.bf16.msra.mxu0 0
      %2744 = vmatprep.subr.bf16.mxu0 0
      %2745 = vmatpush1.bf16.msra.mxu0 0
      %2746 = vmatprep.subr.bf16.mxu0 0
      %2747 = vmatpush1.bf16.msra.mxu0 0
      %2748 = vmatprep.subr.bf16.mxu0 0
      %2749 = vmatpush1.bf16.msra.mxu0 0
      %2750 = vmatprep.subr.bf16.mxu0 0
      %2751 = vmatpush1.bf16.msra.mxu0 0
      %2752 = vmatprep.subr.bf16.mxu0 0
      %2753 = vmatpush1.bf16.msra.mxu0 0
      %2754 = vmatprep.subr.bf16.mxu0 0
      %2755 = vmatpush1.bf16.msra.mxu0 0
      %2756 = vmatprep.subr.bf16.mxu0 0
      %2757 = vmatpush1.bf16.msra.mxu0 0
      %2758 = vmatprep.subr.bf16.mxu0 0
      %2759 = vmatpush1.bf16.msra.mxu0 0
      %2760 = vmatprep.mubr.bf16.mxu0 0
      %2761 = vmatmul.mubr.bf16.gmra.mrb[0].mxu0 %v2714
      %v2762 = vpop.f32.mrb[0].mxu0
      %v2763 = vadd.f32 0.0, %v2762
      %v2764 = vpop.f32.mrb[0].mxu0
      %v2765 = vadd.f32 0.0, %v2764
      %v2766 = vpop.f32.mrb[0].mxu0
      %v2767 = vpop.f32.mrb[0].mxu0
      %2768 = vdwg.mxu0
      %2769 = vmatprep.subr.bf16.mxu0 %v2726
      %2770 = vmatpush1.bf16.msra.mxu0 %v2723
      %2771 = vmatprep.subr.bf16.mxu0 0
      %2772 = vmatpush1.bf16.msra.mxu0 0
      %2773 = vmatprep.subr.bf16.mxu0 0
      %2774 = vmatpush1.bf16.msra.mxu0 0
      %2775 = vmatprep.subr.bf16.mxu0 0
      %2776 = vmatpush1.bf16.msra.mxu0 0
      %2777 = vmatprep.subr.bf16.mxu0 0
      %2778 = vmatpush1.bf16.msra.mxu0 0
      %2779 = vmatprep.subr.bf16.mxu0 0
      %2780 = vmatpush1.bf16.msra.mxu0 0
      %2781 = vmatprep.subr.bf16.mxu0 0
      %2782 = vmatpush1.bf16.msra.mxu0 0
      %2783 = vmatprep.subr.bf16.mxu0 0
      %2784 = vmatpush1.bf16.msra.mxu0 0
      %2785 = vmatprep.subr.bf16.mxu0 0
      %2786 = vmatpush1.bf16.msra.mxu0 0
      %2787 = vmatprep.subr.bf16.mxu0 0
      %2788 = vmatpush1.bf16.msra.mxu0 0
      %2789 = vmatprep.subr.bf16.mxu0 0
      %2790 = vmatpush1.bf16.msra.mxu0 0
      %2791 = vmatprep.subr.bf16.mxu0 0
      %2792 = vmatpush1.bf16.msra.mxu0 0
      %2793 = vmatprep.subr.bf16.mxu0 0
      %2794 = vmatpush1.bf16.msra.mxu0 0
      %2795 = vmatprep.subr.bf16.mxu0 0
      %2796 = vmatpush1.bf16.msra.mxu0 0
      %2797 = vmatprep.subr.bf16.mxu0 0
      %2798 = vmatpush1.bf16.msra.mxu0 0
      %2799 = vmatprep.subr.bf16.mxu0 0
      %2800 = vmatpush1.bf16.msra.mxu0 0
      %2801 = vmatprep.mubr.bf16.mxu0 0
      %2802 = vmatmul.mubr.bf16.gmra.mrb[0].mxu0 %v2714
      %v2803 = vpop.f32.mrb[0].mxu0
      %v2804 = vadd.f32 0.0, %v2803
      %v2805 = vpop.f32.mrb[0].mxu0
      %v2806 = vadd.f32 0.0, %v2805
      %v2807 = vpop.f32.mrb[0].mxu0
      %v2808 = vpop.f32.mrb[0].mxu0
      %2809 = vdwg.mxu0
      %v2810 = vadd.f32 %v2677, %v2763
      %v2811 = vadd.f32 %v2678, %v2765
      %v2812 = vadd.f32 %v2679, %v2804
      %v2813 = vadd.f32 %v2680, %v2806
      %s2814 = scalar_lea.vmem %s5, 24
      %v2815 = vld [vmem:[%s2814] sm:$0xf]
      %2816 = vrot.lane.b32.xlu0 %v2694, 108
      %v2817 = vpop.permute.xlu0 %2816
      %2818 = vrot.lane.b32.xlu0 %v2695, 108
      %v2819 = vpop.permute.xlu0 %2818
      %2820 = vrot.lane.b32.xlu0 %v2696, 108
      %v2821 = vpop.permute.xlu0 %2820
      %2822 = vrot.lane.b32.xlu0 %v2697, 108
      %v2823 = vpop.permute.xlu0 %2822
      %2824 = vrot.lane.b32.xlu0 %v2698, 108
      %v2825 = vpop.permute.xlu0 %2824
      %v2826 = vsel %vm1715, %v2817, %v2819
      %v2827 = vsel %vm1715, %v2819, %v2821
      %v2828 = vsel %vm1715, %v2821, %v2823
      %v2829 = vsel %vm1715, %v2823, %v2825
      %v2831 = vsel %vm1008, %v2815, 0
      %v2834 = vsel %vm1012, %v2826, 0
      %v2837 = vsel %vm1012, %v2827, 0
      %v2840 = vsel %vm1012, %v2828, 0
      %v2843 = vsel %vm1012, %v2829, 0
      %2845 = vmatprep.subr.bf16.mxu0 %v2837
      %2846 = vmatpush1.bf16.msra.mxu0 %v2834
      %2847 = vmatprep.subr.bf16.mxu0 0
      %2848 = vmatpush1.bf16.msra.mxu0 0
      %2849 = vmatprep.subr.bf16.mxu0 0
      %2850 = vmatpush1.bf16.msra.mxu0 0
      %2851 = vmatprep.subr.bf16.mxu0 0
      %2852 = vmatpush1.bf16.msra.mxu0 0
      %2853 = vmatprep.subr.bf16.mxu0 0
      %2854 = vmatpush1.bf16.msra.mxu0 0
      %2855 = vmatprep.subr.bf16.mxu0 0
      %2856 = vmatpush1.bf16.msra.mxu0 0
      %2857 = vmatprep.subr.bf16.mxu0 0
      %2858 = vmatpush1.bf16.msra.mxu0 0
      %2859 = vmatprep.subr.bf16.mxu0 0
      %2860 = vmatpush1.bf16.msra.mxu0 0
      %2861 = vmatprep.subr.bf16.mxu0 0
      %2862 = vmatpush1.bf16.msra.mxu0 0
      %2863 = vmatprep.subr.bf16.mxu0 0
      %2864 = vmatpush1.bf16.msra.mxu0 0
      %2865 = vmatprep.subr.bf16.mxu0 0
      %2866 = vmatpush1.bf16.msra.mxu0 0
      %2867 = vmatprep.subr.bf16.mxu0 0
      %2868 = vmatpush1.bf16.msra.mxu0 0
      %2869 = vmatprep.subr.bf16.mxu0 0
      %2870 = vmatpush1.bf16.msra.mxu0 0
      %2871 = vmatprep.subr.bf16.mxu0 0
      %2872 = vmatpush1.bf16.msra.mxu0 0
      %2873 = vmatprep.subr.bf16.mxu0 0
      %2874 = vmatpush1.bf16.msra.mxu0 0
      %2875 = vmatprep.subr.bf16.mxu0 0
      %2876 = vmatpush1.bf16.msra.mxu0 0
      %2877 = vmatprep.mubr.bf16.mxu0 0
      %2878 = vmatmul.mubr.bf16.gmra.mrb[0].mxu0 %v2831
      %v2879 = vpop.f32.mrb[0].mxu0
      %v2880 = vadd.f32 0.0, %v2879
      %v2881 = vpop.f32.mrb[0].mxu0
      %v2882 = vadd.f32 0.0, %v2881
      %v2883 = vpop.f32.mrb[0].mxu0
      %v2884 = vpop.f32.mrb[0].mxu0
      %2885 = vdwg.mxu0
      %2886 = vmatprep.subr.bf16.mxu0 %v2843
      %2887 = vmatpush1.bf16.msra.mxu0 %v2840
      %2888 = vmatprep.subr.bf16.mxu0 0
      %2889 = vmatpush1.bf16.msra.mxu0 0
      %2890 = vmatprep.subr.bf16.mxu0 0
      %2891 = vmatpush1.bf16.msra.mxu0 0
      %2892 = vmatprep.subr.bf16.mxu0 0
      %2893 = vmatpush1.bf16.msra.mxu0 0
      %2894 = vmatprep.subr.bf16.mxu0 0
      %2895 = vmatpush1.bf16.msra.mxu0 0
      %2896 = vmatprep.subr.bf16.mxu0 0
      %2897 = vmatpush1.bf16.msra.mxu0 0
      %2898 = vmatprep.subr.bf16.mxu0 0
      %2899 = vmatpush1.bf16.msra.mxu0 0
      %2900 = vmatprep.subr.bf16.mxu0 0
      %2901 = vmatpush1.bf16.msra.mxu0 0
      %2902 = vmatprep.subr.bf16.mxu0 0
      %2903 = vmatpush1.bf16.msra.mxu0 0
      %2904 = vmatprep.subr.bf16.mxu0 0
      %2905 = vmatpush1.bf16.msra.mxu0 0
      %2906 = vmatprep.subr.bf16.mxu0 0
      %2907 = vmatpush1.bf16.msra.mxu0 0
      %2908 = vmatprep.subr.bf16.mxu0 0
      %2909 = vmatpush1.bf16.msra.mxu0 0
      %2910 = vmatprep.subr.bf16.mxu0 0
      %2911 = vmatpush1.bf16.msra.mxu0 0
      %2912 = vmatprep.subr.bf16.mxu0 0
      %2913 = vmatpush1.bf16.msra.mxu0 0
      %2914 = vmatprep.subr.bf16.mxu0 0
      %2915 = vmatpush1.bf16.msra.mxu0 0
      %2916 = vmatprep.subr.bf16.mxu0 0
      %2917 = vmatpush1.bf16.msra.mxu0 0
      %2918 = vmatprep.mubr.bf16.mxu0 0
      %2919 = vmatmul.mubr.bf16.gmra.mrb[0].mxu0 %v2831
      %v2920 = vpop.f32.mrb[0].mxu0
      %v2921 = vadd.f32 0.0, %v2920
      %v2922 = vpop.f32.mrb[0].mxu0
      %v2923 = vadd.f32 0.0, %v2922
      %v2924 = vpop.f32.mrb[0].mxu0
      %v2925 = vpop.f32.mrb[0].mxu0
      %2926 = vdwg.mxu0
      %v2927 = vadd.f32 %v2810, %v2880
      %v2928 = vadd.f32 %v2811, %v2882
      %v2929 = vadd.f32 %v2812, %v2921
      %v2930 = vadd.f32 %v2813, %v2923
      %s2931 = scalar_lea.vmem %s5, 28
      %v2932 = vld [vmem:[%s2931] sm:$0xf]
      %2933 = vrot.lane.b32.xlu0 %v2694, 107
      %v2934 = vpop.permute.xlu0 %2933
      %2935 = vrot.lane.b32.xlu0 %v2695, 107
      %v2936 = vpop.permute.xlu0 %2935
      %2937 = vrot.lane.b32.xlu0 %v2696, 107
      %v2938 = vpop.permute.xlu0 %2937
      %2939 = vrot.lane.b32.xlu0 %v2697, 107
      %v2940 = vpop.permute.xlu0 %2939
      %2941 = vrot.lane.b32.xlu0 %v2698, 107
      %v2942 = vpop.permute.xlu0 %2941
      %v2943 = vsel %vm678, %v2934, %v2936
      %v2944 = vsel %vm678, %v2936, %v2938
      %v2945 = vsel %vm678, %v2938, %v2940
      %v2946 = vsel %vm678, %v2940, %v2942
      %v2948 = vsel %vm1008, %v2932, 0
      %v2951 = vsel %vm1012, %v2943, 0
      %v2954 = vsel %vm1012, %v2944, 0
      %v2957 = vsel %vm1012, %v2945, 0
      %v2960 = vsel %vm1012, %v2946, 0
      %2962 = vmatprep.subr.bf16.mxu0 %v2954
      %2963 = vmatpush1.bf16.msra.mxu0 %v2951
      %2964 = vmatprep.subr.bf16.mxu0 0
      %2965 = vmatpush1.bf16.msra.mxu0 0
      %2966 = vmatprep.subr.bf16.mxu0 0
      %2967 = vmatpush1.bf16.msra.mxu0 0
      %2968 = vmatprep.subr.bf16.mxu0 0
      %2969 = vmatpush1.bf16.msra.mxu0 0
      %2970 = vmatprep.subr.bf16.mxu0 0
      %2971 = vmatpush1.bf16.msra.mxu0 0
      %2972 = vmatprep.subr.bf16.mxu0 0
      %2973 = vmatpush1.bf16.msra.mxu0 0
      %2974 = vmatprep.subr.bf16.mxu0 0
      %2975 = vmatpush1.bf16.msra.mxu0 0
      %2976 = vmatprep.subr.bf16.mxu0 0
      %2977 = vmatpush1.bf16.msra.mxu0 0
      %2978 = vmatprep.subr.bf16.mxu0 0
      %2979 = vmatpush1.bf16.msra.mxu0 0
      %2980 = vmatprep.subr.bf16.mxu0 0
      %2981 = vmatpush1.bf16.msra.mxu0 0
      %2982 = vmatprep.subr.bf16.mxu0 0
      %2983 = vmatpush1.bf16.msra.mxu0 0
      %2984 = vmatprep.subr.bf16.mxu0 0
      %2985 = vmatpush1.bf16.msra.mxu0 0
      %2986 = vmatprep.subr.bf16.mxu0 0
      %2987 = vmatpush1.bf16.msra.mxu0 0
      %2988 = vmatprep.subr.bf16.mxu0 0
      %2989 = vmatpush1.bf16.msra.mxu0 0
      %2990 = vmatprep.subr.bf16.mxu0 0
      %2991 = vmatpush1.bf16.msra.mxu0 0
      %2992 = vmatprep.subr.bf16.mxu0 0
      %2993 = vmatpush1.bf16.msra.mxu0 0
      %2994 = vmatprep.mubr.bf16.mxu0 0
      %2995 = vmatmul.mubr.bf16.gmra.mrb[0].mxu0 %v2948
      %v2996 = vpop.f32.mrb[0].mxu0
      %v2997 = vadd.f32 0.0, %v2996
      %v2998 = vpop.f32.mrb[0].mxu0
      %v2999 = vadd.f32 0.0, %v2998
      %v3000 = vpop.f32.mrb[0].mxu0
      %v3001 = vpop.f32.mrb[0].mxu0
      %3002 = vdwg.mxu0
      %3003 = vmatprep.subr.bf16.mxu0 %v2960
      %3004 = vmatpush1.bf16.msra.mxu0 %v2957
      %3005 = vmatprep.subr.bf16.mxu0 0
      %3006 = vmatpush1.bf16.msra.mxu0 0
      %3007 = vmatprep.subr.bf16.mxu0 0
      %3008 = vmatpush1.bf16.msra.mxu0 0
      %3009 = vmatprep.subr.bf16.mxu0 0
      %3010 = vmatpush1.bf16.msra.mxu0 0
      %3011 = vmatprep.subr.bf16.mxu0 0
      %3012 = vmatpush1.bf16.msra.mxu0 0
      %3013 = vmatprep.subr.bf16.mxu0 0
      %3014 = vmatpush1.bf16.msra.mxu0 0
      %3015 = vmatprep.subr.bf16.mxu0 0
      %3016 = vmatpush1.bf16.msra.mxu0 0
      %3017 = vmatprep.subr.bf16.mxu0 0
      %3018 = vmatpush1.bf16.msra.mxu0 0
      %3019 = vmatprep.subr.bf16.mxu0 0
      %3020 = vmatpush1.bf16.msra.mxu0 0
      %3021 = vmatprep.subr.bf16.mxu0 0
      %3022 = vmatpush1.bf16.msra.mxu0 0
      %3023 = vmatprep.subr.bf16.mxu0 0
      %3024 = vmatpush1.bf16.msra.mxu0 0
      %3025 = vmatprep.subr.bf16.mxu0 0
      %3026 = vmatpush1.bf16.msra.mxu0 0
      %3027 = vmatprep.subr.bf16.mxu0 0
      %3028 = vmatpush1.bf16.msra.mxu0 0
      %3029 = vmatprep.subr.bf16.mxu0 0
      %3030 = vmatpush1.bf16.msra.mxu0 0
      %3031 = vmatprep.subr.bf16.mxu0 0
      %3032 = vmatpush1.bf16.msra.mxu0 0
      %3033 = vmatprep.subr.bf16.mxu0 0
      %3034 = vmatpush1.bf16.msra.mxu0 0
      %3035 = vmatprep.mubr.bf16.mxu0 0
      %3036 = vmatmul.mubr.bf16.gmra.mrb[0].mxu0 %v2948
      %v3037 = vpop.f32.mrb[0].mxu0
      %v3038 = vadd.f32 0.0, %v3037
      %v3039 = vpop.f32.mrb[0].mxu0
      %v3040 = vadd.f32 0.0, %v3039
      %v3041 = vpop.f32.mrb[0].mxu0
      %v3042 = vpop.f32.mrb[0].mxu0
      %3043 = vdwg.mxu0
      %v3044 = vadd.f32 %v2927, %v2997
      %v3045 = vadd.f32 %v2928, %v2999
      %v3046 = vadd.f32 %v2929, %v3038
      %v3047 = vadd.f32 %v2930, %v3040
      %s3048 = scalar_lea.vmem %s5, 32
      %v3049 = vld [vmem:[%s3048] sm:$0xf]
      %3050 = vrot.lane.b32.xlu0 %v2694, 106
      %v3051 = vpop.permute.xlu0 %3050
      %3052 = vrot.lane.b32.xlu0 %v2695, 106
      %v3053 = vpop.permute.xlu0 %3052
      %3054 = vrot.lane.b32.xlu0 %v2696, 106
      %v3055 = vpop.permute.xlu0 %3054
      %3056 = vrot.lane.b32.xlu0 %v2697, 106
      %v3057 = vpop.permute.xlu0 %3056
      %3058 = vrot.lane.b32.xlu0 %v2698, 106
      %v3059 = vpop.permute.xlu0 %3058
      %v3060 = vsel %vm824, %v3051, %v3053
      %v3061 = vsel %vm824, %v3053, %v3055
      %v3062 = vsel %vm824, %v3055, %v3057
      %v3063 = vsel %vm824, %v3057, %v3059
      %v3065 = vsel %vm1008, %v3049, 0
      %v3068 = vsel %vm1012, %v3060, 0
      %v3071 = vsel %vm1012, %v3061, 0
      %v3074 = vsel %vm1012, %v3062, 0
      %v3077 = vsel %vm1012, %v3063, 0
      %3079 = vmatprep.subr.bf16.mxu0 %v3071
      %3080 = vmatpush1.bf16.msra.mxu0 %v3068
      %3081 = vmatprep.subr.bf16.mxu0 0
      %3082 = vmatpush1.bf16.msra.mxu0 0
      %3083 = vmatprep.subr.bf16.mxu0 0
      %3084 = vmatpush1.bf16.msra.mxu0 0
      %3085 = vmatprep.subr.bf16.mxu0 0
      %3086 = vmatpush1.bf16.msra.mxu0 0
      %3087 = vmatprep.subr.bf16.mxu0 0
      %3088 = vmatpush1.bf16.msra.mxu0 0
      %3089 = vmatprep.subr.bf16.mxu0 0
      %3090 = vmatpush1.bf16.msra.mxu0 0
      %3091 = vmatprep.subr.bf16.mxu0 0
      %3092 = vmatpush1.bf16.msra.mxu0 0
      %3093 = vmatprep.subr.bf16.mxu0 0
      %3094 = vmatpush1.bf16.msra.mxu0 0
      %3095 = vmatprep.subr.bf16.mxu0 0
      %3096 = vmatpush1.bf16.msra.mxu0 0
      %3097 = vmatprep.subr.bf16.mxu0 0
      %3098 = vmatpush1.bf16.msra.mxu0 0
      %3099 = vmatprep.subr.bf16.mxu0 0
      %3100 = vmatpush1.bf16.msra.mxu0 0
      %3101 = vmatprep.subr.bf16.mxu0 0
      %3102 = vmatpush1.bf16.msra.mxu0 0
      %3103 = vmatprep.subr.bf16.mxu0 0
      %3104 = vmatpush1.bf16.msra.mxu0 0
      %3105 = vmatprep.subr.bf16.mxu0 0
      %3106 = vmatpush1.bf16.msra.mxu0 0
      %3107 = vmatprep.subr.bf16.mxu0 0
      %3108 = vmatpush1.bf16.msra.mxu0 0
      %3109 = vmatprep.subr.bf16.mxu0 0
      %3110 = vmatpush1.bf16.msra.mxu0 0
      %3111 = vmatprep.mubr.bf16.mxu0 0
      %3112 = vmatmul.mubr.bf16.gmra.mrb[0].mxu0 %v3065
      %v3113 = vpop.f32.mrb[0].mxu0
      %v3114 = vadd.f32 0.0, %v3113
      %v3115 = vpop.f32.mrb[0].mxu0
      %v3116 = vadd.f32 0.0, %v3115
      %v3117 = vpop.f32.mrb[0].mxu0
      %v3118 = vpop.f32.mrb[0].mxu0
      %3119 = vdwg.mxu0
      %3120 = vmatprep.subr.bf16.mxu0 %v3077
      %3121 = vmatpush1.bf16.msra.mxu0 %v3074
      %3122 = vmatprep.subr.bf16.mxu0 0
      %3123 = vmatpush1.bf16.msra.mxu0 0
      %3124 = vmatprep.subr.bf16.mxu0 0
      %3125 = vmatpush1.bf16.msra.mxu0 0
      %3126 = vmatprep.subr.bf16.mxu0 0
      %3127 = vmatpush1.bf16.msra.mxu0 0
      %3128 = vmatprep.subr.bf16.mxu0 0
      %3129 = vmatpush1.bf16.msra.mxu0 0
      %3130 = vmatprep.subr.bf16.mxu0 0
      %3131 = vmatpush1.bf16.msra.mxu0 0
      %3132 = vmatprep.subr.bf16.mxu0 0
      %3133 = vmatpush1.bf16.msra.mxu0 0
      %3134 = vmatprep.subr.bf16.mxu0 0
      %3135 = vmatpush1.bf16.msra.mxu0 0
      %3136 = vmatprep.subr.bf16.mxu0 0
      %3137 = vmatpush1.bf16.msra.mxu0 0
      %3138 = vmatprep.subr.bf16.mxu0 0
      %3139 = vmatpush1.bf16.msra.mxu0 0
      %3140 = vmatprep.subr.bf16.mxu0 0
      %3141 = vmatpush1.bf16.msra.mxu0 0
      %3142 = vmatprep.subr.bf16.mxu0 0
      %3143 = vmatpush1.bf16.msra.mxu0 0
      %3144 = vmatprep.subr.bf16.mxu0 0
      %3145 = vmatpush1.bf16.msra.mxu0 0
      %3146 = vmatprep.subr.bf16.mxu0 0
      %3147 = vmatpush1.bf16.msra.mxu0 0
      %3148 = vmatprep.subr.bf16.mxu0 0
      %3149 = vmatpush1.bf16.msra.mxu0 0
      %3150 = vmatprep.subr.bf16.mxu0 0
      %3151 = vmatpush1.bf16.msra.mxu0 0
      %3152 = vmatprep.mubr.bf16.mxu0 0
      %3153 = vmatmul.mubr.bf16.gmra.mrb[0].mxu0 %v3065
      %v3154 = vpop.f32.mrb[0].mxu0
      %v3155 = vadd.f32 0.0, %v3154
      %v3156 = vpop.f32.mrb[0].mxu0
      %v3157 = vadd.f32 0.0, %v3156
      %v3158 = vpop.f32.mrb[0].mxu0
      %v3159 = vpop.f32.mrb[0].mxu0
      %3160 = vdwg.mxu0
      %v3161 = vadd.f32 %v3044, %v3114
      %v3162 = vadd.f32 %v3045, %v3116
      %v3163 = vadd.f32 %v3046, %v3155
      %v3164 = vadd.f32 %v3047, %v3157
      %v3165 = vld [vmem:[%s6] sm:$0xff]
      %3167 = vset.pattern.permute.xlu0 0
      %3168 = vperm.xlu0 %3167, %v3165
      %v3169 = vpop.permute.xlu0 %3168
      %v3171 = vadd.f32 %v3161, %v3169
      %v3172 = vadd.f32 %v3162, %v3169
      %v3173 = vadd.f32 %v3163, %v3169
      %v3174 = vadd.f32 %v3164, %v3169
      %v3175 = vadd.f32 %v3171, %v940
      %v3176 = vadd.f32 %v3172, %v941
      %v3177 = vadd.f32 %v3173, %v942
      %v3178 = vadd.f32 %v3174, %v943
      %v3179 = vmax.f32 %v3175, 0.0
      %v3180 = vmax.f32 %v3176, 0.0
      %v3181 = vmax.f32 %v3177, 0.0
      %v3182 = vmax.f32 %v3178, 0.0
      %3183 = vst [vmem:[%s278] sm:$0xff] %v3179
      %3184 = vst [vmem:[%s278 + $0x8] sm:$0xff] %v3180
      %3185 = vst [vmem:[%s278 + $0x10] sm:$0xff] %v3181
      %3186 = vst [vmem:[%s278 + $0x18] sm:$0xff] %v3182
      %p3187 = scmp.lt.s32.totalorder %s18, 1
      %s3188 = scalar_select %p3187, %s18, 1
      %s3189 = smul.addr %s3188, 4
      %s3190 = smul.addr %s3189, 8
      %s3191 = scalar_lea.vmem %s7, %s3190
      // Predicated region
      $region49: #{down_forward.1} parent=47 // pred_check
        %p3192 = pneg %p188
      $region50: #{down_forward.1} parent=47 // pred_check_branch
        %3194 = sbr.rel (%p3192) target = $region52
      $region51: #{down_forward.1} parent=47 // pred_region
        _
      $region52: #{down_forward.1} parent=47 // pred_fallthru
        _
    $region48: #{down_forward.1} parent=5 // pred_fallthru
      _
    %p3195 = scmp.le.s32.totalorder 2, %s13
    // Predicated region
    $region53: #{down_forward.1} parent=5 // pred_check
      %p3196 = pneg %p3195
    $region54: #{down_forward.1} parent=5 // pred_check_branch
      %3198 = sbr.rel (%p3196) target = $region56
    $region55: #{down_forward.1} parent=5 // pred_region
      %s3199 = ssub.s32 %s13, 2
      // Predicated region
      $region57: #{down_forward.1} parent=55 // pred_check
        %p3200 = pneg %p194
      $region58: #{down_forward.1} parent=55 // pred_check_branch
        %3202 = sbr.rel (%p3200) target = $region60
      $region59: #{down_forward.1} parent=55 // pred_region
        %p3203 = scmp.lt.s32.totalorder %s19, 1
        %s3204 = scalar_select %p3203, %s19, 1
        %s3205 = smul.addr %s3204, 4
        %s3206 = smul.addr %s3205, 8
        %s3207 = scalar_lea.vmem %s7, %s3206
      $region60: #{down_forward.1} parent=55 // pred_fallthru
        _
    $region56: #{down_forward.1} parent=5 // pred_fallthru
      _
  $region6: #{down_forward.1} parent=0 // loop_footer
    %s17 = sadd.s32 1, %s13
  $region7: #{down_forward.1} parent=0 // loop_footer_branch
    %12 = sbr.rel target = $region3
  $region8: #{down_forward.1} parent=0 // loop_exit
    _

</llo_original>
